<compile_context>
chip_gen: v7x
topology: tpu7x:2x2x1
jax: 0.10.0
libtpu: 0.0.40
codegen_flags: <defaults>
</compile_context>

<pallas_src>
import jax
import jax.numpy as jnp
from jax import lax
from jax.experimental import pallas as pl
from jax.experimental.pallas import tpu as pltpu


# ----------------------------------------------------------------------------
# Geometry fixed by the module: 28x28x1 input, 5x5 'same' convs, 2x2 max-pool.
# ----------------------------------------------------------------------------
K = 5                        # conv kernel size
H1 = W1 = 28                 # conv1 spatial size
NPIX1 = H1 * W1              # 784 conv1 output rows (flat, r = h*28 + w)
T1 = 32                      # 25 im2col taps zero-padded to 32 (conv1 K dim)
C1 = 16                      # conv1 out channels

H2 = W2 = 14                 # conv2 spatial size (after pool1)
WP2 = W2 + 4                 # 18: conv2 padded row pitch (2 left + 2 right)
R2 = H2 * WP2                # 252 conv2 output rows (junk cols at w >= 14)
WE2 = WP2 // 2               # 9: row pitch of horizontally-pooled conv2 output
K2 = K * C1                  # 80: conv2 contraction depth (kw packed with Cin)
X2_ROWS = 328                # >= 4*WP2 + R2 = 324 rows read by conv2
C2 = 32                      # conv2 out channels

HO = WO = 7                  # final pooled spatial size
NCLS = 10


# ----------------------------------------------------------------------------
# The fused kernel: a block of images per grid step, everything VMEM-resident.
# ----------------------------------------------------------------------------
def _cnn_kernel(x1_ref, w1_ref, b1_ref, w2_ref, b2_ref, wfc_ref, bfc_ref,
                out_ref, c1_ref, hm1_ref, x2_ref, c2_ref, hm2_ref, p2_ref):
    # conv2's kw-packed padded input: zero once per grid step.  The pool1
    # scatter below overwrites exactly the same interior cells for every
    # image, so halo / junk cells stay zero for the whole step.
    x2_ref[...] = jnp.zeros_like(x2_ref)

    @pl.loop(0, x1_ref.shape[0])
    def _per_image(img):
        # ---- conv1: 28x28x1 -> 28x28x16 as ONE bf16 MXU matmul (K = 32) ----
        # x1 is host-side im2col: x1[img, h*28+w, kh*5+kw] = xpad[h+kh, w+kw]
        c1_ref[...] = jnp.dot(x1_ref[img], w1_ref[...],
                              preferred_element_type=jnp.float32)    # (784,16) f32

        # ---- pool1 (2x2) + bias + ReLU, scattered into conv2's packed input.
        # Horizontal pair-max for the whole image in 2 strided reads: the flat
        # row pitch (28) is even, so flat-row parity == w parity.
        hm1_ref[...] = jnp.maximum(c1_ref[pl.ds(0, NPIX1 // 2, stride=2), :],
                                   c1_ref[pl.ds(1, NPIX1 // 2, stride=2), :])
        b1 = b1_ref[...]
        for ho in range(H2):
            a = hm1_ref[pl.ds((2 * ho) * W2, W2), :]
            b = hm1_ref[pl.ds((2 * ho + 1) * W2, W2), :]
            p = jnp.maximum(jnp.maximum(a, b) + b1, 0.0)             # (14,16) f32
            base = (ho + 2) * WP2 + 2
            # kw-packed layout: x2[s, kw*16:(kw+1)*16] = padded_pool1_flat[s + kw]
            for kw in range(K):
                x2_ref[pl.ds(base - kw, W2), pl.ds(kw * C1, C1)] = p

        # ---- conv2: 14x14x16 -> 14x14x32 as 5 bf16 matmuls (K = 80) ----
        for kh in range(K):
            a = x2_ref[pl.ds(kh * WP2, R2), :].astype(jnp.bfloat16)  # (252,80)
            part = jnp.dot(a, w2_ref[kh], preferred_element_type=jnp.float32)
            if kh == 0:
                c2_ref[...] = part                                   # (252,32) f32
            else:
                c2_ref[...] += part

        # ---- pool2 (2x2) + bias + ReLU -> (49, 32) FC input ----
        hm2_ref[...] = jnp.maximum(c2_ref[pl.ds(0, R2 // 2, stride=2), :],
                                   c2_ref[pl.ds(1, R2 // 2, stride=2), :])
        b2 = b2_ref[...]
        for ho in range(HO):
            a = hm2_ref[pl.ds((2 * ho) * WE2, WO), :]
            b = hm2_ref[pl.ds((2 * ho + 1) * WE2, WO), :]
            p2_ref[pl.ds(ho * WO, WO), :] = jnp.maximum(
                jnp.maximum(a, b) + b2, 0.0)

        # ---- FC (f32, vectorized): out[o] = b[o] + sum_{s,c} p2[s,c]*wfc[o,s,c]
        # (wfc is pre-permuted to match torch's NCHW .view flatten order)
        p2v = p2_ref[...]                                            # (49,32)
        prod = wfc_ref[...] * p2v[None, :, :]                        # (10,49,32)
        t = jnp.sum(prod, axis=1)                                    # (10,32)
        out_ref[img] = bfc_ref[...] + jnp.sum(t, axis=1, keepdims=True)   # (10,1)


def cnn_forward(x_nchw, pp):
    """x_nchw: (N, 1, 28, 28) float32; pp: output of prepare_params()."""
    n = x_nchw.shape[0]
    imgs = min(8, max(1, n // 2))          # images / grid step (grid >= 2 if n >= 2)
    n_pad = -(-n // imgs) * imgs

    # Host-side (XLA) im2col for conv1: Cin == 1, so pack all 25 taps into the
    # MXU contraction dim.  Layout-only prep; all compute stays in the kernel.
    xp = jnp.pad(x_nchw[:, 0], ((0, n_pad - n), (2, 2), (2, 2)))     # (n_pad,32,32)
    taps = [xp[:, kh:kh + H1, kw:kw + W1]
            for kh in range(K) for kw in range(K)]
    x1 = jnp.stack(taps, axis=-1).reshape(n_pad, NPIX1, K * K)       # (n_pad,784,25)
    x1 = jnp.pad(x1, ((0, 0), (0, 0), (0, T1 - K * K))).astype(jnp.bfloat16)

    out = pl.pallas_call(
        _cnn_kernel,
        out_shape=jax.ShapeDtypeStruct((n_pad, NCLS, 1), jnp.float32),
        grid=(n_pad // imgs,),
        in_specs=[
            pl.BlockSpec((imgs, NPIX1, T1), lambda i: (i, 0, 0)),
            pl.BlockSpec((T1, C1), lambda i: (0, 0)),
            pl.BlockSpec((1, C1), lambda i: (0, 0)),
            pl.BlockSpec((K, K2, C2), lambda i: (0, 0, 0)),
            pl.BlockSpec((1, C2), lambda i: (0, 0)),
            pl.BlockSpec((NCLS, HO * WO, C2), lambda i: (0, 0, 0)),
            pl.BlockSpec((NCLS, 1), lambda i: (0, 0)),
        ],
        out_specs=pl.BlockSpec((imgs, NCLS, 1), lambda i: (i, 0, 0)),
        scratch_shapes=[
            pltpu.VMEM((NPIX1, C1), jnp.float32),        # conv1 output (flat rows)
            pltpu.VMEM((NPIX1 // 2, C1), jnp.float32),   # pool1 horizontal max
            pltpu.VMEM((X2_ROWS, K2), jnp.float32),      # conv2 kw-packed padded input
            pltpu.VMEM((R2, C2), jnp.float32),           # conv2 output (flat rows)
            pltpu.VMEM((R2 // 2, C2), jnp.float32),      # pool2 horizontal max
            pltpu.VMEM((HO * WO, C2), jnp.float32),      # pooled2 / FC input
        ],
        compiler_params=pltpu.CompilerParams(
            dimension_semantics=("parallel",)),
    )(x1, pp["w1"], pp["b1"], pp["w2"], pp["b2"], pp["wfc"], pp["bfc"])
    return out.reshape(n_pad, NCLS)[:n]


# ----------------------------------------------------------------------------
# One-time parameter layout prep (hoisted out of the forward pass)
# ----------------------------------------------------------------------------
def prepare_params(p):
    # conv1 OIHW (16,1,5,5) -> im2col weight (taps 25 -> pad 32, 16), bf16
    w1 = jnp.transpose(p["w1"], (2, 3, 1, 0)).reshape(K * K, C1)
    w1 = jnp.pad(w1, ((0, T1 - K * K), (0, 0))).astype(jnp.bfloat16)
    # conv2 OIHW (32,16,5,5) -> per-kh weight with (kw, cin) packed into K=80, bf16
    w2 = jnp.transpose(p["w2"], (2, 3, 1, 0)).reshape(K, K2, C2).astype(jnp.bfloat16)
    # FC: torch .view on NCHW flattens as c*49 + h*7 + w -> wfc[o, s=h*7+w, c] (f32)
    wfc = jnp.transpose(p["w_out"].reshape(NCLS, C2, HO * WO), (0, 2, 1))
    return {
        "w1": w1, "b1": p["b1"].reshape(1, C1),
        "w2": w2, "b2": p["b2"].reshape(1, C2),
        "wfc": wfc, "bfc": p["b_out"].reshape(NCLS, 1),
    }


# ----------------------------------------------------------------------------
# Deterministic parameter init (same shapes as the PyTorch module)
# ----------------------------------------------------------------------------
def init_params(key):
    ks = jax.random.split(key, 6)

    def u(k, shape, fan_in):
        bound = 1.0 / jnp.sqrt(float(fan_in))
        return jax.random.uniform(k, shape, jnp.float32, -bound, bound)

    return {
        "w1": u(ks[0], (16, 1, 5, 5), 1 * 5 * 5),
        "b1": u(ks[1], (16,), 1 * 5 * 5),
        "w2": u(ks[2], (32, 16, 5, 5), 16 * 5 * 5),
        "b2": u(ks[3], (32,), 16 * 5 * 5),
        "w_out": u(ks[4], (10, 32 * 7 * 7), 32 * 7 * 7),
        "b_out": u(ks[5], (10,), 32 * 7 * 7),
    }


# Pure-JAX f32 reference (correctness sanity check only)
def cnn_reference(x_nchw, p):
    def conv(x, w, b):
        y = lax.conv_general_dilated(
            x, w, window_strides=(1, 1), padding=[(2, 2), (2, 2)],
            dimension_numbers=("NCHW", "OIHW", "NCHW"))
        return jax.nn.relu(y + b[None, :, None, None])

    def pool(x):
        return lax.reduce_window(x, -jnp.inf, lax.max,
                                 (1, 1, 2, 2), (1, 1, 2, 2), "VALID")

    x = pool(conv(x_nchw, p["w1"], p["b1"]))
    x = pool(conv(x, p["w2"], p["b2"]))
    xf = x.reshape(x.shape[0], -1)
    return xf @ p["w_out"].T + p["b_out"]


if __name__ == "__main__":
    key = jax.random.PRNGKey(0)
    k_x, k_p = jax.random.split(key)

    # Input consistent with the module: Linear(32*7*7, 10) hard-codes 28x28.
    x = jax.random.normal(k_x, (2, 1, 28, 28), dtype=jnp.float32)
    params = init_params(k_p)
    pp = prepare_params(params)          # one-time weight layout prep (incl. bf16 cast)

    fwd = jax.jit(cnn_forward)
    out = jax.block_until_ready(fwd(x, pp))

    ref = cnn_reference(x, params)
    assert out.shape == (2, 10)
    # bf16 MXU operands (f32 accumulation) -> loosened tolerance vs the f32 reference.
    assert jnp.allclose(out, ref, atol=3e-2, rtol=3e-2), "mismatch vs reference"

    print("KERNEL_OK")
</pallas_src>

<mosaic_0001>
module attributes {stable_mosaic.version = 11 : i64} {
  func.func @_cnn_kernel(%arg0: i32, %arg1: memref<1x784x32xbf16, #tpu.memory_space<vmem>>, %arg2: memref<32x16xbf16, #tpu.memory_space<vmem>>, %arg3: memref<1x16xf32, #tpu.memory_space<vmem>>, %arg4: memref<5x80x32xbf16, #tpu.memory_space<vmem>>, %arg5: memref<1x32xf32, #tpu.memory_space<vmem>>, %arg6: memref<10x49x32xf32, #tpu.memory_space<vmem>>, %arg7: memref<10x1xf32, #tpu.memory_space<vmem>>, %arg8: memref<1x10x1xf32, #tpu.memory_space<vmem>>, %arg9: memref<784x16xf32, #tpu.memory_space<vmem>>, %arg10: memref<392x16xf32, #tpu.memory_space<vmem>>, %arg11: memref<328x80xf32, #tpu.memory_space<vmem>>, %arg12: memref<252x32xf32, #tpu.memory_space<vmem>>, %arg13: memref<126x32xf32, #tpu.memory_space<vmem>>, %arg14: memref<49x32xf32, #tpu.memory_space<vmem>>) attributes {dimension_semantics = [#tpu.dimension_semantics<parallel>], iteration_bounds = array<i64: 2>, scalar_prefetch = 0 : i64, scratch_operands = 6 : i64, tpu.core_type = #tpu.core_type<tc>, window_params = [{transform_indices = @transform_0, window_bounds = array<i64: 1, 784, 32>}, {pipeline_mode = #tpu.pipeline_mode<synchronous>, transform_indices = @transform_1, window_bounds = array<i64: 32, 16>}, {pipeline_mode = #tpu.pipeline_mode<synchronous>, transform_indices = @transform_2, window_bounds = array<i64: 1, 16>}, {pipeline_mode = #tpu.pipeline_mode<synchronous>, transform_indices = @transform_3, window_bounds = array<i64: 5, 80, 32>}, {pipeline_mode = #tpu.pipeline_mode<synchronous>, transform_indices = @transform_4, window_bounds = array<i64: 1, 32>}, {pipeline_mode = #tpu.pipeline_mode<synchronous>, transform_indices = @transform_5, window_bounds = array<i64: 10, 49, 32>}, {pipeline_mode = #tpu.pipeline_mode<synchronous>, transform_indices = @transform_6, window_bounds = array<i64: 10, 1>}, {transform_indices = @transform_7, window_bounds = array<i64: 1, 10, 1>}]} {
    %cst = arith.constant 0.000000e+00 : f32
    %0 = vector.broadcast %cst : f32 to vector<328x80xf32>
    %c0 = arith.constant 0 : index
    %c0_0 = arith.constant 0 : index
    %1 = vector.load %arg11[%c0, %c0_0] : memref<328x80xf32, #tpu.memory_space<vmem>>, vector<328x80xf32>
    tpu.vector_store %arg11[%c0, %c0_0], %0 {strides = array<i32>} : memref<328x80xf32, #tpu.memory_space<vmem>>, vector<328x80xf32>,
    %c0_i32 = arith.constant 0 : i32
    %c1_i32 = arith.constant 1 : i32
    %2 = arith.muli %c0_i32, %c1_i32 : i32
    %c0_i32_1 = arith.constant 0 : i32
    %3 = arith.addi %c0_i32_1, %2 : i32
    %4 = arith.index_cast %3 : i32 to index
    %c0_2 = arith.constant 0 : index
    %c0_3 = arith.constant 0 : index
    %5 = vector.load %arg1[%4, %c0_2, %c0_3] : memref<1x784x32xbf16, #tpu.memory_space<vmem>>, vector<1x784x32xbf16>
    %6 = vector.shape_cast %5 : vector<1x784x32xbf16> to vector<784x32xbf16>
    %c0_4 = arith.constant 0 : index
    %c0_5 = arith.constant 0 : index
    %7 = vector.load %arg2[%c0_4, %c0_5] : memref<32x16xbf16, #tpu.memory_space<vmem>>, vector<32x16xbf16>
    %cst_6 = arith.constant dense<0.000000e+00> : vector<784x16xf32>
    %8 = tpu.matmul %6, %7, %cst_6 {dimension_numbers = #tpu.dot_dimension_numbers<[1], [0], [0], [1], [0, 0, 1, 1], [], []>} : vector<784x32xbf16>, vector<32x16xbf16>, vector<784x16xf32> -> vector<784x16xf32>
    %c0_7 = arith.constant 0 : index
    %c0_8 = arith.constant 0 : index
    %9 = vector.load %arg9[%c0_7, %c0_8] : memref<784x16xf32, #tpu.memory_space<vmem>>, vector<784x16xf32>
    tpu.vector_store %arg9[%c0_7, %c0_8], %8 {strides = array<i32>} : memref<784x16xf32, #tpu.memory_space<vmem>>, vector<784x16xf32>,
    %c0_9 = arith.constant 0 : index
    %c0_10 = arith.constant 0 : index
    %10 = tpu.strided_load %arg9[%c0_9, %c0_10] {strides = array<i32: 2, 1>} : memref<784x16xf32, #tpu.memory_space<vmem>>, vector<392x16xf32>
    %c1 = arith.constant 1 : index
    %c0_11 = arith.constant 0 : index
    %11 = tpu.strided_load %arg9[%c1, %c0_11] {strides = array<i32: 2, 1>} : memref<784x16xf32, #tpu.memory_space<vmem>>, vector<392x16xf32>
    %12 = arith.maximumf %10, %11 : vector<392x16xf32>
    %c0_12 = arith.constant 0 : index
    %c0_13 = arith.constant 0 : index
    %13 = vector.load %arg10[%c0_12, %c0_13] : memref<392x16xf32, #tpu.memory_space<vmem>>, vector<392x16xf32>
    tpu.vector_store %arg10[%c0_12, %c0_13], %12 {strides = array<i32>} : memref<392x16xf32, #tpu.memory_space<vmem>>, vector<392x16xf32>,
    %c0_14 = arith.constant 0 : index
    %c0_15 = arith.constant 0 : index
    %14 = vector.load %arg3[%c0_14, %c0_15] : memref<1x16xf32, #tpu.memory_space<vmem>>, vector<1x16xf32>
    %c0_16 = arith.constant 0 : index
    %c0_17 = arith.constant 0 : index
    %15 = vector.load %arg10[%c0_16, %c0_17] : memref<392x16xf32, #tpu.memory_space<vmem>>, vector<14x16xf32>
    %c14 = arith.constant 14 : index
    %c0_18 = arith.constant 0 : index
    %16 = vector.load %arg10[%c14, %c0_18] : memref<392x16xf32, #tpu.memory_space<vmem>>, vector<14x16xf32>
    %17 = arith.maximumf %15, %16 : vector<14x16xf32>
    %18 = vector.broadcast %14 : vector<1x16xf32> to vector<14x16xf32>
    %19 = arith.addf %17, %18 : vector<14x16xf32>
    %cst_19 = arith.constant 0.000000e+00 : f32
    %20 = vector.broadcast %cst_19 : f32 to vector<14x16xf32>
    %21 = arith.maximumf %19, %20 : vector<14x16xf32>
    %c38 = arith.constant 38 : index
    %c0_20 = arith.constant 0 : index
    %22 = vector.load %arg11[%c38, %c0_20] : memref<328x80xf32, #tpu.memory_space<vmem>>, vector<14x16xf32>
    tpu.vector_store %arg11[%c38, %c0_20], %21 {strides = array<i32>} : memref<328x80xf32, #tpu.memory_space<vmem>>, vector<14x16xf32>,
    %c37 = arith.constant 37 : index
    %c16 = arith.constant 16 : index
    %23 = vector.load %arg11[%c37, %c16] : memref<328x80xf32, #tpu.memory_space<vmem>>, vector<14x16xf32>
    tpu.vector_store %arg11[%c37, %c16], %21 {strides = array<i32>} : memref<328x80xf32, #tpu.memory_space<vmem>>, vector<14x16xf32>,
    %c36 = arith.constant 36 : index
    %c32 = arith.constant 32 : index
    %24 = vector.load %arg11[%c36, %c32] : memref<328x80xf32, #tpu.memory_space<vmem>>, vector<14x16xf32>
    tpu.vector_store %arg11[%c36, %c32], %21 {strides = array<i32>} : memref<328x80xf32, #tpu.memory_space<vmem>>, vector<14x16xf32>,
    %c35 = arith.constant 35 : index
    %c48 = arith.constant 48 : index
    %25 = vector.load %arg11[%c35, %c48] : memref<328x80xf32, #tpu.memory_space<vmem>>, vector<14x16xf32>
    tpu.vector_store %arg11[%c35, %c48], %21 {strides = array<i32>} : memref<328x80xf32, #tpu.memory_space<vmem>>, vector<14x16xf32>,
    %c34 = arith.constant 34 : index
    %c64 = arith.constant 64 : index
    %26 = vector.load %arg11[%c34, %c64] : memref<328x80xf32, #tpu.memory_space<vmem>>, vector<14x16xf32>
    tpu.vector_store %arg11[%c34, %c64], %21 {strides = array<i32>} : memref<328x80xf32, #tpu.memory_space<vmem>>, vector<14x16xf32>,
    %c28 = arith.constant 28 : index
    %c0_21 = arith.constant 0 : index
    %27 = vector.load %arg10[%c28, %c0_21] : memref<392x16xf32, #tpu.memory_space<vmem>>, vector<14x16xf32>
    %c42 = arith.constant 42 : index
    %c0_22 = arith.constant 0 : index
    %28 = vector.load %arg10[%c42, %c0_22] : memref<392x16xf32, #tpu.memory_space<vmem>>, vector<14x16xf32>
    %29 = arith.maximumf %27, %28 : vector<14x16xf32>
    %30 = vector.broadcast %14 : vector<1x16xf32> to vector<14x16xf32>
    %31 = arith.addf %29, %30 : vector<14x16xf32>
    %cst_23 = arith.constant 0.000000e+00 : f32
    %32 = vector.broadcast %cst_23 : f32 to vector<14x16xf32>
    %33 = arith.maximumf %31, %32 : vector<14x16xf32>
    %c56 = arith.constant 56 : index
    %c0_24 = arith.constant 0 : index
    %34 = vector.load %arg11[%c56, %c0_24] : memref<328x80xf32, #tpu.memory_space<vmem>>, vector<14x16xf32>
    tpu.vector_store %arg11[%c56, %c0_24], %33 {strides = array<i32>} : memref<328x80xf32, #tpu.memory_space<vmem>>, vector<14x16xf32>,
    %c55 = arith.constant 55 : index
    %c16_25 = arith.constant 16 : index
    %35 = vector.load %arg11[%c55, %c16_25] : memref<328x80xf32, #tpu.memory_space<vmem>>, vector<14x16xf32>
    tpu.vector_store %arg11[%c55, %c16_25], %33 {strides = array<i32>} : memref<328x80xf32, #tpu.memory_space<vmem>>, vector<14x16xf32>,
    %c54 = arith.constant 54 : index
    %c32_26 = arith.constant 32 : index
    %36 = vector.load %arg11[%c54, %c32_26] : memref<328x80xf32, #tpu.memory_space<vmem>>, vector<14x16xf32>
    tpu.vector_store %arg11[%c54, %c32_26], %33 {strides = array<i32>} : memref<328x80xf32, #tpu.memory_space<vmem>>, vector<14x16xf32>,
    %c53 = arith.constant 53 : index
    %c48_27 = arith.constant 48 : index
    %37 = vector.load %arg11[%c53, %c48_27] : memref<328x80xf32, #tpu.memory_space<vmem>>, vector<14x16xf32>
    tpu.vector_store %arg11[%c53, %c48_27], %33 {strides = array<i32>} : memref<328x80xf32, #tpu.memory_space<vmem>>, vector<14x16xf32>,
    %c52 = arith.constant 52 : index
    %c64_28 = arith.constant 64 : index
    %38 = vector.load %arg11[%c52, %c64_28] : memref<328x80xf32, #tpu.memory_space<vmem>>, vector<14x16xf32>
    tpu.vector_store %arg11[%c52, %c64_28], %33 {strides = array<i32>} : memref<328x80xf32, #tpu.memory_space<vmem>>, vector<14x16xf32>,
    %c56_29 = arith.constant 56 : index
    %c0_30 = arith.constant 0 : index
    %39 = vector.load %arg10[%c56_29, %c0_30] : memref<392x16xf32, #tpu.memory_space<vmem>>, vector<14x16xf32>
    %c70 = arith.constant 70 : index
    %c0_31 = arith.constant 0 : index
    %40 = vector.load %arg10[%c70, %c0_31] : memref<392x16xf32, #tpu.memory_space<vmem>>, vector<14x16xf32>
    %41 = arith.maximumf %39, %40 : vector<14x16xf32>
    %42 = vector.broadcast %14 : vector<1x16xf32> to vector<14x16xf32>
    %43 = arith.addf %41, %42 : vector<14x16xf32>
    %cst_32 = arith.constant 0.000000e+00 : f32
    %44 = vector.broadcast %cst_32 : f32 to vector<14x16xf32>
    %45 = arith.maximumf %43, %44 : vector<14x16xf32>
    %c74 = arith.constant 74 : index
    %c0_33 = arith.constant 0 : index
    %46 = vector.load %arg11[%c74, %c0_33] : memref<328x80xf32, #tpu.memory_space<vmem>>, vector<14x16xf32>
    tpu.vector_store %arg11[%c74, %c0_33], %45 {strides = array<i32>} : memref<328x80xf32, #tpu.memory_space<vmem>>, vector<14x16xf32>,
    %c73 = arith.constant 73 : index
    %c16_34 = arith.constant 16 : index
    %47 = vector.load %arg11[%c73, %c16_34] : memref<328x80xf32, #tpu.memory_space<vmem>>, vector<14x16xf32>
    tpu.vector_store %arg11[%c73, %c16_34], %45 {strides = array<i32>} : memref<328x80xf32, #tpu.memory_space<vmem>>, vector<14x16xf32>,
    %c72 = arith.constant 72 : index
    %c32_35 = arith.constant 32 : index
    %48 = vector.load %arg11[%c72, %c32_35] : memref<328x80xf32, #tpu.memory_space<vmem>>, vector<14x16xf32>
    tpu.vector_store %arg11[%c72, %c32_35], %45 {strides = array<i32>} : memref<328x80xf32, #tpu.memory_space<vmem>>, vector<14x16xf32>,
    %c71 = arith.constant 71 : index
    %c48_36 = arith.constant 48 : index
    %49 = vector.load %arg11[%c71, %c48_36] : memref<328x80xf32, #tpu.memory_space<vmem>>, vector<14x16xf32>
    tpu.vector_store %arg11[%c71, %c48_36], %45 {strides = array<i32>} : memref<328x80xf32, #tpu.memory_space<vmem>>, vector<14x16xf32>,
    %c70_37 = arith.constant 70 : index
    %c64_38 = arith.constant 64 : index
    %50 = vector.load %arg11[%c70_37, %c64_38] : memref<328x80xf32, #tpu.memory_space<vmem>>, vector<14x16xf32>
    tpu.vector_store %arg11[%c70_37, %c64_38], %45 {strides = array<i32>} : memref<328x80xf32, #tpu.memory_space<vmem>>, vector<14x16xf32>,
    %c84 = arith.constant 84 : index
    %c0_39 = arith.constant 0 : index
    %51 = vector.load %arg10[%c84, %c0_39] : memref<392x16xf32, #tpu.memory_space<vmem>>, vector<14x16xf32>
    %c98 = arith.constant 98 : index
    %c0_40 = arith.constant 0 : index
    %52 = vector.load %arg10[%c98, %c0_40] : memref<392x16xf32, #tpu.memory_space<vmem>>, vector<14x16xf32>
    %53 = arith.maximumf %51, %52 : vector<14x16xf32>
    %54 = vector.broadcast %14 : vector<1x16xf32> to vector<14x16xf32>
    %55 = arith.addf %53, %54 : vector<14x16xf32>
    %cst_41 = arith.constant 0.000000e+00 : f32
    %56 = vector.broadcast %cst_41 : f32 to vector<14x16xf32>
    %57 = arith.maximumf %55, %56 : vector<14x16xf32>
    %c92 = arith.constant 92 : index
    %c0_42 = arith.constant 0 : index
    %58 = vector.load %arg11[%c92, %c0_42] : memref<328x80xf32, #tpu.memory_space<vmem>>, vector<14x16xf32>
    tpu.vector_store %arg11[%c92, %c0_42], %57 {strides = array<i32>} : memref<328x80xf32, #tpu.memory_space<vmem>>, vector<14x16xf32>,
    %c91 = arith.constant 91 : index
    %c16_43 = arith.constant 16 : index
    %59 = vector.load %arg11[%c91, %c16_43] : memref<328x80xf32, #tpu.memory_space<vmem>>, vector<14x16xf32>
    tpu.vector_store %arg11[%c91, %c16_43], %57 {strides = array<i32>} : memref<328x80xf32, #tpu.memory_space<vmem>>, vector<14x16xf32>,
    %c90 = arith.constant 90 : index
    %c32_44 = arith.constant 32 : index
    %60 = vector.load %arg11[%c90, %c32_44] : memref<328x80xf32, #tpu.memory_space<vmem>>, vector<14x16xf32>
    tpu.vector_store %arg11[%c90, %c32_44], %57 {strides = array<i32>} : memref<328x80xf32, #tpu.memory_space<vmem>>, vector<14x16xf32>,
    %c89 = arith.constant 89 : index
    %c48_45 = arith.constant 48 : index
    %61 = vector.load %arg11[%c89, %c48_45] : memref<328x80xf32, #tpu.memory_space<vmem>>, vector<14x16xf32>
    tpu.vector_store %arg11[%c89, %c48_45], %57 {strides = array<i32>} : memref<328x80xf32, #tpu.memory_space<vmem>>, vector<14x16xf32>,
    %c88 = arith.constant 88 : index
    %c64_46 = arith.constant 64 : index
    %62 = vector.load %arg11[%c88, %c64_46] : memref<328x80xf32, #tpu.memory_space<vmem>>, vector<14x16xf32>
    tpu.vector_store %arg11[%c88, %c64_46], %57 {strides = array<i32>} : memref<328x80xf32, #tpu.memory_space<vmem>>, vector<14x16xf32>,
    %c112 = arith.constant 112 : index
    %c0_47 = arith.constant 0 : index
    %63 = vector.load %arg10[%c112, %c0_47] : memref<392x16xf32, #tpu.memory_space<vmem>>, vector<14x16xf32>
    %c126 = arith.constant 126 : index
    %c0_48 = arith.constant 0 : index
    %64 = vector.load %arg10[%c126, %c0_48] : memref<392x16xf32, #tpu.memory_space<vmem>>, vector<14x16xf32>
    %65 = arith.maximumf %63, %64 : vector<14x16xf32>
    %66 = vector.broadcast %14 : vector<1x16xf32> to vector<14x16xf32>
    %67 = arith.addf %65, %66 : vector<14x16xf32>
    %cst_49 = arith.constant 0.000000e+00 : f32
    %68 = vector.broadcast %cst_49 : f32 to vector<14x16xf32>
    %69 = arith.maximumf %67, %68 : vector<14x16xf32>
    %c110 = arith.constant 110 : index
    %c0_50 = arith.constant 0 : index
    %70 = vector.load %arg11[%c110, %c0_50] : memref<328x80xf32, #tpu.memory_space<vmem>>, vector<14x16xf32>
    tpu.vector_store %arg11[%c110, %c0_50], %69 {strides = array<i32>} : memref<328x80xf32, #tpu.memory_space<vmem>>, vector<14x16xf32>,
    %c109 = arith.constant 109 : index
    %c16_51 = arith.constant 16 : index
    %71 = vector.load %arg11[%c109, %c16_51] : memref<328x80xf32, #tpu.memory_space<vmem>>, vector<14x16xf32>
    tpu.vector_store %arg11[%c109, %c16_51], %69 {strides = array<i32>} : memref<328x80xf32, #tpu.memory_space<vmem>>, vector<14x16xf32>,
    %c108 = arith.constant 108 : index
    %c32_52 = arith.constant 32 : index
    %72 = vector.load %arg11[%c108, %c32_52] : memref<328x80xf32, #tpu.memory_space<vmem>>, vector<14x16xf32>
    tpu.vector_store %arg11[%c108, %c32_52], %69 {strides = array<i32>} : memref<328x80xf32, #tpu.memory_space<vmem>>, vector<14x16xf32>,
    %c107 = arith.constant 107 : index
    %c48_53 = arith.constant 48 : index
    %73 = vector.load %arg11[%c107, %c48_53] : memref<328x80xf32, #tpu.memory_space<vmem>>, vector<14x16xf32>
    tpu.vector_store %arg11[%c107, %c48_53], %69 {strides = array<i32>} : memref<328x80xf32, #tpu.memory_space<vmem>>, vector<14x16xf32>,
    %c106 = arith.constant 106 : index
    %c64_54 = arith.constant 64 : index
    %74 = vector.load %arg11[%c106, %c64_54] : memref<328x80xf32, #tpu.memory_space<vmem>>, vector<14x16xf32>
    tpu.vector_store %arg11[%c106, %c64_54], %69 {strides = array<i32>} : memref<328x80xf32, #tpu.memory_space<vmem>>, vector<14x16xf32>,
    %c140 = arith.constant 140 : index
    %c0_55 = arith.constant 0 : index
    %75 = vector.load %arg10[%c140, %c0_55] : memref<392x16xf32, #tpu.memory_space<vmem>>, vector<14x16xf32>
    %c154 = arith.constant 154 : index
    %c0_56 = arith.constant 0 : index
    %76 = vector.load %arg10[%c154, %c0_56] : memref<392x16xf32, #tpu.memory_space<vmem>>, vector<14x16xf32>
    %77 = arith.maximumf %75, %76 : vector<14x16xf32>
    %78 = vector.broadcast %14 : vector<1x16xf32> to vector<14x16xf32>
    %79 = arith.addf %77, %78 : vector<14x16xf32>
    %cst_57 = arith.constant 0.000000e+00 : f32
    %80 = vector.broadcast %cst_57 : f32 to vector<14x16xf32>
    %81 = arith.maximumf %79, %80 : vector<14x16xf32>
    %c128 = arith.constant 128 : index
    %c0_58 = arith.constant 0 : index
    %82 = vector.load %arg11[%c128, %c0_58] : memref<328x80xf32, #tpu.memory_space<vmem>>, vector<14x16xf32>
    tpu.vector_store %arg11[%c128, %c0_58], %81 {strides = array<i32>} : memref<328x80xf32, #tpu.memory_space<vmem>>, vector<14x16xf32>,
    %c127 = arith.constant 127 : index
    %c16_59 = arith.constant 16 : index
    %83 = vector.load %arg11[%c127, %c16_59] : memref<328x80xf32, #tpu.memory_space<vmem>>, vector<14x16xf32>
    tpu.vector_store %arg11[%c127, %c16_59], %81 {strides = array<i32>} : memref<328x80xf32, #tpu.memory_space<vmem>>, vector<14x16xf32>,
    %c126_60 = arith.constant 126 : index
    %c32_61 = arith.constant 32 : index
    %84 = vector.load %arg11[%c126_60, %c32_61] : memref<328x80xf32, #tpu.memory_space<vmem>>, vector<14x16xf32>
    tpu.vector_store %arg11[%c126_60, %c32_61], %81 {strides = array<i32>} : memref<328x80xf32, #tpu.memory_space<vmem>>, vector<14x16xf32>,
    %c125 = arith.constant 125 : index
    %c48_62 = arith.constant 48 : index
    %85 = vector.load %arg11[%c125, %c48_62] : memref<328x80xf32, #tpu.memory_space<vmem>>, vector<14x16xf32>
    tpu.vector_store %arg11[%c125, %c48_62], %81 {strides = array<i32>} : memref<328x80xf32, #tpu.memory_space<vmem>>, vector<14x16xf32>,
    %c124 = arith.constant 124 : index
    %c64_63 = arith.constant 64 : index
    %86 = vector.load %arg11[%c124, %c64_63] : memref<328x80xf32, #tpu.memory_space<vmem>>, vector<14x16xf32>
    tpu.vector_store %arg11[%c124, %c64_63], %81 {strides = array<i32>} : memref<328x80xf32, #tpu.memory_space<vmem>>, vector<14x16xf32>,
    %c168 = arith.constant 168 : index
    %c0_64 = arith.constant 0 : index
    %87 = vector.load %arg10[%c168, %c0_64] : memref<392x16xf32, #tpu.memory_space<vmem>>, vector<14x16xf32>
    %c182 = arith.constant 182 : index
    %c0_65 = arith.constant 0 : index
    %88 = vector.load %arg10[%c182, %c0_65] : memref<392x16xf32, #tpu.memory_space<vmem>>, vector<14x16xf32>
    %89 = arith.maximumf %87, %88 : vector<14x16xf32>
    %90 = vector.broadcast %14 : vector<1x16xf32> to vector<14x16xf32>
    %91 = arith.addf %89, %90 : vector<14x16xf32>
    %cst_66 = arith.constant 0.000000e+00 : f32
    %92 = vector.broadcast %cst_66 : f32 to vector<14x16xf32>
    %93 = arith.maximumf %91, %92 : vector<14x16xf32>
    %c146 = arith.constant 146 : index
    %c0_67 = arith.constant 0 : index
    %94 = vector.load %arg11[%c146, %c0_67] : memref<328x80xf32, #tpu.memory_space<vmem>>, vector<14x16xf32>
    tpu.vector_store %arg11[%c146, %c0_67], %93 {strides = array<i32>} : memref<328x80xf32, #tpu.memory_space<vmem>>, vector<14x16xf32>,
    %c145 = arith.constant 145 : index
    %c16_68 = arith.constant 16 : index
    %95 = vector.load %arg11[%c145, %c16_68] : memref<328x80xf32, #tpu.memory_space<vmem>>, vector<14x16xf32>
    tpu.vector_store %arg11[%c145, %c16_68], %93 {strides = array<i32>} : memref<328x80xf32, #tpu.memory_space<vmem>>, vector<14x16xf32>,
    %c144 = arith.constant 144 : index
    %c32_69 = arith.constant 32 : index
    %96 = vector.load %arg11[%c144, %c32_69] : memref<328x80xf32, #tpu.memory_space<vmem>>, vector<14x16xf32>
    tpu.vector_store %arg11[%c144, %c32_69], %93 {strides = array<i32>} : memref<328x80xf32, #tpu.memory_space<vmem>>, vector<14x16xf32>,
    %c143 = arith.constant 143 : index
    %c48_70 = arith.constant 48 : index
    %97 = vector.load %arg11[%c143, %c48_70] : memref<328x80xf32, #tpu.memory_space<vmem>>, vector<14x16xf32>
    tpu.vector_store %arg11[%c143, %c48_70], %93 {strides = array<i32>} : memref<328x80xf32, #tpu.memory_space<vmem>>, vector<14x16xf32>,
    %c142 = arith.constant 142 : index
    %c64_71 = arith.constant 64 : index
    %98 = vector.load %arg11[%c142, %c64_71] : memref<328x80xf32, #tpu.memory_space<vmem>>, vector<14x16xf32>
    tpu.vector_store %arg11[%c142, %c64_71], %93 {strides = array<i32>} : memref<328x80xf32, #tpu.memory_space<vmem>>, vector<14x16xf32>,
    %c196 = arith.constant 196 : index
    %c0_72 = arith.constant 0 : index
    %99 = vector.load %arg10[%c196, %c0_72] : memref<392x16xf32, #tpu.memory_space<vmem>>, vector<14x16xf32>
    %c210 = arith.constant 210 : index
    %c0_73 = arith.constant 0 : index
    %100 = vector.load %arg10[%c210, %c0_73] : memref<392x16xf32, #tpu.memory_space<vmem>>, vector<14x16xf32>
    %101 = arith.maximumf %99, %100 : vector<14x16xf32>
    %102 = vector.broadcast %14 : vector<1x16xf32> to vector<14x16xf32>
    %103 = arith.addf %101, %102 : vector<14x16xf32>
    %cst_74 = arith.constant 0.000000e+00 : f32
    %104 = vector.broadcast %cst_74 : f32 to vector<14x16xf32>
    %105 = arith.maximumf %103, %104 : vector<14x16xf32>
    %c164 = arith.constant 164 : index
    %c0_75 = arith.constant 0 : index
    %106 = vector.load %arg11[%c164, %c0_75] : memref<328x80xf32, #tpu.memory_space<vmem>>, vector<14x16xf32>
    tpu.vector_store %arg11[%c164, %c0_75], %105 {strides = array<i32>} : memref<328x80xf32, #tpu.memory_space<vmem>>, vector<14x16xf32>,
    %c163 = arith.constant 163 : index
    %c16_76 = arith.constant 16 : index
    %107 = vector.load %arg11[%c163, %c16_76] : memref<328x80xf32, #tpu.memory_space<vmem>>, vector<14x16xf32>
    tpu.vector_store %arg11[%c163, %c16_76], %105 {strides = array<i32>} : memref<328x80xf32, #tpu.memory_space<vmem>>, vector<14x16xf32>,
    %c162 = arith.constant 162 : index
    %c32_77 = arith.constant 32 : index
    %108 = vector.load %arg11[%c162, %c32_77] : memref<328x80xf32, #tpu.memory_space<vmem>>, vector<14x16xf32>
    tpu.vector_store %arg11[%c162, %c32_77], %105 {strides = array<i32>} : memref<328x80xf32, #tpu.memory_space<vmem>>, vector<14x16xf32>,
    %c161 = arith.constant 161 : index
    %c48_78 = arith.constant 48 : index
    %109 = vector.load %arg11[%c161, %c48_78] : memref<328x80xf32, #tpu.memory_space<vmem>>, vector<14x16xf32>
    tpu.vector_store %arg11[%c161, %c48_78], %105 {strides = array<i32>} : memref<328x80xf32, #tpu.memory_space<vmem>>, vector<14x16xf32>,
    %c160 = arith.constant 160 : index
    %c64_79 = arith.constant 64 : index
    %110 = vector.load %arg11[%c160, %c64_79] : memref<328x80xf32, #tpu.memory_space<vmem>>, vector<14x16xf32>
    tpu.vector_store %arg11[%c160, %c64_79], %105 {strides = array<i32>} : memref<328x80xf32, #tpu.memory_space<vmem>>, vector<14x16xf32>,
    %c224 = arith.constant 224 : index
    %c0_80 = arith.constant 0 : index
    %111 = vector.load %arg10[%c224, %c0_80] : memref<392x16xf32, #tpu.memory_space<vmem>>, vector<14x16xf32>
    %c238 = arith.constant 238 : index
    %c0_81 = arith.constant 0 : index
    %112 = vector.load %arg10[%c238, %c0_81] : memref<392x16xf32, #tpu.memory_space<vmem>>, vector<14x16xf32>
    %113 = arith.maximumf %111, %112 : vector<14x16xf32>
    %114 = vector.broadcast %14 : vector<1x16xf32> to vector<14x16xf32>
    %115 = arith.addf %113, %114 : vector<14x16xf32>
    %cst_82 = arith.constant 0.000000e+00 : f32
    %116 = vector.broadcast %cst_82 : f32 to vector<14x16xf32>
    %117 = arith.maximumf %115, %116 : vector<14x16xf32>
    %c182_83 = arith.constant 182 : index
    %c0_84 = arith.constant 0 : index
    %118 = vector.load %arg11[%c182_83, %c0_84] : memref<328x80xf32, #tpu.memory_space<vmem>>, vector<14x16xf32>
    tpu.vector_store %arg11[%c182_83, %c0_84], %117 {strides = array<i32>} : memref<328x80xf32, #tpu.memory_space<vmem>>, vector<14x16xf32>,
    %c181 = arith.constant 181 : index
    %c16_85 = arith.constant 16 : index
    %119 = vector.load %arg11[%c181, %c16_85] : memref<328x80xf32, #tpu.memory_space<vmem>>, vector<14x16xf32>
    tpu.vector_store %arg11[%c181, %c16_85], %117 {strides = array<i32>} : memref<328x80xf32, #tpu.memory_space<vmem>>, vector<14x16xf32>,
    %c180 = arith.constant 180 : index
    %c32_86 = arith.constant 32 : index
    %120 = vector.load %arg11[%c180, %c32_86] : memref<328x80xf32, #tpu.memory_space<vmem>>, vector<14x16xf32>
    tpu.vector_store %arg11[%c180, %c32_86], %117 {strides = array<i32>} : memref<328x80xf32, #tpu.memory_space<vmem>>, vector<14x16xf32>,
    %c179 = arith.constant 179 : index
    %c48_87 = arith.constant 48 : index
    %121 = vector.load %arg11[%c179, %c48_87] : memref<328x80xf32, #tpu.memory_space<vmem>>, vector<14x16xf32>
    tpu.vector_store %arg11[%c179, %c48_87], %117 {strides = array<i32>} : memref<328x80xf32, #tpu.memory_space<vmem>>, vector<14x16xf32>,
    %c178 = arith.constant 178 : index
    %c64_88 = arith.constant 64 : index
    %122 = vector.load %arg11[%c178, %c64_88] : memref<328x80xf32, #tpu.memory_space<vmem>>, vector<14x16xf32>
    tpu.vector_store %arg11[%c178, %c64_88], %117 {strides = array<i32>} : memref<328x80xf32, #tpu.memory_space<vmem>>, vector<14x16xf32>,
    %c252 = arith.constant 252 : index
    %c0_89 = arith.constant 0 : index
    %123 = vector.load %arg10[%c252, %c0_89] : memref<392x16xf32, #tpu.memory_space<vmem>>, vector<14x16xf32>
    %c266 = arith.constant 266 : index
    %c0_90 = arith.constant 0 : index
    %124 = vector.load %arg10[%c266, %c0_90] : memref<392x16xf32, #tpu.memory_space<vmem>>, vector<14x16xf32>
    %125 = arith.maximumf %123, %124 : vector<14x16xf32>
    %126 = vector.broadcast %14 : vector<1x16xf32> to vector<14x16xf32>
    %127 = arith.addf %125, %126 : vector<14x16xf32>
    %cst_91 = arith.constant 0.000000e+00 : f32
    %128 = vector.broadcast %cst_91 : f32 to vector<14x16xf32>
    %129 = arith.maximumf %127, %128 : vector<14x16xf32>
    %c200 = arith.constant 200 : index
    %c0_92 = arith.constant 0 : index
    %130 = vector.load %arg11[%c200, %c0_92] : memref<328x80xf32, #tpu.memory_space<vmem>>, vector<14x16xf32>
    tpu.vector_store %arg11[%c200, %c0_92], %129 {strides = array<i32>} : memref<328x80xf32, #tpu.memory_space<vmem>>, vector<14x16xf32>,
    %c199 = arith.constant 199 : index
    %c16_93 = arith.constant 16 : index
    %131 = vector.load %arg11[%c199, %c16_93] : memref<328x80xf32, #tpu.memory_space<vmem>>, vector<14x16xf32>
    tpu.vector_store %arg11[%c199, %c16_93], %129 {strides = array<i32>} : memref<328x80xf32, #tpu.memory_space<vmem>>, vector<14x16xf32>,
    %c198 = arith.constant 198 : index
    %c32_94 = arith.constant 32 : index
    %132 = vector.load %arg11[%c198, %c32_94] : memref<328x80xf32, #tpu.memory_space<vmem>>, vector<14x16xf32>
    tpu.vector_store %arg11[%c198, %c32_94], %129 {strides = array<i32>} : memref<328x80xf32, #tpu.memory_space<vmem>>, vector<14x16xf32>,
    %c197 = arith.constant 197 : index
    %c48_95 = arith.constant 48 : index
    %133 = vector.load %arg11[%c197, %c48_95] : memref<328x80xf32, #tpu.memory_space<vmem>>, vector<14x16xf32>
    tpu.vector_store %arg11[%c197, %c48_95], %129 {strides = array<i32>} : memref<328x80xf32, #tpu.memory_space<vmem>>, vector<14x16xf32>,
    %c196_96 = arith.constant 196 : index
    %c64_97 = arith.constant 64 : index
    %134 = vector.load %arg11[%c196_96, %c64_97] : memref<328x80xf32, #tpu.memory_space<vmem>>, vector<14x16xf32>
    tpu.vector_store %arg11[%c196_96, %c64_97], %129 {strides = array<i32>} : memref<328x80xf32, #tpu.memory_space<vmem>>, vector<14x16xf32>,
    %c280 = arith.constant 280 : index
    %c0_98 = arith.constant 0 : index
    %135 = vector.load %arg10[%c280, %c0_98] : memref<392x16xf32, #tpu.memory_space<vmem>>, vector<14x16xf32>
    %c294 = arith.constant 294 : index
    %c0_99 = arith.constant 0 : index
    %136 = vector.load %arg10[%c294, %c0_99] : memref<392x16xf32, #tpu.memory_space<vmem>>, vector<14x16xf32>
    %137 = arith.maximumf %135, %136 : vector<14x16xf32>
    %138 = vector.broadcast %14 : vector<1x16xf32> to vector<14x16xf32>
    %139 = arith.addf %137, %138 : vector<14x16xf32>
    %cst_100 = arith.constant 0.000000e+00 : f32
    %140 = vector.broadcast %cst_100 : f32 to vector<14x16xf32>
    %141 = arith.maximumf %139, %140 : vector<14x16xf32>
    %c218 = arith.constant 218 : index
    %c0_101 = arith.constant 0 : index
    %142 = vector.load %arg11[%c218, %c0_101] : memref<328x80xf32, #tpu.memory_space<vmem>>, vector<14x16xf32>
    tpu.vector_store %arg11[%c218, %c0_101], %141 {strides = array<i32>} : memref<328x80xf32, #tpu.memory_space<vmem>>, vector<14x16xf32>,
    %c217 = arith.constant 217 : index
    %c16_102 = arith.constant 16 : index
    %143 = vector.load %arg11[%c217, %c16_102] : memref<328x80xf32, #tpu.memory_space<vmem>>, vector<14x16xf32>
    tpu.vector_store %arg11[%c217, %c16_102], %141 {strides = array<i32>} : memref<328x80xf32, #tpu.memory_space<vmem>>, vector<14x16xf32>,
    %c216 = arith.constant 216 : index
    %c32_103 = arith.constant 32 : index
    %144 = vector.load %arg11[%c216, %c32_103] : memref<328x80xf32, #tpu.memory_space<vmem>>, vector<14x16xf32>
    tpu.vector_store %arg11[%c216, %c32_103], %141 {strides = array<i32>} : memref<328x80xf32, #tpu.memory_space<vmem>>, vector<14x16xf32>,
    %c215 = arith.constant 215 : index
    %c48_104 = arith.constant 48 : index
    %145 = vector.load %arg11[%c215, %c48_104] : memref<328x80xf32, #tpu.memory_space<vmem>>, vector<14x16xf32>
    tpu.vector_store %arg11[%c215, %c48_104], %141 {strides = array<i32>} : memref<328x80xf32, #tpu.memory_space<vmem>>, vector<14x16xf32>,
    %c214 = arith.constant 214 : index
    %c64_105 = arith.constant 64 : index
    %146 = vector.load %arg11[%c214, %c64_105] : memref<328x80xf32, #tpu.memory_space<vmem>>, vector<14x16xf32>
    tpu.vector_store %arg11[%c214, %c64_105], %141 {strides = array<i32>} : memref<328x80xf32, #tpu.memory_space<vmem>>, vector<14x16xf32>,
    %c308 = arith.constant 308 : index
    %c0_106 = arith.constant 0 : index
    %147 = vector.load %arg10[%c308, %c0_106] : memref<392x16xf32, #tpu.memory_space<vmem>>, vector<14x16xf32>
    %c322 = arith.constant 322 : index
    %c0_107 = arith.constant 0 : index
    %148 = vector.load %arg10[%c322, %c0_107] : memref<392x16xf32, #tpu.memory_space<vmem>>, vector<14x16xf32>
    %149 = arith.maximumf %147, %148 : vector<14x16xf32>
    %150 = vector.broadcast %14 : vector<1x16xf32> to vector<14x16xf32>
    %151 = arith.addf %149, %150 : vector<14x16xf32>
    %cst_108 = arith.constant 0.000000e+00 : f32
    %152 = vector.broadcast %cst_108 : f32 to vector<14x16xf32>
    %153 = arith.maximumf %151, %152 : vector<14x16xf32>
    %c236 = arith.constant 236 : index
    %c0_109 = arith.constant 0 : index
    %154 = vector.load %arg11[%c236, %c0_109] : memref<328x80xf32, #tpu.memory_space<vmem>>, vector<14x16xf32>
    tpu.vector_store %arg11[%c236, %c0_109], %153 {strides = array<i32>} : memref<328x80xf32, #tpu.memory_space<vmem>>, vector<14x16xf32>,
    %c235 = arith.constant 235 : index
    %c16_110 = arith.constant 16 : index
    %155 = vector.load %arg11[%c235, %c16_110] : memref<328x80xf32, #tpu.memory_space<vmem>>, vector<14x16xf32>
    tpu.vector_store %arg11[%c235, %c16_110], %153 {strides = array<i32>} : memref<328x80xf32, #tpu.memory_space<vmem>>, vector<14x16xf32>,
    %c234 = arith.constant 234 : index
    %c32_111 = arith.constant 32 : index
    %156 = vector.load %arg11[%c234, %c32_111] : memref<328x80xf32, #tpu.memory_space<vmem>>, vector<14x16xf32>
    tpu.vector_store %arg11[%c234, %c32_111], %153 {strides = array<i32>} : memref<328x80xf32, #tpu.memory_space<vmem>>, vector<14x16xf32>,
    %c233 = arith.constant 233 : index
    %c48_112 = arith.constant 48 : index
    %157 = vector.load %arg11[%c233, %c48_112] : memref<328x80xf32, #tpu.memory_space<vmem>>, vector<14x16xf32>
    tpu.vector_store %arg11[%c233, %c48_112], %153 {strides = array<i32>} : memref<328x80xf32, #tpu.memory_space<vmem>>, vector<14x16xf32>,
    %c232 = arith.constant 232 : index
    %c64_113 = arith.constant 64 : index
    %158 = vector.load %arg11[%c232, %c64_113] : memref<328x80xf32, #tpu.memory_space<vmem>>, vector<14x16xf32>
    tpu.vector_store %arg11[%c232, %c64_113], %153 {strides = array<i32>} : memref<328x80xf32, #tpu.memory_space<vmem>>, vector<14x16xf32>,
    %c336 = arith.constant 336 : index
    %c0_114 = arith.constant 0 : index
    %159 = vector.load %arg10[%c336, %c0_114] : memref<392x16xf32, #tpu.memory_space<vmem>>, vector<14x16xf32>
    %c350 = arith.constant 350 : index
    %c0_115 = arith.constant 0 : index
    %160 = vector.load %arg10[%c350, %c0_115] : memref<392x16xf32, #tpu.memory_space<vmem>>, vector<14x16xf32>
    %161 = arith.maximumf %159, %160 : vector<14x16xf32>
    %162 = vector.broadcast %14 : vector<1x16xf32> to vector<14x16xf32>
    %163 = arith.addf %161, %162 : vector<14x16xf32>
    %cst_116 = arith.constant 0.000000e+00 : f32
    %164 = vector.broadcast %cst_116 : f32 to vector<14x16xf32>
    %165 = arith.maximumf %163, %164 : vector<14x16xf32>
    %c254 = arith.constant 254 : index
    %c0_117 = arith.constant 0 : index
    %166 = vector.load %arg11[%c254, %c0_117] : memref<328x80xf32, #tpu.memory_space<vmem>>, vector<14x16xf32>
    tpu.vector_store %arg11[%c254, %c0_117], %165 {strides = array<i32>} : memref<328x80xf32, #tpu.memory_space<vmem>>, vector<14x16xf32>,
    %c253 = arith.constant 253 : index
    %c16_118 = arith.constant 16 : index
    %167 = vector.load %arg11[%c253, %c16_118] : memref<328x80xf32, #tpu.memory_space<vmem>>, vector<14x16xf32>
    tpu.vector_store %arg11[%c253, %c16_118], %165 {strides = array<i32>} : memref<328x80xf32, #tpu.memory_space<vmem>>, vector<14x16xf32>,
    %c252_119 = arith.constant 252 : index
    %c32_120 = arith.constant 32 : index
    %168 = vector.load %arg11[%c252_119, %c32_120] : memref<328x80xf32, #tpu.memory_space<vmem>>, vector<14x16xf32>
    tpu.vector_store %arg11[%c252_119, %c32_120], %165 {strides = array<i32>} : memref<328x80xf32, #tpu.memory_space<vmem>>, vector<14x16xf32>,
    %c251 = arith.constant 251 : index
    %c48_121 = arith.constant 48 : index
    %169 = vector.load %arg11[%c251, %c48_121] : memref<328x80xf32, #tpu.memory_space<vmem>>, vector<14x16xf32>
    tpu.vector_store %arg11[%c251, %c48_121], %165 {strides = array<i32>} : memref<328x80xf32, #tpu.memory_space<vmem>>, vector<14x16xf32>,
    %c250 = arith.constant 250 : index
    %c64_122 = arith.constant 64 : index
    %170 = vector.load %arg11[%c250, %c64_122] : memref<328x80xf32, #tpu.memory_space<vmem>>, vector<14x16xf32>
    tpu.vector_store %arg11[%c250, %c64_122], %165 {strides = array<i32>} : memref<328x80xf32, #tpu.memory_space<vmem>>, vector<14x16xf32>,
    %c364 = arith.constant 364 : index
    %c0_123 = arith.constant 0 : index
    %171 = vector.load %arg10[%c364, %c0_123] : memref<392x16xf32, #tpu.memory_space<vmem>>, vector<14x16xf32>
    %c378 = arith.constant 378 : index
    %c0_124 = arith.constant 0 : index
    %172 = vector.load %arg10[%c378, %c0_124] : memref<392x16xf32, #tpu.memory_space<vmem>>, vector<14x16xf32>
    %173 = arith.maximumf %171, %172 : vector<14x16xf32>
    %174 = vector.broadcast %14 : vector<1x16xf32> to vector<14x16xf32>
    %175 = arith.addf %173, %174 : vector<14x16xf32>
    %cst_125 = arith.constant 0.000000e+00 : f32
    %176 = vector.broadcast %cst_125 : f32 to vector<14x16xf32>
    %177 = arith.maximumf %175, %176 : vector<14x16xf32>
    %c272 = arith.constant 272 : index
    %c0_126 = arith.constant 0 : index
    %178 = vector.load %arg11[%c272, %c0_126] : memref<328x80xf32, #tpu.memory_space<vmem>>, vector<14x16xf32>
    tpu.vector_store %arg11[%c272, %c0_126], %177 {strides = array<i32>} : memref<328x80xf32, #tpu.memory_space<vmem>>, vector<14x16xf32>,
    %c271 = arith.constant 271 : index
    %c16_127 = arith.constant 16 : index
    %179 = vector.load %arg11[%c271, %c16_127] : memref<328x80xf32, #tpu.memory_space<vmem>>, vector<14x16xf32>
    tpu.vector_store %arg11[%c271, %c16_127], %177 {strides = array<i32>} : memref<328x80xf32, #tpu.memory_space<vmem>>, vector<14x16xf32>,
    %c270 = arith.constant 270 : index
    %c32_128 = arith.constant 32 : index
    %180 = vector.load %arg11[%c270, %c32_128] : memref<328x80xf32, #tpu.memory_space<vmem>>, vector<14x16xf32>
    tpu.vector_store %arg11[%c270, %c32_128], %177 {strides = array<i32>} : memref<328x80xf32, #tpu.memory_space<vmem>>, vector<14x16xf32>,
    %c269 = arith.constant 269 : index
    %c48_129 = arith.constant 48 : index
    %181 = vector.load %arg11[%c269, %c48_129] : memref<328x80xf32, #tpu.memory_space<vmem>>, vector<14x16xf32>
    tpu.vector_store %arg11[%c269, %c48_129], %177 {strides = array<i32>} : memref<328x80xf32, #tpu.memory_space<vmem>>, vector<14x16xf32>,
    %c268 = arith.constant 268 : index
    %c64_130 = arith.constant 64 : index
    %182 = vector.load %arg11[%c268, %c64_130] : memref<328x80xf32, #tpu.memory_space<vmem>>, vector<14x16xf32>
    tpu.vector_store %arg11[%c268, %c64_130], %177 {strides = array<i32>} : memref<328x80xf32, #tpu.memory_space<vmem>>, vector<14x16xf32>,
    %c0_131 = arith.constant 0 : index
    %c0_132 = arith.constant 0 : index
    %183 = vector.load %arg11[%c0_131, %c0_132] : memref<328x80xf32, #tpu.memory_space<vmem>>, vector<252x80xf32>
    %184 = arith.truncf %183 : vector<252x80xf32> to vector<252x80xbf16>
    %c0_133 = arith.constant 0 : index
    %c0_134 = arith.constant 0 : index
    %c0_135 = arith.constant 0 : index
    %185 = vector.load %arg4[%c0_133, %c0_134, %c0_135] : memref<5x80x32xbf16, #tpu.memory_space<vmem>>, vector<1x80x32xbf16>
    %186 = vector.shape_cast %185 : vector<1x80x32xbf16> to vector<80x32xbf16>
    %cst_136 = arith.constant dense<0.000000e+00> : vector<252x32xf32>
    %187 = tpu.matmul %184, %186, %cst_136 {dimension_numbers = #tpu.dot_dimension_numbers<[1], [0], [0], [1], [0, 0, 1, 1], [], []>} : vector<252x80xbf16>, vector<80x32xbf16>, vector<252x32xf32> -> vector<252x32xf32>
    %c0_137 = arith.constant 0 : index
    %c0_138 = arith.constant 0 : index
    %188 = vector.load %arg12[%c0_137, %c0_138] : memref<252x32xf32, #tpu.memory_space<vmem>>, vector<252x32xf32>
    tpu.vector_store %arg12[%c0_137, %c0_138], %187 {strides = array<i32>} : memref<252x32xf32, #tpu.memory_space<vmem>>, vector<252x32xf32>,
    %c18 = arith.constant 18 : index
    %c0_139 = arith.constant 0 : index
    %189 = vector.load %arg11[%c18, %c0_139] : memref<328x80xf32, #tpu.memory_space<vmem>>, vector<252x80xf32>
    %190 = arith.truncf %189 : vector<252x80xf32> to vector<252x80xbf16>
    %c1_140 = arith.constant 1 : index
    %c0_141 = arith.constant 0 : index
    %c0_142 = arith.constant 0 : index
    %191 = vector.load %arg4[%c1_140, %c0_141, %c0_142] : memref<5x80x32xbf16, #tpu.memory_space<vmem>>, vector<1x80x32xbf16>
    %192 = vector.shape_cast %191 : vector<1x80x32xbf16> to vector<80x32xbf16>
    %cst_143 = arith.constant dense<0.000000e+00> : vector<252x32xf32>
    %193 = tpu.matmul %190, %192, %cst_143 {dimension_numbers = #tpu.dot_dimension_numbers<[1], [0], [0], [1], [0, 0, 1, 1], [], []>} : vector<252x80xbf16>, vector<80x32xbf16>, vector<252x32xf32> -> vector<252x32xf32>
    %c0_144 = arith.constant 0 : index
    %c0_145 = arith.constant 0 : index
    %194 = vector.load %arg12[%c0_144, %c0_145] : memref<252x32xf32, #tpu.memory_space<vmem>>, vector<252x32xf32>
    %195 = arith.addf %194, %193 : vector<252x32xf32>
    %c0_146 = arith.constant 0 : index
    %c0_147 = arith.constant 0 : index
    %196 = vector.load %arg12[%c0_146, %c0_147] : memref<252x32xf32, #tpu.memory_space<vmem>>, vector<252x32xf32>
    tpu.vector_store %arg12[%c0_146, %c0_147], %195 {strides = array<i32>} : memref<252x32xf32, #tpu.memory_space<vmem>>, vector<252x32xf32>,
    %c36_148 = arith.constant 36 : index
    %c0_149 = arith.constant 0 : index
    %197 = vector.load %arg11[%c36_148, %c0_149] : memref<328x80xf32, #tpu.memory_space<vmem>>, vector<252x80xf32>
    %198 = arith.truncf %197 : vector<252x80xf32> to vector<252x80xbf16>
    %c2 = arith.constant 2 : index
    %c0_150 = arith.constant 0 : index
    %c0_151 = arith.constant 0 : index
    %199 = vector.load %arg4[%c2, %c0_150, %c0_151] : memref<5x80x32xbf16, #tpu.memory_space<vmem>>, vector<1x80x32xbf16>
    %200 = vector.shape_cast %199 : vector<1x80x32xbf16> to vector<80x32xbf16>
    %cst_152 = arith.constant dense<0.000000e+00> : vector<252x32xf32>
    %201 = tpu.matmul %198, %200, %cst_152 {dimension_numbers = #tpu.dot_dimension_numbers<[1], [0], [0], [1], [0, 0, 1, 1], [], []>} : vector<252x80xbf16>, vector<80x32xbf16>, vector<252x32xf32> -> vector<252x32xf32>
    %c0_153 = arith.constant 0 : index
    %c0_154 = arith.constant 0 : index
    %202 = vector.load %arg12[%c0_153, %c0_154] : memref<252x32xf32, #tpu.memory_space<vmem>>, vector<252x32xf32>
    %203 = arith.addf %202, %201 : vector<252x32xf32>
    %c0_155 = arith.constant 0 : index
    %c0_156 = arith.constant 0 : index
    %204 = vector.load %arg12[%c0_155, %c0_156] : memref<252x32xf32, #tpu.memory_space<vmem>>, vector<252x32xf32>
    tpu.vector_store %arg12[%c0_155, %c0_156], %203 {strides = array<i32>} : memref<252x32xf32, #tpu.memory_space<vmem>>, vector<252x32xf32>,
    %c54_157 = arith.constant 54 : index
    %c0_158 = arith.constant 0 : index
    %205 = vector.load %arg11[%c54_157, %c0_158] : memref<328x80xf32, #tpu.memory_space<vmem>>, vector<252x80xf32>
    %206 = arith.truncf %205 : vector<252x80xf32> to vector<252x80xbf16>
    %c3 = arith.constant 3 : index
    %c0_159 = arith.constant 0 : index
    %c0_160 = arith.constant 0 : index
    %207 = vector.load %arg4[%c3, %c0_159, %c0_160] : memref<5x80x32xbf16, #tpu.memory_space<vmem>>, vector<1x80x32xbf16>
    %208 = vector.shape_cast %207 : vector<1x80x32xbf16> to vector<80x32xbf16>
    %cst_161 = arith.constant dense<0.000000e+00> : vector<252x32xf32>
    %209 = tpu.matmul %206, %208, %cst_161 {dimension_numbers = #tpu.dot_dimension_numbers<[1], [0], [0], [1], [0, 0, 1, 1], [], []>} : vector<252x80xbf16>, vector<80x32xbf16>, vector<252x32xf32> -> vector<252x32xf32>
    %c0_162 = arith.constant 0 : index
    %c0_163 = arith.constant 0 : index
    %210 = vector.load %arg12[%c0_162, %c0_163] : memref<252x32xf32, #tpu.memory_space<vmem>>, vector<252x32xf32>
    %211 = arith.addf %210, %209 : vector<252x32xf32>
    %c0_164 = arith.constant 0 : index
    %c0_165 = arith.constant 0 : index
    %212 = vector.load %arg12[%c0_164, %c0_165] : memref<252x32xf32, #tpu.memory_space<vmem>>, vector<252x32xf32>
    tpu.vector_store %arg12[%c0_164, %c0_165], %211 {strides = array<i32>} : memref<252x32xf32, #tpu.memory_space<vmem>>, vector<252x32xf32>,
    %c72_166 = arith.constant 72 : index
    %c0_167 = arith.constant 0 : index
    %213 = vector.load %arg11[%c72_166, %c0_167] : memref<328x80xf32, #tpu.memory_space<vmem>>, vector<252x80xf32>
    %214 = arith.truncf %213 : vector<252x80xf32> to vector<252x80xbf16>
    %c4 = arith.constant 4 : index
    %c0_168 = arith.constant 0 : index
    %c0_169 = arith.constant 0 : index
    %215 = vector.load %arg4[%c4, %c0_168, %c0_169] : memref<5x80x32xbf16, #tpu.memory_space<vmem>>, vector<1x80x32xbf16>
    %216 = vector.shape_cast %215 : vector<1x80x32xbf16> to vector<80x32xbf16>
    %cst_170 = arith.constant dense<0.000000e+00> : vector<252x32xf32>
    %217 = tpu.matmul %214, %216, %cst_170 {dimension_numbers = #tpu.dot_dimension_numbers<[1], [0], [0], [1], [0, 0, 1, 1], [], []>} : vector<252x80xbf16>, vector<80x32xbf16>, vector<252x32xf32> -> vector<252x32xf32>
    %c0_171 = arith.constant 0 : index
    %c0_172 = arith.constant 0 : index
    %218 = vector.load %arg12[%c0_171, %c0_172] : memref<252x32xf32, #tpu.memory_space<vmem>>, vector<252x32xf32>
    %219 = arith.addf %218, %217 : vector<252x32xf32>
    %c0_173 = arith.constant 0 : index
    %c0_174 = arith.constant 0 : index
    %220 = vector.load %arg12[%c0_173, %c0_174] : memref<252x32xf32, #tpu.memory_space<vmem>>, vector<252x32xf32>
    tpu.vector_store %arg12[%c0_173, %c0_174], %219 {strides = array<i32>} : memref<252x32xf32, #tpu.memory_space<vmem>>, vector<252x32xf32>,
    %c0_175 = arith.constant 0 : index
    %c0_176 = arith.constant 0 : index
    %221 = tpu.strided_load %arg12[%c0_175, %c0_176] {strides = array<i32: 2, 1>} : memref<252x32xf32, #tpu.memory_space<vmem>>, vector<126x32xf32>
    %c1_177 = arith.constant 1 : index
    %c0_178 = arith.constant 0 : index
    %222 = tpu.strided_load %arg12[%c1_177, %c0_178] {strides = array<i32: 2, 1>} : memref<252x32xf32, #tpu.memory_space<vmem>>, vector<126x32xf32>
    %223 = arith.maximumf %221, %222 : vector<126x32xf32>
    %c0_179 = arith.constant 0 : index
    %c0_180 = arith.constant 0 : index
    %224 = vector.load %arg13[%c0_179, %c0_180] : memref<126x32xf32, #tpu.memory_space<vmem>>, vector<126x32xf32>
    tpu.vector_store %arg13[%c0_179, %c0_180], %223 {strides = array<i32>} : memref<126x32xf32, #tpu.memory_space<vmem>>, vector<126x32xf32>,
    %c0_181 = arith.constant 0 : index
    %c0_182 = arith.constant 0 : index
    %225 = vector.load %arg5[%c0_181, %c0_182] : memref<1x32xf32, #tpu.memory_space<vmem>>, vector<1x32xf32>
    %c0_183 = arith.constant 0 : index
    %c0_184 = arith.constant 0 : index
    %226 = vector.load %arg13[%c0_183, %c0_184] : memref<126x32xf32, #tpu.memory_space<vmem>>, vector<7x32xf32>
    %c9 = arith.constant 9 : index
    %c0_185 = arith.constant 0 : index
    %227 = vector.load %arg13[%c9, %c0_185] : memref<126x32xf32, #tpu.memory_space<vmem>>, vector<7x32xf32>
    %228 = arith.maximumf %226, %227 : vector<7x32xf32>
    %229 = vector.broadcast %225 : vector<1x32xf32> to vector<7x32xf32>
    %230 = arith.addf %228, %229 : vector<7x32xf32>
    %cst_186 = arith.constant 0.000000e+00 : f32
    %231 = vector.broadcast %cst_186 : f32 to vector<7x32xf32>
    %232 = arith.maximumf %230, %231 : vector<7x32xf32>
    %c0_187 = arith.constant 0 : index
    %c0_188 = arith.constant 0 : index
    %233 = vector.load %arg14[%c0_187, %c0_188] : memref<49x32xf32, #tpu.memory_space<vmem>>, vector<7x32xf32>
    tpu.vector_store %arg14[%c0_187, %c0_188], %232 {strides = array<i32>} : memref<49x32xf32, #tpu.memory_space<vmem>>, vector<7x32xf32>,
    %c18_189 = arith.constant 18 : index
    %c0_190 = arith.constant 0 : index
    %234 = vector.load %arg13[%c18_189, %c0_190] : memref<126x32xf32, #tpu.memory_space<vmem>>, vector<7x32xf32>
    %c27 = arith.constant 27 : index
    %c0_191 = arith.constant 0 : index
    %235 = vector.load %arg13[%c27, %c0_191] : memref<126x32xf32, #tpu.memory_space<vmem>>, vector<7x32xf32>
    %236 = arith.maximumf %234, %235 : vector<7x32xf32>
    %237 = vector.broadcast %225 : vector<1x32xf32> to vector<7x32xf32>
    %238 = arith.addf %236, %237 : vector<7x32xf32>
    %cst_192 = arith.constant 0.000000e+00 : f32
    %239 = vector.broadcast %cst_192 : f32 to vector<7x32xf32>
    %240 = arith.maximumf %238, %239 : vector<7x32xf32>
    %c7 = arith.constant 7 : index
    %c0_193 = arith.constant 0 : index
    %241 = vector.load %arg14[%c7, %c0_193] : memref<49x32xf32, #tpu.memory_space<vmem>>, vector<7x32xf32>
    tpu.vector_store %arg14[%c7, %c0_193], %240 {strides = array<i32>} : memref<49x32xf32, #tpu.memory_space<vmem>>, vector<7x32xf32>,
    %c36_194 = arith.constant 36 : index
    %c0_195 = arith.constant 0 : index
    %242 = vector.load %arg13[%c36_194, %c0_195] : memref<126x32xf32, #tpu.memory_space<vmem>>, vector<7x32xf32>
    %c45 = arith.constant 45 : index
    %c0_196 = arith.constant 0 : index
    %243 = vector.load %arg13[%c45, %c0_196] : memref<126x32xf32, #tpu.memory_space<vmem>>, vector<7x32xf32>
    %244 = arith.maximumf %242, %243 : vector<7x32xf32>
    %245 = vector.broadcast %225 : vector<1x32xf32> to vector<7x32xf32>
    %246 = arith.addf %244, %245 : vector<7x32xf32>
    %cst_197 = arith.constant 0.000000e+00 : f32
    %247 = vector.broadcast %cst_197 : f32 to vector<7x32xf32>
    %248 = arith.maximumf %246, %247 : vector<7x32xf32>
    %c14_198 = arith.constant 14 : index
    %c0_199 = arith.constant 0 : index
    %249 = vector.load %arg14[%c14_198, %c0_199] : memref<49x32xf32, #tpu.memory_space<vmem>>, vector<7x32xf32>
    tpu.vector_store %arg14[%c14_198, %c0_199], %248 {strides = array<i32>} : memref<49x32xf32, #tpu.memory_space<vmem>>, vector<7x32xf32>,
    %c54_200 = arith.constant 54 : index
    %c0_201 = arith.constant 0 : index
    %250 = vector.load %arg13[%c54_200, %c0_201] : memref<126x32xf32, #tpu.memory_space<vmem>>, vector<7x32xf32>
    %c63 = arith.constant 63 : index
    %c0_202 = arith.constant 0 : index
    %251 = vector.load %arg13[%c63, %c0_202] : memref<126x32xf32, #tpu.memory_space<vmem>>, vector<7x32xf32>
    %252 = arith.maximumf %250, %251 : vector<7x32xf32>
    %253 = vector.broadcast %225 : vector<1x32xf32> to vector<7x32xf32>
    %254 = arith.addf %252, %253 : vector<7x32xf32>
    %cst_203 = arith.constant 0.000000e+00 : f32
    %255 = vector.broadcast %cst_203 : f32 to vector<7x32xf32>
    %256 = arith.maximumf %254, %255 : vector<7x32xf32>
    %c21 = arith.constant 21 : index
    %c0_204 = arith.constant 0 : index
    %257 = vector.load %arg14[%c21, %c0_204] : memref<49x32xf32, #tpu.memory_space<vmem>>, vector<7x32xf32>
    tpu.vector_store %arg14[%c21, %c0_204], %256 {strides = array<i32>} : memref<49x32xf32, #tpu.memory_space<vmem>>, vector<7x32xf32>,
    %c72_205 = arith.constant 72 : index
    %c0_206 = arith.constant 0 : index
    %258 = vector.load %arg13[%c72_205, %c0_206] : memref<126x32xf32, #tpu.memory_space<vmem>>, vector<7x32xf32>
    %c81 = arith.constant 81 : index
    %c0_207 = arith.constant 0 : index
    %259 = vector.load %arg13[%c81, %c0_207] : memref<126x32xf32, #tpu.memory_space<vmem>>, vector<7x32xf32>
    %260 = arith.maximumf %258, %259 : vector<7x32xf32>
    %261 = vector.broadcast %225 : vector<1x32xf32> to vector<7x32xf32>
    %262 = arith.addf %260, %261 : vector<7x32xf32>
    %cst_208 = arith.constant 0.000000e+00 : f32
    %263 = vector.broadcast %cst_208 : f32 to vector<7x32xf32>
    %264 = arith.maximumf %262, %263 : vector<7x32xf32>
    %c28_209 = arith.constant 28 : index
    %c0_210 = arith.constant 0 : index
    %265 = vector.load %arg14[%c28_209, %c0_210] : memref<49x32xf32, #tpu.memory_space<vmem>>, vector<7x32xf32>
    tpu.vector_store %arg14[%c28_209, %c0_210], %264 {strides = array<i32>} : memref<49x32xf32, #tpu.memory_space<vmem>>, vector<7x32xf32>,
    %c90_211 = arith.constant 90 : index
    %c0_212 = arith.constant 0 : index
    %266 = vector.load %arg13[%c90_211, %c0_212] : memref<126x32xf32, #tpu.memory_space<vmem>>, vector<7x32xf32>
    %c99 = arith.constant 99 : index
    %c0_213 = arith.constant 0 : index
    %267 = vector.load %arg13[%c99, %c0_213] : memref<126x32xf32, #tpu.memory_space<vmem>>, vector<7x32xf32>
    %268 = arith.maximumf %266, %267 : vector<7x32xf32>
    %269 = vector.broadcast %225 : vector<1x32xf32> to vector<7x32xf32>
    %270 = arith.addf %268, %269 : vector<7x32xf32>
    %cst_214 = arith.constant 0.000000e+00 : f32
    %271 = vector.broadcast %cst_214 : f32 to vector<7x32xf32>
    %272 = arith.maximumf %270, %271 : vector<7x32xf32>
    %c35_215 = arith.constant 35 : index
    %c0_216 = arith.constant 0 : index
    %273 = vector.load %arg14[%c35_215, %c0_216] : memref<49x32xf32, #tpu.memory_space<vmem>>, vector<7x32xf32>
    tpu.vector_store %arg14[%c35_215, %c0_216], %272 {strides = array<i32>} : memref<49x32xf32, #tpu.memory_space<vmem>>, vector<7x32xf32>,
    %c108_217 = arith.constant 108 : index
    %c0_218 = arith.constant 0 : index
    %274 = vector.load %arg13[%c108_217, %c0_218] : memref<126x32xf32, #tpu.memory_space<vmem>>, vector<7x32xf32>
    %c117 = arith.constant 117 : index
    %c0_219 = arith.constant 0 : index
    %275 = vector.load %arg13[%c117, %c0_219] : memref<126x32xf32, #tpu.memory_space<vmem>>, vector<7x32xf32>
    %276 = arith.maximumf %274, %275 : vector<7x32xf32>
    %277 = vector.broadcast %225 : vector<1x32xf32> to vector<7x32xf32>
    %278 = arith.addf %276, %277 : vector<7x32xf32>
    %cst_220 = arith.constant 0.000000e+00 : f32
    %279 = vector.broadcast %cst_220 : f32 to vector<7x32xf32>
    %280 = arith.maximumf %278, %279 : vector<7x32xf32>
    %c42_221 = arith.constant 42 : index
    %c0_222 = arith.constant 0 : index
    %281 = vector.load %arg14[%c42_221, %c0_222] : memref<49x32xf32, #tpu.memory_space<vmem>>, vector<7x32xf32>
    tpu.vector_store %arg14[%c42_221, %c0_222], %280 {strides = array<i32>} : memref<49x32xf32, #tpu.memory_space<vmem>>, vector<7x32xf32>,
    %c0_223 = arith.constant 0 : index
    %c0_224 = arith.constant 0 : index
    %282 = vector.load %arg14[%c0_223, %c0_224] : memref<49x32xf32, #tpu.memory_space<vmem>>, vector<49x32xf32>
    %c0_225 = arith.constant 0 : index
    %c0_226 = arith.constant 0 : index
    %c0_227 = arith.constant 0 : index
    %283 = vector.load %arg6[%c0_225, %c0_226, %c0_227] : memref<10x49x32xf32, #tpu.memory_space<vmem>>, vector<10x49x32xf32>
    %284 = vector.shape_cast %282 : vector<49x32xf32> to vector<1x49x32xf32>
    %285 = vector.broadcast %284 : vector<1x49x32xf32> to vector<10x49x32xf32>
    %286 = arith.mulf %283, %285 : vector<10x49x32xf32>
    %cst_228 = arith.constant dense<0.000000e+00> : vector<10x32xf32>
    %287 = vector.multi_reduction <add>, %286, %cst_228 [1] : vector<10x49x32xf32> to vector<10x32xf32>
    %c0_229 = arith.constant 0 : index
    %c0_230 = arith.constant 0 : index
    %288 = vector.load %arg7[%c0_229, %c0_230] : memref<10x1xf32, #tpu.memory_space<vmem>>, vector<10x1xf32>
    %cst_231 = arith.constant dense<0.000000e+00> : vector<10xf32>
    %289 = vector.multi_reduction <add>, %287, %cst_231 [1] : vector<10x32xf32> to vector<10xf32>
    %290 = vector.shape_cast %289 : vector<10xf32> to vector<10x1xf32>
    %291 = arith.addf %288, %290 : vector<10x1xf32>
    %292 = arith.index_cast %3 : i32 to index
    %c0_232 = arith.constant 0 : index
    %c0_233 = arith.constant 0 : index
    %293 = vector.load %arg8[%292, %c0_232, %c0_233] : memref<1x10x1xf32, #tpu.memory_space<vmem>>, vector<1x10x1xf32>
    %294 = vector.shape_cast %293 : vector<1x10x1xf32> to vector<10x1xf32>
    %295 = vector.shape_cast %291 : vector<10x1xf32> to vector<1x10x1xf32>
    tpu.vector_store %arg8[%292, %c0_232, %c0_233], %295 {strides = array<i32>} : memref<1x10x1xf32, #tpu.memory_space<vmem>>, vector<1x10x1xf32>,
    %c1_i32_234 = arith.constant 1 : i32
    return
  }
  func.func @transform_0(%arg0: i32) -> (i32, i32, i32) {
    %c0_i32 = arith.constant 0 : i32
    %c0_i32_0 = arith.constant 0 : i32
    %c0_i32_1 = arith.constant 0 : i32
    return %arg0, %c0_i32, %c0_i32_0 : i32, i32, i32
  }
  func.func @transform_1(%arg0: i32) -> (i32, i32) {
    %c0_i32 = arith.constant 0 : i32
    %c0_i32_0 = arith.constant 0 : i32
    %c0_i32_1 = arith.constant 0 : i32
    return %c0_i32, %c0_i32_0 : i32, i32
  }
  func.func @transform_2(%arg0: i32) -> (i32, i32) {
    %c0_i32 = arith.constant 0 : i32
    %c0_i32_0 = arith.constant 0 : i32
    %c0_i32_1 = arith.constant 0 : i32
    return %c0_i32, %c0_i32_0 : i32, i32
  }
  func.func @transform_3(%arg0: i32) -> (i32, i32, i32) {
    %c0_i32 = arith.constant 0 : i32
    %c0_i32_0 = arith.constant 0 : i32
    %c0_i32_1 = arith.constant 0 : i32
    %c0_i32_2 = arith.constant 0 : i32
    return %c0_i32, %c0_i32_0, %c0_i32_1 : i32, i32, i32
  }
  func.func @transform_4(%arg0: i32) -> (i32, i32) {
    %c0_i32 = arith.constant 0 : i32
    %c0_i32_0 = arith.constant 0 : i32
    %c0_i32_1 = arith.constant 0 : i32
    return %c0_i32, %c0_i32_0 : i32, i32
  }
  func.func @transform_5(%arg0: i32) -> (i32, i32, i32) {
    %c0_i32 = arith.constant 0 : i32
    %c0_i32_0 = arith.constant 0 : i32
    %c0_i32_1 = arith.constant 0 : i32
    %c0_i32_2 = arith.constant 0 : i32
    return %c0_i32, %c0_i32_0, %c0_i32_1 : i32, i32, i32
  }
  func.func @transform_6(%arg0: i32) -> (i32, i32) {
    %c0_i32 = arith.constant 0 : i32
    %c0_i32_0 = arith.constant 0 : i32
    %c0_i32_1 = arith.constant 0 : i32
    return %c0_i32, %c0_i32_0 : i32, i32
  }
  func.func @transform_7(%arg0: i32) -> (i32, i32, i32) {
    %c0_i32 = arith.constant 0 : i32
    %c0_i32_0 = arith.constant 0 : i32
    %c0_i32_1 = arith.constant 0 : i32
    return %arg0, %c0_i32, %c0_i32_0 : i32, i32, i32
  }
}

</mosaic_0001>

<llo_original>
// kernel: cnn_forward.1
$region0: #{cnn_forward.1}
  #allocation0 [shape = 'u32[]', space=smem, size = 0x4, offset = 0x4, fixed_abs, tag = 'smem constant byte address 0x4 - core index']
  #allocation1 [shape = 'u32[144,128]{1,0:T(1,128)}', space=vmem, size = 0x12000, scoped, tag = 'internal scratch']
  #allocation2 [shape = 'f32[784,16]{1,0:T(8,128)}', space=vmem, size = 0x62000, scoped, tag = 'scratch operand']
  #allocation3 [shape = 'f32[392,16]{1,0:T(8,128)}', space=vmem, size = 0x31000, scoped, tag = 'scratch operand']
  #allocation4 [shape = 'f32[328,80]{1,0:T(8,128)}', space=vmem, size = 0x29000, scoped, tag = 'scratch operand']
  #allocation5 [shape = 'f32[252,32]{1,0:T(8,128)}', space=vmem, size = 0x20000, scoped, tag = 'scratch operand']
  #allocation6 [shape = 'f32[126,32]{1,0:T(8,128)}', space=vmem, size = 0x10000, scoped, tag = 'scratch operand']
  #allocation7 [shape = 'f32[49,32]{1,0:T(8,128)}', space=vmem, size = 0x7000, scoped, tag = 'scratch operand']
  %s0 = inlined_call_operand.vmem [shape: bf16[2,784,32], index: 0, kind: input, shape index: {}]
  %s1 = inlined_call_operand.vmem [shape: bf16[32,16], index: 1, kind: input, shape index: {}]
  %s2 = inlined_call_operand.vmem [shape: f32[1,16], index: 2, kind: input, shape index: {}]
  %s3 = inlined_call_operand.vmem [shape: bf16[5,80,32], index: 3, kind: input, shape index: {}]
  %s4 = inlined_call_operand.vmem [shape: f32[1,32], index: 4, kind: input, shape index: {}]
  %s5 = inlined_call_operand.vmem [shape: f32[10,49,32], index: 5, kind: input, shape index: {}]
  %s6 = inlined_call_operand.vmem [shape: f32[10,1], index: 6, kind: input, shape index: {}]
  %s7 = inlined_call_operand.vmem [shape: f32[2,10,1], index: 7, kind: output, shape index: {}]
  %s8 = sld [smem:[#allocation0]]
  $region61: #{cnn_forward.1} parent=0
    _
  %s10 = ssub.s32 1, %s8
  %s11 = scalar_select 0, %s10, %s8
  loop: start=0, step=1, limit=4
  $region2: #{cnn_forward.1} parent=0 // loop_pre_header
    _
  $region3: #{cnn_forward.1} parent=0 // loop_header
    %s13 = sphi 0, %s17
    %p14 = scmp.ge.s32.totalorder %s13, 4
    %s23 = sphi 0, %s25
    %s26 = sphi 0, %s23
    %s27 = sphi 0, %s26
    %s43 = sphi 0, %s27
    %s47 = sphi 0, %s47
    %s49 = sphi 0, %s47
    %s50 = sphi 0, %s49
    %s64 = sphi 0, %s50
    %s68 = sphi 0, %s68
    %s70 = sphi 0, %s68
    %s71 = sphi 0, %s70
    %s85 = sphi 0, %s71
    %s89 = sphi 0, %s89
    %s91 = sphi 0, %s89
    %s92 = sphi 0, %s91
    %s106 = sphi 0, %s92
    %s110 = sphi 0, %s110
    %s112 = sphi 0, %s110
    %s113 = sphi 0, %s112
    %s127 = sphi 0, %s113
    %s131 = sphi 0, %s131
    %s133 = sphi 0, %s131
    %s134 = sphi 0, %s133
    %s148 = sphi 0, %s134
    %s152 = sphi 0, %s152
    %s154 = sphi 0, %s152
    %s155 = sphi 0, %s154
    %s169 = sphi 0, %s155
    %s175 = sphi 0, %s177
    %s178 = sphi 0, %s175
    %s179 = sphi 0, %s178
    %s195 = sphi 0, %s179
  $region4: #{cnn_forward.1} parent=0 // loop_header_branch
    %16 = sbr.rel (%p14) target = $region8
  $region5: #{cnn_forward.1} parent=0 // loop_body
    %s18 = ssub.s32 %s13, 1
    %s19 = ssub.s32 %s13, 2
    %s20 = sadd.s32 %s13, 1
    %s21 = ssub.s32 %s13, %s20
    %p22 = scmp.eq.s32.totalorder %s21, 0
    %s24 = sadd.s32 %s23, 1
    %s25 = scalar_select %p22, %s23, %s24
    %p28 = pneg %p22
    %p29 = scmp.eq.s32.totalorder %s13, 1
    %p30 = por %p28, %p29
    %p31 = scmp.ne.s32.totalorder %s23, %s26
    %p32 = scmp.eq.s32.totalorder %s13, 0
    %p33 = por %p31, %p32
    %p34 = scmp.ne.s32.totalorder %s23, %s26
    %p35 = scmp.eq.s32.totalorder %s18, 1
    %p36 = por %p34, %p35
    %p37 = scmp.ne.s32.totalorder %s26, %s27
    %p38 = scmp.eq.s32.totalorder %s18, 0
    %p39 = por %p37, %p38
    %p40 = scmp.ne.s32.totalorder %s26, %s27
    %p41 = scmp.eq.s32.totalorder %s19, 1
    %p42 = por %p40, %p41
    %p44 = scmp.ne.s32.totalorder %s27, %s43
    %p45 = scmp.eq.s32.totalorder %s19, 0
    %p46 = por %p44, %p45
    %s48 = sadd.s32 %s47, 1
    %p51 = scmp.eq.s32.totalorder %s13, 1
    %p52 = scmp.ne.s32.totalorder %s47, %s49
    %p53 = scmp.eq.s32.totalorder %s13, 0
    %p54 = por %p52, %p53
    %p55 = scmp.ne.s32.totalorder %s47, %s49
    %p56 = scmp.eq.s32.totalorder %s18, 1
    %p57 = por %p55, %p56
    %p58 = scmp.ne.s32.totalorder %s49, %s50
    %p59 = scmp.eq.s32.totalorder %s18, 0
    %p60 = por %p58, %p59
    %p61 = scmp.ne.s32.totalorder %s49, %s50
    %p62 = scmp.eq.s32.totalorder %s19, 1
    %p63 = por %p61, %p62
    %p65 = scmp.ne.s32.totalorder %s50, %s64
    %p66 = scmp.eq.s32.totalorder %s19, 0
    %p67 = por %p65, %p66
    %s69 = sadd.s32 %s68, 1
    %p72 = scmp.eq.s32.totalorder %s13, 1
    %p73 = scmp.ne.s32.totalorder %s68, %s70
    %p74 = scmp.eq.s32.totalorder %s13, 0
    %p75 = por %p73, %p74
    %p76 = scmp.ne.s32.totalorder %s68, %s70
    %p77 = scmp.eq.s32.totalorder %s18, 1
    %p78 = por %p76, %p77
    %p79 = scmp.ne.s32.totalorder %s70, %s71
    %p80 = scmp.eq.s32.totalorder %s18, 0
    %p81 = por %p79, %p80
    %p82 = scmp.ne.s32.totalorder %s70, %s71
    %p83 = scmp.eq.s32.totalorder %s19, 1
    %p84 = por %p82, %p83
    %p86 = scmp.ne.s32.totalorder %s71, %s85
    %p87 = scmp.eq.s32.totalorder %s19, 0
    %p88 = por %p86, %p87
    %s90 = sadd.s32 %s89, 1
    %p93 = scmp.eq.s32.totalorder %s13, 1
    %p94 = scmp.ne.s32.totalorder %s89, %s91
    %p95 = scmp.eq.s32.totalorder %s13, 0
    %p96 = por %p94, %p95
    %p97 = scmp.ne.s32.totalorder %s89, %s91
    %p98 = scmp.eq.s32.totalorder %s18, 1
    %p99 = por %p97, %p98
    %p100 = scmp.ne.s32.totalorder %s91, %s92
    %p101 = scmp.eq.s32.totalorder %s18, 0
    %p102 = por %p100, %p101
    %p103 = scmp.ne.s32.totalorder %s91, %s92
    %p104 = scmp.eq.s32.totalorder %s19, 1
    %p105 = por %p103, %p104
    %p107 = scmp.ne.s32.totalorder %s92, %s106
    %p108 = scmp.eq.s32.totalorder %s19, 0
    %p109 = por %p107, %p108
    %s111 = sadd.s32 %s110, 1
    %p114 = scmp.eq.s32.totalorder %s13, 1
    %p115 = scmp.ne.s32.totalorder %s110, %s112
    %p116 = scmp.eq.s32.totalorder %s13, 0
    %p117 = por %p115, %p116
    %p118 = scmp.ne.s32.totalorder %s110, %s112
    %p119 = scmp.eq.s32.totalorder %s18, 1
    %p120 = por %p118, %p119
    %p121 = scmp.ne.s32.totalorder %s112, %s113
    %p122 = scmp.eq.s32.totalorder %s18, 0
    %p123 = por %p121, %p122
    %p124 = scmp.ne.s32.totalorder %s112, %s113
    %p125 = scmp.eq.s32.totalorder %s19, 1
    %p126 = por %p124, %p125
    %p128 = scmp.ne.s32.totalorder %s113, %s127
    %p129 = scmp.eq.s32.totalorder %s19, 0
    %p130 = por %p128, %p129
    %s132 = sadd.s32 %s131, 1
    %p135 = scmp.eq.s32.totalorder %s13, 1
    %p136 = scmp.ne.s32.totalorder %s131, %s133
    %p137 = scmp.eq.s32.totalorder %s13, 0
    %p138 = por %p136, %p137
    %p139 = scmp.ne.s32.totalorder %s131, %s133
    %p140 = scmp.eq.s32.totalorder %s18, 1
    %p141 = por %p139, %p140
    %p142 = scmp.ne.s32.totalorder %s133, %s134
    %p143 = scmp.eq.s32.totalorder %s18, 0
    %p144 = por %p142, %p143
    %p145 = scmp.ne.s32.totalorder %s133, %s134
    %p146 = scmp.eq.s32.totalorder %s19, 1
    %p147 = por %p145, %p146
    %p149 = scmp.ne.s32.totalorder %s134, %s148
    %p150 = scmp.eq.s32.totalorder %s19, 0
    %p151 = por %p149, %p150
    %s153 = sadd.s32 %s152, 1
    %p156 = scmp.eq.s32.totalorder %s13, 1
    %p157 = scmp.ne.s32.totalorder %s152, %s154
    %p158 = scmp.eq.s32.totalorder %s13, 0
    %p159 = por %p157, %p158
    %p160 = scmp.ne.s32.totalorder %s152, %s154
    %p161 = scmp.eq.s32.totalorder %s18, 1
    %p162 = por %p160, %p161
    %p163 = scmp.ne.s32.totalorder %s154, %s155
    %p164 = scmp.eq.s32.totalorder %s18, 0
    %p165 = por %p163, %p164
    %p166 = scmp.ne.s32.totalorder %s154, %s155
    %p167 = scmp.eq.s32.totalorder %s19, 1
    %p168 = por %p166, %p167
    %p170 = scmp.ne.s32.totalorder %s155, %s169
    %p171 = scmp.eq.s32.totalorder %s19, 0
    %p172 = por %p170, %p171
    %s173 = ssub.s32 %s13, %s20
    %p174 = scmp.eq.s32.totalorder %s173, 0
    %s176 = sadd.s32 %s175, 1
    %s177 = scalar_select %p174, %s175, %s176
    %p180 = pneg %p174
    %p181 = scmp.eq.s32.totalorder %s13, 1
    %p182 = por %p180, %p181
    %p183 = scmp.ne.s32.totalorder %s175, %s178
    %p184 = scmp.eq.s32.totalorder %s13, 0
    %p185 = por %p183, %p184
    %p186 = scmp.ne.s32.totalorder %s175, %s178
    %p187 = scmp.eq.s32.totalorder %s18, 1
    %p188 = por %p186, %p187
    %p189 = scmp.ne.s32.totalorder %s178, %s179
    %p190 = scmp.eq.s32.totalorder %s18, 0
    %p191 = por %p189, %p190
    %p192 = scmp.ne.s32.totalorder %s178, %s179
    %p193 = scmp.eq.s32.totalorder %s19, 1
    %p194 = por %p192, %p193
    %p196 = scmp.ne.s32.totalorder %s179, %s195
    %p197 = scmp.eq.s32.totalorder %s19, 0
    %p198 = por %p196, %p197
    %p199 = scmp.le.s32.totalorder 1, %s13
    %p200 = scmp.lt.s32.totalorder %s13, 3
    %p201 = pnand %p199, %p200
    %p202 = pneg %p201
    // Predicated region
    $region9: #{cnn_forward.1} parent=5 // pred_check
      _
    $region10: #{cnn_forward.1} parent=5 // pred_check_branch
      %204 = sbr.rel (%p201) target = $region12
    $region11: #{cnn_forward.1} parent=5 // pred_region
      %s205 = ssub.s32 %s13, 1
      // Predicated region
      $region13: #{cnn_forward.1} parent=11 // pred_check
        %p206 = pneg %p60
      $region14: #{cnn_forward.1} parent=11 // pred_check_branch
        %208 = sbr.rel (%p206) target = $region16
      $region15: #{cnn_forward.1} parent=11 // pred_region
        _
      $region16: #{cnn_forward.1} parent=11 // pred_fallthru
        _
      // Predicated region
      $region17: #{cnn_forward.1} parent=11 // pred_check
        %p209 = pneg %p81
      $region18: #{cnn_forward.1} parent=11 // pred_check_branch
        %211 = sbr.rel (%p209) target = $region20
      $region19: #{cnn_forward.1} parent=11 // pred_region
        _
      $region20: #{cnn_forward.1} parent=11 // pred_fallthru
        _
      // Predicated region
      $region21: #{cnn_forward.1} parent=11 // pred_check
        %p212 = pneg %p102
      $region22: #{cnn_forward.1} parent=11 // pred_check_branch
        %214 = sbr.rel (%p212) target = $region24
      $region23: #{cnn_forward.1} parent=11 // pred_region
        _
      $region24: #{cnn_forward.1} parent=11 // pred_fallthru
        _
      // Predicated region
      $region25: #{cnn_forward.1} parent=11 // pred_check
        %p215 = pneg %p123
      $region26: #{cnn_forward.1} parent=11 // pred_check_branch
        %217 = sbr.rel (%p215) target = $region28
      $region27: #{cnn_forward.1} parent=11 // pred_region
        _
      $region28: #{cnn_forward.1} parent=11 // pred_fallthru
        _
      // Predicated region
      $region29: #{cnn_forward.1} parent=11 // pred_check
        %p218 = pneg %p144
      $region30: #{cnn_forward.1} parent=11 // pred_check_branch
        %220 = sbr.rel (%p218) target = $region32
      $region31: #{cnn_forward.1} parent=11 // pred_region
        _
      $region32: #{cnn_forward.1} parent=11 // pred_fallthru
        _
      // Predicated region
      $region33: #{cnn_forward.1} parent=11 // pred_check
        %p221 = pneg %p165
      $region34: #{cnn_forward.1} parent=11 // pred_check_branch
        %223 = sbr.rel (%p221) target = $region36
      $region35: #{cnn_forward.1} parent=11 // pred_region
        _
      $region36: #{cnn_forward.1} parent=11 // pred_fallthru
        _
    $region12: #{cnn_forward.1} parent=5 // pred_fallthru
      _
    %p224 = scmp.lt.s32.totalorder %s13, 2
    // Predicated region
    $region37: #{cnn_forward.1} parent=5 // pred_check
      %p225 = pneg %p224
    $region38: #{cnn_forward.1} parent=5 // pred_check_branch
      %227 = sbr.rel (%p225) target = $region40
    $region39: #{cnn_forward.1} parent=5 // pred_region
      // Predicated region
      $region41: #{cnn_forward.1} parent=39 // pred_check
        %p228 = pneg %p33
      $region42: #{cnn_forward.1} parent=39 // pred_check_branch
        %230 = sbr.rel (%p228) target = $region44
      $region43: #{cnn_forward.1} parent=39 // pred_region
        %p231 = scmp.lt.s32.totalorder %s13, 1
        %s232 = scalar_select %p231, %s13, 1
        %s233 = smul.addr %s232, 98
        %s234 = smul.addr %s233, 4
        %s235 = scalar_lea.vmem %s0, %s234
      $region44: #{cnn_forward.1} parent=39 // pred_fallthru
        _
    $region40: #{cnn_forward.1} parent=5 // pred_fallthru
      _
    %p236 = scmp.le.s32.totalorder 1, %s13
    %p237 = scmp.lt.s32.totalorder %s13, 3
    %p238 = pnand %p236, %p237
    %p239 = pneg %p238
    // Predicated region
    $region45: #{cnn_forward.1} parent=5 // pred_check
      _
    $region46: #{cnn_forward.1} parent=5 // pred_check_branch
      %241 = sbr.rel (%p238) target = $region48
    $region47: #{cnn_forward.1} parent=5 // pred_region
      %s242 = ssub.s32 %s13, 1
      %p243 = scmp.lt.s32.totalorder %s18, 1
      %s244 = scalar_select %p243, %s18, 1
      %s245 = smul.addr %s244, 98
      %s246 = smul.addr %s245, 4
      %s247 = scalar_lea.vmem %s0, %s246
      %p248 = pneg %p39
      %p249 = pneg %p36
      %p250 = pneg %p60
      %p251 = pneg %p57
      %p252 = pneg %p81
      %p253 = pneg %p78
      %p254 = pneg %p102
      %p255 = pneg %p99
      %p256 = pneg %p123
      %p257 = pneg %p120
      %p258 = pneg %p144
      %p259 = pneg %p141
      %p260 = pneg %p165
      %p261 = pneg %p162
      %p262 = pneg %p191
      %p263 = pneg %p188
      %p264 = scmp.lt.s32.totalorder %s18, 1
      %s265 = scalar_select %p264, %s18, 1
      %s266 = smul.addr %s265, 2
      %s267 = smul.addr %s266, 8
      %s268 = scalar_lea.vmem %s7, %s267
      %p269 = scmp.lt.s32.totalorder %s18, 1
      %s270 = scalar_select %p269, %s18, 1
      %s271 = smul.addr %s270, 98
      %s272 = smul.addr %s271, 4
      %s273 = scalar_lea.vmem %s0, %s272
      %p274 = scmp.lt.s32.totalorder %s18, 1
      %s275 = scalar_select %p274, %s18, 1
      %s276 = smul.addr %s275, 2
      %s277 = smul.addr %s276, 8
      %s278 = scalar_lea.vmem %s7, %s277
      %vm280 = vcmask 654336
      %281 = vst.msk [vmem:[#allocation4] sm:$0xff] %vm280, 0.0
      %282 = vst.msk [vmem:[#allocation4 + $0x8] sm:$0xff] %vm280, 0.0
      %283 = vst.msk [vmem:[#allocation4 + $0x10] sm:$0xff] %vm280, 0.0
      %284 = vst.msk [vmem:[#allocation4 + $0x18] sm:$0xff] %vm280, 0.0
      %285 = vst.msk [vmem:[#allocation4 + $0x20] sm:$0xff] %vm280, 0.0
      %286 = vst.msk [vmem:[#allocation4 + $0x28] sm:$0xff] %vm280, 0.0
      %287 = vst.msk [vmem:[#allocation4 + $0x30] sm:$0xff] %vm280, 0.0
      %288 = vst.msk [vmem:[#allocation4 + $0x38] sm:$0xff] %vm280, 0.0
      %289 = vst.msk [vmem:[#allocation4 + $0x40] sm:$0xff] %vm280, 0.0
      %290 = vst.msk [vmem:[#allocation4 + $0x48] sm:$0xff] %vm280, 0.0
      %291 = vst.msk [vmem:[#allocation4 + $0x50] sm:$0xff] %vm280, 0.0
      %292 = vst.msk [vmem:[#allocation4 + $0x58] sm:$0xff] %vm280, 0.0
      %293 = vst.msk [vmem:[#allocation4 + $0x60] sm:$0xff] %vm280, 0.0
      %294 = vst.msk [vmem:[#allocation4 + $0x68] sm:$0xff] %vm280, 0.0
      %295 = vst.msk [vmem:[#allocation4 + $0x70] sm:$0xff] %vm280, 0.0
      %296 = vst.msk [vmem:[#allocation4 + $0x78] sm:$0xff] %vm280, 0.0
      %297 = vst.msk [vmem:[#allocation4 + $0x80] sm:$0xff] %vm280, 0.0
      %298 = vst.msk [vmem:[#allocation4 + $0x88] sm:$0xff] %vm280, 0.0
      %299 = vst.msk [vmem:[#allocation4 + $0x90] sm:$0xff] %vm280, 0.0
      %300 = vst.msk [vmem:[#allocation4 + $0x98] sm:$0xff] %vm280, 0.0
      %301 = vst.msk [vmem:[#allocation4 + $0xa0] sm:$0xff] %vm280, 0.0
      %302 = vst.msk [vmem:[#allocation4 + $0xa8] sm:$0xff] %vm280, 0.0
      %303 = vst.msk [vmem:[#allocation4 + $0xb0] sm:$0xff] %vm280, 0.0
      %304 = vst.msk [vmem:[#allocation4 + $0xb8] sm:$0xff] %vm280, 0.0
      %305 = vst.msk [vmem:[#allocation4 + $0xc0] sm:$0xff] %vm280, 0.0
      %306 = vst.msk [vmem:[#allocation4 + $0xc8] sm:$0xff] %vm280, 0.0
      %307 = vst.msk [vmem:[#allocation4 + $0xd0] sm:$0xff] %vm280, 0.0
      %308 = vst.msk [vmem:[#allocation4 + $0xd8] sm:$0xff] %vm280, 0.0
      %309 = vst.msk [vmem:[#allocation4 + $0xe0] sm:$0xff] %vm280, 0.0
      %310 = vst.msk [vmem:[#allocation4 + $0xe8] sm:$0xff] %vm280, 0.0
      %311 = vst.msk [vmem:[#allocation4 + $0xf0] sm:$0xff] %vm280, 0.0
      %312 = vst.msk [vmem:[#allocation4 + $0xf8] sm:$0xff] %vm280, 0.0
      %313 = vst.msk [vmem:[#allocation4 + $0x100] sm:$0xff] %vm280, 0.0
      %314 = vst.msk [vmem:[#allocation4 + $0x108] sm:$0xff] %vm280, 0.0
      %315 = vst.msk [vmem:[#allocation4 + $0x110] sm:$0xff] %vm280, 0.0
      %316 = vst.msk [vmem:[#allocation4 + $0x118] sm:$0xff] %vm280, 0.0
      %317 = vst.msk [vmem:[#allocation4 + $0x120] sm:$0xff] %vm280, 0.0
      %318 = vst.msk [vmem:[#allocation4 + $0x128] sm:$0xff] %vm280, 0.0
      %319 = vst.msk [vmem:[#allocation4 + $0x130] sm:$0xff] %vm280, 0.0
      %320 = vst.msk [vmem:[#allocation4 + $0x138] sm:$0xff] %vm280, 0.0
      %321 = vst.msk [vmem:[#allocation4 + $0x140] sm:$0xff] %vm280, 0.0
      %v322 = vld [vmem:[%s273] sm:$0xf]
      %v323 = vld [vmem:[%s273 + $0x4] sm:$0xf]
      %v324 = vld [vmem:[%s273 + $0x8] sm:$0xf]
      %v325 = vld [vmem:[%s273 + $0xc] sm:$0xf]
      %v326 = vld [vmem:[%s273 + $0x10] sm:$0xf]
      %v327 = vld [vmem:[%s273 + $0x14] sm:$0xf]
      %v328 = vld [vmem:[%s273 + $0x18] sm:$0xf]
      %v329 = vld [vmem:[%s273 + $0x1c] sm:$0xf]
      %v330 = vld [vmem:[%s273 + $0x20] sm:$0xf]
      %v331 = vld [vmem:[%s273 + $0x24] sm:$0xf]
      %v332 = vld [vmem:[%s273 + $0x28] sm:$0xf]
      %v333 = vld [vmem:[%s273 + $0x2c] sm:$0xf]
      %v334 = vld [vmem:[%s273 + $0x30] sm:$0xf]
      %v335 = vld [vmem:[%s273 + $0x34] sm:$0xf]
      %v336 = vld [vmem:[%s273 + $0x38] sm:$0xf]
      %v337 = vld [vmem:[%s273 + $0x3c] sm:$0xf]
      %v338 = vld [vmem:[%s273 + $0x40] sm:$0xf]
      %v339 = vld [vmem:[%s273 + $0x44] sm:$0xf]
      %v340 = vld [vmem:[%s273 + $0x48] sm:$0xf]
      %v341 = vld [vmem:[%s273 + $0x4c] sm:$0xf]
      %v342 = vld [vmem:[%s273 + $0x50] sm:$0xf]
      %v343 = vld [vmem:[%s273 + $0x54] sm:$0xf]
      %v344 = vld [vmem:[%s273 + $0x58] sm:$0xf]
      %v345 = vld [vmem:[%s273 + $0x5c] sm:$0xf]
      %v346 = vld [vmem:[%s273 + $0x60] sm:$0xf]
      %v347 = vld [vmem:[%s273 + $0x64] sm:$0xf]
      %v348 = vld [vmem:[%s273 + $0x68] sm:$0xf]
      %v349 = vld [vmem:[%s273 + $0x6c] sm:$0xf]
      %v350 = vld [vmem:[%s273 + $0x70] sm:$0xf]
      %v351 = vld [vmem:[%s273 + $0x74] sm:$0xf]
      %v352 = vld [vmem:[%s273 + $0x78] sm:$0xf]
      %v353 = vld [vmem:[%s273 + $0x7c] sm:$0xf]
      %v354 = vld [vmem:[%s273 + $0x80] sm:$0xf]
      %v355 = vld [vmem:[%s273 + $0x84] sm:$0xf]
      %v356 = vld [vmem:[%s273 + $0x88] sm:$0xf]
      %v357 = vld [vmem:[%s273 + $0x8c] sm:$0xf]
      %v358 = vld [vmem:[%s273 + $0x90] sm:$0xf]
      %v359 = vld [vmem:[%s273 + $0x94] sm:$0xf]
      %v360 = vld [vmem:[%s273 + $0x98] sm:$0xf]
      %v361 = vld [vmem:[%s273 + $0x9c] sm:$0xf]
      %v362 = vld [vmem:[%s273 + $0xa0] sm:$0xf]
      %v363 = vld [vmem:[%s273 + $0xa4] sm:$0xf]
      %v364 = vld [vmem:[%s273 + $0xa8] sm:$0xf]
      %v365 = vld [vmem:[%s273 + $0xac] sm:$0xf]
      %v366 = vld [vmem:[%s273 + $0xb0] sm:$0xf]
      %v367 = vld [vmem:[%s273 + $0xb4] sm:$0xf]
      %v368 = vld [vmem:[%s273 + $0xb8] sm:$0xf]
      %v369 = vld [vmem:[%s273 + $0xbc] sm:$0xf]
      %v370 = vld [vmem:[%s273 + $0xc0] sm:$0xf]
      %v371 = vld [vmem:[%s273 + $0xc4] sm:$0xf]
      %v372 = vld [vmem:[%s273 + $0xc8] sm:$0xf]
      %v373 = vld [vmem:[%s273 + $0xcc] sm:$0xf]
      %v374 = vld [vmem:[%s273 + $0xd0] sm:$0xf]
      %v375 = vld [vmem:[%s273 + $0xd4] sm:$0xf]
      %v376 = vld [vmem:[%s273 + $0xd8] sm:$0xf]
      %v377 = vld [vmem:[%s273 + $0xdc] sm:$0xf]
      %v378 = vld [vmem:[%s273 + $0xe0] sm:$0xf]
      %v379 = vld [vmem:[%s273 + $0xe4] sm:$0xf]
      %v380 = vld [vmem:[%s273 + $0xe8] sm:$0xf]
      %v381 = vld [vmem:[%s273 + $0xec] sm:$0xf]
      %v382 = vld [vmem:[%s273 + $0xf0] sm:$0xf]
      %v383 = vld [vmem:[%s273 + $0xf4] sm:$0xf]
      %v384 = vld [vmem:[%s273 + $0xf8] sm:$0xf]
      %v385 = vld [vmem:[%s273 + $0xfc] sm:$0xf]
      %v386 = vld [vmem:[%s273 + $0x100] sm:$0xf]
      %v387 = vld [vmem:[%s273 + $0x104] sm:$0xf]
      %v388 = vld [vmem:[%s273 + $0x108] sm:$0xf]
      %v389 = vld [vmem:[%s273 + $0x10c] sm:$0xf]
      %v390 = vld [vmem:[%s273 + $0x110] sm:$0xf]
      %v391 = vld [vmem:[%s273 + $0x114] sm:$0xf]
      %v392 = vld [vmem:[%s273 + $0x118] sm:$0xf]
      %v393 = vld [vmem:[%s273 + $0x11c] sm:$0xf]
      %v394 = vld [vmem:[%s273 + $0x120] sm:$0xf]
      %v395 = vld [vmem:[%s273 + $0x124] sm:$0xf]
      %v396 = vld [vmem:[%s273 + $0x128] sm:$0xf]
      %v397 = vld [vmem:[%s273 + $0x12c] sm:$0xf]
      %v398 = vld [vmem:[%s273 + $0x130] sm:$0xf]
      %v399 = vld [vmem:[%s273 + $0x134] sm:$0xf]
      %v400 = vld [vmem:[%s273 + $0x138] sm:$0xf]
      %v401 = vld [vmem:[%s273 + $0x13c] sm:$0xf]
      %v402 = vld [vmem:[%s273 + $0x140] sm:$0xf]
      %v403 = vld [vmem:[%s273 + $0x144] sm:$0xf]
      %v404 = vld [vmem:[%s273 + $0x148] sm:$0xf]
      %v405 = vld [vmem:[%s273 + $0x14c] sm:$0xf]
      %v406 = vld [vmem:[%s273 + $0x150] sm:$0xf]
      %v407 = vld [vmem:[%s273 + $0x154] sm:$0xf]
      %v408 = vld [vmem:[%s273 + $0x158] sm:$0xf]
      %v409 = vld [vmem:[%s273 + $0x15c] sm:$0xf]
      %v410 = vld [vmem:[%s273 + $0x160] sm:$0xf]
      %v411 = vld [vmem:[%s273 + $0x164] sm:$0xf]
      %v412 = vld [vmem:[%s273 + $0x168] sm:$0xf]
      %v413 = vld [vmem:[%s273 + $0x16c] sm:$0xf]
      %v414 = vld [vmem:[%s273 + $0x170] sm:$0xf]
      %v415 = vld [vmem:[%s273 + $0x174] sm:$0xf]
      %v416 = vld [vmem:[%s273 + $0x178] sm:$0xf]
      %v417 = vld [vmem:[%s273 + $0x17c] sm:$0xf]
      %v418 = vld [vmem:[%s273 + $0x180] sm:$0xf]
      %v419 = vld [vmem:[%s273 + $0x184] sm:$0xf]
      %v420 = vld [vmem:[%s1] sm:$0xf]
      %v421 = vld [vmem:[%s1 + $0x4] sm:$0xf]
      %v422 = vld [vmem:[%s1 + $0x8] sm:$0xf]
      %v423 = vld [vmem:[%s1 + $0xc] sm:$0xf]
      %v522 = vunpack.c.l.b16 %v322
      %v523 = vunpack.c.l.b16 %v323
      %v524 = vunpack.c.l.b16 %v324
      %v525 = vunpack.c.l.b16 %v325
      %v526 = vunpack.c.l.b16 %v326
      %v527 = vunpack.c.l.b16 %v327
      %v528 = vunpack.c.l.b16 %v328
      %v529 = vunpack.c.l.b16 %v329
      %v530 = vunpack.c.l.b16 %v330
      %v531 = vunpack.c.l.b16 %v331
      %v532 = vunpack.c.l.b16 %v332
      %v533 = vunpack.c.l.b16 %v333
      %v534 = vunpack.c.l.b16 %v334
      %v535 = vunpack.c.l.b16 %v335
      %v536 = vunpack.c.l.b16 %v336
      %v537 = vunpack.c.l.b16 %v337
      %v538 = vunpack.c.l.b16 %v338
      %v539 = vunpack.c.l.b16 %v339
      %v540 = vunpack.c.l.b16 %v340
      %v541 = vunpack.c.l.b16 %v341
      %v542 = vunpack.c.l.b16 %v342
      %v543 = vunpack.c.l.b16 %v343
      %v544 = vunpack.c.l.b16 %v344
      %v545 = vunpack.c.l.b16 %v345
      %v546 = vunpack.c.l.b16 %v346
      %v547 = vunpack.c.l.b16 %v347
      %v548 = vunpack.c.l.b16 %v348
      %v549 = vunpack.c.l.b16 %v349
      %v550 = vunpack.c.l.b16 %v350
      %v551 = vunpack.c.l.b16 %v351
      %v552 = vunpack.c.l.b16 %v352
      %v553 = vunpack.c.l.b16 %v353
      %v554 = vunpack.c.l.b16 %v354
      %v555 = vunpack.c.l.b16 %v355
      %v556 = vunpack.c.l.b16 %v356
      %v557 = vunpack.c.l.b16 %v357
      %v558 = vunpack.c.l.b16 %v358
      %v559 = vunpack.c.l.b16 %v359
      %v560 = vunpack.c.l.b16 %v360
      %v561 = vunpack.c.l.b16 %v361
      %v562 = vunpack.c.l.b16 %v362
      %v563 = vunpack.c.l.b16 %v363
      %v564 = vunpack.c.l.b16 %v364
      %v565 = vunpack.c.l.b16 %v365
      %v566 = vunpack.c.l.b16 %v366
      %v567 = vunpack.c.l.b16 %v367
      %v568 = vunpack.c.l.b16 %v368
      %v569 = vunpack.c.l.b16 %v369
      %v570 = vunpack.c.l.b16 %v370
      %v571 = vunpack.c.l.b16 %v371
      %v572 = vunpack.c.l.b16 %v372
      %v573 = vunpack.c.l.b16 %v373
      %v574 = vunpack.c.l.b16 %v374
      %v575 = vunpack.c.l.b16 %v375
      %v576 = vunpack.c.l.b16 %v376
      %v577 = vunpack.c.l.b16 %v377
      %v578 = vunpack.c.l.b16 %v378
      %v579 = vunpack.c.l.b16 %v379
      %v580 = vunpack.c.l.b16 %v380
      %v581 = vunpack.c.l.b16 %v381
      %v582 = vunpack.c.l.b16 %v382
      %v583 = vunpack.c.l.b16 %v383
      %v584 = vunpack.c.l.b16 %v384
      %v585 = vunpack.c.l.b16 %v385
      %v586 = vunpack.c.l.b16 %v386
      %v587 = vunpack.c.l.b16 %v387
      %v588 = vunpack.c.l.b16 %v388
      %v589 = vunpack.c.l.b16 %v389
      %v590 = vunpack.c.l.b16 %v390
      %v591 = vunpack.c.l.b16 %v391
      %v592 = vunpack.c.l.b16 %v392
      %v593 = vunpack.c.l.b16 %v393
      %v594 = vunpack.c.l.b16 %v394
      %v595 = vunpack.c.l.b16 %v395
      %v596 = vunpack.c.l.b16 %v396
      %v597 = vunpack.c.l.b16 %v397
      %v598 = vunpack.c.l.b16 %v398
      %v599 = vunpack.c.l.b16 %v399
      %v600 = vunpack.c.l.b16 %v400
      %v601 = vunpack.c.l.b16 %v401
      %v602 = vunpack.c.l.b16 %v402
      %v603 = vunpack.c.l.b16 %v403
      %v604 = vunpack.c.l.b16 %v404
      %v605 = vunpack.c.l.b16 %v405
      %v606 = vunpack.c.l.b16 %v406
      %v607 = vunpack.c.l.b16 %v407
      %v608 = vunpack.c.l.b16 %v408
      %v609 = vunpack.c.l.b16 %v409
      %v610 = vunpack.c.l.b16 %v410
      %v611 = vunpack.c.l.b16 %v411
      %v612 = vunpack.c.l.b16 %v412
      %v613 = vunpack.c.l.b16 %v413
      %v614 = vunpack.c.l.b16 %v414
      %v615 = vunpack.c.l.b16 %v415
      %v616 = vunpack.c.l.b16 %v416
      %v617 = vunpack.c.l.b16 %v417
      %v618 = vunpack.c.l.b16 %v418
      %v619 = vunpack.c.l.b16 %v419
      %v620 = vpack.c.b16 %v523, %v522
      %v621 = vpack.c.b16 %v525, %v524
      %v622 = vpack.c.b16 %v527, %v526
      %v623 = vpack.c.b16 %v529, %v528
      %v624 = vpack.c.b16 %v531, %v530
      %v625 = vpack.c.b16 %v533, %v532
      %v626 = vpack.c.b16 %v535, %v534
      %v627 = vpack.c.b16 %v537, %v536
      %v628 = vpack.c.b16 %v539, %v538
      %v629 = vpack.c.b16 %v541, %v540
      %v630 = vpack.c.b16 %v543, %v542
      %v631 = vpack.c.b16 %v545, %v544
      %v632 = vpack.c.b16 %v547, %v546
      %v633 = vpack.c.b16 %v549, %v548
      %v634 = vpack.c.b16 %v551, %v550
      %v635 = vpack.c.b16 %v553, %v552
      %v636 = vpack.c.b16 %v555, %v554
      %v637 = vpack.c.b16 %v557, %v556
      %v638 = vpack.c.b16 %v559, %v558
      %v639 = vpack.c.b16 %v561, %v560
      %v640 = vpack.c.b16 %v563, %v562
      %v641 = vpack.c.b16 %v565, %v564
      %v642 = vpack.c.b16 %v567, %v566
      %v643 = vpack.c.b16 %v569, %v568
      %v644 = vpack.c.b16 %v571, %v570
      %v645 = vpack.c.b16 %v573, %v572
      %v646 = vpack.c.b16 %v575, %v574
      %v647 = vpack.c.b16 %v577, %v576
      %v648 = vpack.c.b16 %v579, %v578
      %v649 = vpack.c.b16 %v581, %v580
      %v650 = vpack.c.b16 %v583, %v582
      %v651 = vpack.c.b16 %v585, %v584
      %v652 = vpack.c.b16 %v587, %v586
      %v653 = vpack.c.b16 %v589, %v588
      %v654 = vpack.c.b16 %v591, %v590
      %v655 = vpack.c.b16 %v593, %v592
      %v656 = vpack.c.b16 %v595, %v594
      %v657 = vpack.c.b16 %v597, %v596
      %v658 = vpack.c.b16 %v599, %v598
      %v659 = vpack.c.b16 %v601, %v600
      %v660 = vpack.c.b16 %v603, %v602
      %v661 = vpack.c.b16 %v605, %v604
      %v662 = vpack.c.b16 %v607, %v606
      %v663 = vpack.c.b16 %v609, %v608
      %v664 = vpack.c.b16 %v611, %v610
      %v665 = vpack.c.b16 %v613, %v612
      %v666 = vpack.c.b16 %v615, %v614
      %v667 = vpack.c.b16 %v617, %v616
      %v668 = vpack.c.b16 %v619, %v618
      %v673 = vunpack.c.l.b16 %v420
      %v674 = vunpack.c.l.b16 %v421
      %v675 = vunpack.c.l.b16 %v422
      %v676 = vunpack.c.l.b16 %v423
      %v677 = vpack.c.b16 %v674, %v673
      %v678 = vpack.c.b16 %v676, %v675
      %vm681 = vcmask 261120
      %v683 = vsel %vm681, %v620, 0
      %v686 = vsel %vm681, %v621, 0
      %v689 = vsel %vm681, %v622, 0
      %v692 = vsel %vm681, %v623, 0
      %v695 = vsel %vm681, %v624, 0
      %v698 = vsel %vm681, %v625, 0
      %v701 = vsel %vm681, %v626, 0
      %v704 = vsel %vm681, %v627, 0
      %v707 = vsel %vm681, %v628, 0
      %v710 = vsel %vm681, %v629, 0
      %v713 = vsel %vm681, %v630, 0
      %v716 = vsel %vm681, %v631, 0
      %v719 = vsel %vm681, %v632, 0
      %v722 = vsel %vm681, %v633, 0
      %v725 = vsel %vm681, %v634, 0
      %v728 = vsel %vm681, %v635, 0
      %v731 = vsel %vm681, %v636, 0
      %v734 = vsel %vm681, %v637, 0
      %v737 = vsel %vm681, %v638, 0
      %v740 = vsel %vm681, %v639, 0
      %v743 = vsel %vm681, %v640, 0
      %v746 = vsel %vm681, %v641, 0
      %v749 = vsel %vm681, %v642, 0
      %v752 = vsel %vm681, %v643, 0
      %v755 = vsel %vm681, %v644, 0
      %v758 = vsel %vm681, %v645, 0
      %v761 = vsel %vm681, %v646, 0
      %v764 = vsel %vm681, %v647, 0
      %v767 = vsel %vm681, %v648, 0
      %v770 = vsel %vm681, %v649, 0
      %v773 = vsel %vm681, %v650, 0
      %v776 = vsel %vm681, %v651, 0
      %v779 = vsel %vm681, %v652, 0
      %v782 = vsel %vm681, %v653, 0
      %v785 = vsel %vm681, %v654, 0
      %v788 = vsel %vm681, %v655, 0
      %v791 = vsel %vm681, %v656, 0
      %v794 = vsel %vm681, %v657, 0
      %v797 = vsel %vm681, %v658, 0
      %v800 = vsel %vm681, %v659, 0
      %v803 = vsel %vm681, %v660, 0
      %v806 = vsel %vm681, %v661, 0
      %v809 = vsel %vm681, %v662, 0
      %v812 = vsel %vm681, %v663, 0
      %v815 = vsel %vm681, %v664, 0
      %v818 = vsel %vm681, %v665, 0
      %v821 = vsel %vm681, %v666, 0
      %v824 = vsel %vm681, %v667, 0
      %v827 = vsel %vm681, %v668, 0
      %829 = vmatprep.subr.bf16.mxu0 0
      %830 = vmatpush1.bf16.msra.mxu0 %v677
      %831 = vmatprep.subr.bf16.mxu0 0
      %832 = vmatpush1.bf16.msra.mxu0 %v678
      %833 = vmatprep.subr.bf16.mxu0 0
      %834 = vmatpush1.bf16.msra.mxu0 0
      %835 = vmatprep.subr.bf16.mxu0 0
      %836 = vmatpush1.bf16.msra.mxu0 0
      %837 = vmatprep.subr.bf16.mxu0 0
      %838 = vmatpush1.bf16.msra.mxu0 0
      %839 = vmatprep.subr.bf16.mxu0 0
      %840 = vmatpush1.bf16.msra.mxu0 0
      %841 = vmatprep.subr.bf16.mxu0 0
      %842 = vmatpush1.bf16.msra.mxu0 0
      %843 = vmatprep.subr.bf16.mxu0 0
      %844 = vmatpush1.bf16.msra.mxu0 0
      %845 = vmatprep.subr.bf16.mxu0 0
      %846 = vmatpush1.bf16.msra.mxu0 0
      %847 = vmatprep.subr.bf16.mxu0 0
      %848 = vmatpush1.bf16.msra.mxu0 0
      %849 = vmatprep.subr.bf16.mxu0 0
      %850 = vmatpush1.bf16.msra.mxu0 0
      %851 = vmatprep.subr.bf16.mxu0 0
      %852 = vmatpush1.bf16.msra.mxu0 0
      %853 = vmatprep.subr.bf16.mxu0 0
      %854 = vmatpush1.bf16.msra.mxu0 0
      %855 = vmatprep.subr.bf16.mxu0 0
      %856 = vmatpush1.bf16.msra.mxu0 0
      %857 = vmatprep.subr.bf16.mxu0 0
      %858 = vmatpush1.bf16.msra.mxu0 0
      %859 = vmatprep.subr.bf16.mxu0 0
      %860 = vmatpush1.bf16.msra.mxu0 0
      %861 = vmatprep.mubr.bf16.mxu0 0
      %862 = vmatmul.mubr.bf16.gmra.mrb[0].mxu0 %v683
      %v863 = vpop.f32.mrb[0].mxu0
      %v864 = vadd.f32 0.0, %v863
      %v865 = vpop.f32.mrb[0].mxu0
      %v866 = vpop.f32.mrb[0].mxu0
      %v867 = vadd.f32 0.0, %v866
      %v868 = vpop.f32.mrb[0].mxu0
      %869 = vmatprep.mubr.bf16.mxu0 0
      %870 = vmatmul.mubr.bf16.gmra.mrb[0].mxu0 %v686
      %v871 = vpop.f32.mrb[0].mxu0
      %v872 = vadd.f32 0.0, %v871
      %v873 = vpop.f32.mrb[0].mxu0
      %v874 = vpop.f32.mrb[0].mxu0
      %v875 = vadd.f32 0.0, %v874
      %v876 = vpop.f32.mrb[0].mxu0
      %877 = vmatprep.mubr.bf16.mxu0 0
      %878 = vmatmul.mubr.bf16.gmra.mrb[0].mxu0 %v689
      %v879 = vpop.f32.mrb[0].mxu0
      %v880 = vadd.f32 0.0, %v879
      %v881 = vpop.f32.mrb[0].mxu0
      %v882 = vpop.f32.mrb[0].mxu0
      %v883 = vadd.f32 0.0, %v882
      %v884 = vpop.f32.mrb[0].mxu0
      %885 = vmatprep.mubr.bf16.mxu0 0
      %886 = vmatmul.mubr.bf16.gmra.mrb[0].mxu0 %v692
      %v887 = vpop.f32.mrb[0].mxu0
      %v888 = vadd.f32 0.0, %v887
      %v889 = vpop.f32.mrb[0].mxu0
      %v890 = vpop.f32.mrb[0].mxu0
      %v891 = vadd.f32 0.0, %v890
      %v892 = vpop.f32.mrb[0].mxu0
      %893 = vmatprep.mubr.bf16.mxu0 0
      %894 = vmatmul.mubr.bf16.gmra.mrb[0].mxu0 %v695
      %v895 = vpop.f32.mrb[0].mxu0
      %v896 = vadd.f32 0.0, %v895
      %v897 = vpop.f32.mrb[0].mxu0
      %v898 = vpop.f32.mrb[0].mxu0
      %v899 = vadd.f32 0.0, %v898
      %v900 = vpop.f32.mrb[0].mxu0
      %901 = vmatprep.mubr.bf16.mxu0 0
      %902 = vmatmul.mubr.bf16.gmra.mrb[0].mxu0 %v698
      %v903 = vpop.f32.mrb[0].mxu0
      %v904 = vadd.f32 0.0, %v903
      %v905 = vpop.f32.mrb[0].mxu0
      %v906 = vpop.f32.mrb[0].mxu0
      %v907 = vadd.f32 0.0, %v906
      %v908 = vpop.f32.mrb[0].mxu0
      %909 = vmatprep.mubr.bf16.mxu0 0
      %910 = vmatmul.mubr.bf16.gmra.mrb[0].mxu0 %v701
      %v911 = vpop.f32.mrb[0].mxu0
      %v912 = vadd.f32 0.0, %v911
      %v913 = vpop.f32.mrb[0].mxu0
      %v914 = vpop.f32.mrb[0].mxu0
      %v915 = vadd.f32 0.0, %v914
      %v916 = vpop.f32.mrb[0].mxu0
      %917 = vmatprep.mubr.bf16.mxu0 0
      %918 = vmatmul.mubr.bf16.gmra.mrb[0].mxu0 %v704
      %v919 = vpop.f32.mrb[0].mxu0
      %v920 = vadd.f32 0.0, %v919
      %v921 = vpop.f32.mrb[0].mxu0
      %v922 = vpop.f32.mrb[0].mxu0
      %v923 = vadd.f32 0.0, %v922
      %v924 = vpop.f32.mrb[0].mxu0
      %925 = vmatprep.mubr.bf16.mxu0 0
      %926 = vmatmul.mubr.bf16.gmra.mrb[0].mxu0 %v707
      %v927 = vpop.f32.mrb[0].mxu0
      %v928 = vadd.f32 0.0, %v927
      %v929 = vpop.f32.mrb[0].mxu0
      %v930 = vpop.f32.mrb[0].mxu0
      %v931 = vadd.f32 0.0, %v930
      %v932 = vpop.f32.mrb[0].mxu0
      %933 = vmatprep.mubr.bf16.mxu0 0
      %934 = vmatmul.mubr.bf16.gmra.mrb[0].mxu0 %v710
      %v935 = vpop.f32.mrb[0].mxu0
      %v936 = vadd.f32 0.0, %v935
      %v937 = vpop.f32.mrb[0].mxu0
      %v938 = vpop.f32.mrb[0].mxu0
      %v939 = vadd.f32 0.0, %v938
      %v940 = vpop.f32.mrb[0].mxu0
      %941 = vmatprep.mubr.bf16.mxu0 0
      %942 = vmatmul.mubr.bf16.gmra.mrb[0].mxu0 %v713
      %v943 = vpop.f32.mrb[0].mxu0
      %v944 = vadd.f32 0.0, %v943
      %v945 = vpop.f32.mrb[0].mxu0
      %v946 = vpop.f32.mrb[0].mxu0
      %v947 = vadd.f32 0.0, %v946
      %v948 = vpop.f32.mrb[0].mxu0
      %949 = vmatprep.mubr.bf16.mxu0 0
      %950 = vmatmul.mubr.bf16.gmra.mrb[0].mxu0 %v716
      %v951 = vpop.f32.mrb[0].mxu0
      %v952 = vadd.f32 0.0, %v951
      %v953 = vpop.f32.mrb[0].mxu0
      %v954 = vpop.f32.mrb[0].mxu0
      %v955 = vadd.f32 0.0, %v954
      %v956 = vpop.f32.mrb[0].mxu0
      %957 = vmatprep.mubr.bf16.mxu0 0
      %958 = vmatmul.mubr.bf16.gmra.mrb[0].mxu0 %v719
      %v959 = vpop.f32.mrb[0].mxu0
      %v960 = vadd.f32 0.0, %v959
      %v961 = vpop.f32.mrb[0].mxu0
      %v962 = vpop.f32.mrb[0].mxu0
      %v963 = vadd.f32 0.0, %v962
      %v964 = vpop.f32.mrb[0].mxu0
      %965 = vmatprep.mubr.bf16.mxu0 0
      %966 = vmatmul.mubr.bf16.gmra.mrb[0].mxu0 %v722
      %v967 = vpop.f32.mrb[0].mxu0
      %v968 = vadd.f32 0.0, %v967
      %v969 = vpop.f32.mrb[0].mxu0
      %v970 = vpop.f32.mrb[0].mxu0
      %v971 = vadd.f32 0.0, %v970
      %v972 = vpop.f32.mrb[0].mxu0
      %973 = vmatprep.mubr.bf16.mxu0 0
      %974 = vmatmul.mubr.bf16.gmra.mrb[0].mxu0 %v725
      %v975 = vpop.f32.mrb[0].mxu0
      %v976 = vadd.f32 0.0, %v975
      %v977 = vpop.f32.mrb[0].mxu0
      %v978 = vpop.f32.mrb[0].mxu0
      %v979 = vadd.f32 0.0, %v978
      %v980 = vpop.f32.mrb[0].mxu0
      %981 = vmatprep.mubr.bf16.mxu0 0
      %982 = vmatmul.mubr.bf16.gmra.mrb[0].mxu0 %v728
      %v983 = vpop.f32.mrb[0].mxu0
      %v984 = vadd.f32 0.0, %v983
      %v985 = vpop.f32.mrb[0].mxu0
      %v986 = vpop.f32.mrb[0].mxu0
      %v987 = vadd.f32 0.0, %v986
      %v988 = vpop.f32.mrb[0].mxu0
      %989 = vmatprep.mubr.bf16.mxu0 0
      %990 = vmatmul.mubr.bf16.gmra.mrb[0].mxu0 %v731
      %v991 = vpop.f32.mrb[0].mxu0
      %v992 = vadd.f32 0.0, %v991
      %v993 = vpop.f32.mrb[0].mxu0
      %v994 = vpop.f32.mrb[0].mxu0
      %v995 = vadd.f32 0.0, %v994
      %v996 = vpop.f32.mrb[0].mxu0
      %997 = vmatprep.mubr.bf16.mxu0 0
      %998 = vmatmul.mubr.bf16.gmra.mrb[0].mxu0 %v734
      %v999 = vpop.f32.mrb[0].mxu0
      %v1000 = vadd.f32 0.0, %v999
      %v1001 = vpop.f32.mrb[0].mxu0
      %v1002 = vpop.f32.mrb[0].mxu0
      %v1003 = vadd.f32 0.0, %v1002
      %v1004 = vpop.f32.mrb[0].mxu0
      %1005 = vmatprep.mubr.bf16.mxu0 0
      %1006 = vmatmul.mubr.bf16.gmra.mrb[0].mxu0 %v737
      %v1007 = vpop.f32.mrb[0].mxu0
      %v1008 = vadd.f32 0.0, %v1007
      %v1009 = vpop.f32.mrb[0].mxu0
      %v1010 = vpop.f32.mrb[0].mxu0
      %v1011 = vadd.f32 0.0, %v1010
      %v1012 = vpop.f32.mrb[0].mxu0
      %1013 = vmatprep.mubr.bf16.mxu0 0
      %1014 = vmatmul.mubr.bf16.gmra.mrb[0].mxu0 %v740
      %v1015 = vpop.f32.mrb[0].mxu0
      %v1016 = vadd.f32 0.0, %v1015
      %v1017 = vpop.f32.mrb[0].mxu0
      %v1018 = vpop.f32.mrb[0].mxu0
      %v1019 = vadd.f32 0.0, %v1018
      %v1020 = vpop.f32.mrb[0].mxu0
      %1021 = vmatprep.mubr.bf16.mxu0 0
      %1022 = vmatmul.mubr.bf16.gmra.mrb[0].mxu0 %v743
      %v1023 = vpop.f32.mrb[0].mxu0
      %v1024 = vadd.f32 0.0, %v1023
      %v1025 = vpop.f32.mrb[0].mxu0
      %v1026 = vpop.f32.mrb[0].mxu0
      %v1027 = vadd.f32 0.0, %v1026
      %v1028 = vpop.f32.mrb[0].mxu0
      %1029 = vmatprep.mubr.bf16.mxu0 0
      %1030 = vmatmul.mubr.bf16.gmra.mrb[0].mxu0 %v746
      %v1031 = vpop.f32.mrb[0].mxu0
      %v1032 = vadd.f32 0.0, %v1031
      %v1033 = vpop.f32.mrb[0].mxu0
      %v1034 = vpop.f32.mrb[0].mxu0
      %v1035 = vadd.f32 0.0, %v1034
      %v1036 = vpop.f32.mrb[0].mxu0
      %1037 = vmatprep.mubr.bf16.mxu0 0
      %1038 = vmatmul.mubr.bf16.gmra.mrb[0].mxu0 %v749
      %v1039 = vpop.f32.mrb[0].mxu0
      %v1040 = vadd.f32 0.0, %v1039
      %v1041 = vpop.f32.mrb[0].mxu0
      %v1042 = vpop.f32.mrb[0].mxu0
      %v1043 = vadd.f32 0.0, %v1042
      %v1044 = vpop.f32.mrb[0].mxu0
      %1045 = vmatprep.mubr.bf16.mxu0 0
      %1046 = vmatmul.mubr.bf16.gmra.mrb[0].mxu0 %v752
      %v1047 = vpop.f32.mrb[0].mxu0
      %v1048 = vadd.f32 0.0, %v1047
      %v1049 = vpop.f32.mrb[0].mxu0
      %v1050 = vpop.f32.mrb[0].mxu0
      %v1051 = vadd.f32 0.0, %v1050
      %v1052 = vpop.f32.mrb[0].mxu0
      %1053 = vmatprep.mubr.bf16.mxu0 0
      %1054 = vmatmul.mubr.bf16.gmra.mrb[0].mxu0 %v755
      %v1055 = vpop.f32.mrb[0].mxu0
      %v1056 = vadd.f32 0.0, %v1055
      %v1057 = vpop.f32.mrb[0].mxu0
      %v1058 = vpop.f32.mrb[0].mxu0
      %v1059 = vadd.f32 0.0, %v1058
      %v1060 = vpop.f32.mrb[0].mxu0
      %1061 = vmatprep.mubr.bf16.mxu0 0
      %1062 = vmatmul.mubr.bf16.gmra.mrb[0].mxu0 %v758
      %v1063 = vpop.f32.mrb[0].mxu0
      %v1064 = vadd.f32 0.0, %v1063
      %v1065 = vpop.f32.mrb[0].mxu0
      %v1066 = vpop.f32.mrb[0].mxu0
      %v1067 = vadd.f32 0.0, %v1066
      %v1068 = vpop.f32.mrb[0].mxu0
      %1069 = vmatprep.mubr.bf16.mxu0 0
      %1070 = vmatmul.mubr.bf16.gmra.mrb[0].mxu0 %v761
      %v1071 = vpop.f32.mrb[0].mxu0
      %v1072 = vadd.f32 0.0, %v1071
      %v1073 = vpop.f32.mrb[0].mxu0
      %v1074 = vpop.f32.mrb[0].mxu0
      %v1075 = vadd.f32 0.0, %v1074
      %v1076 = vpop.f32.mrb[0].mxu0
      %1077 = vmatprep.mubr.bf16.mxu0 0
      %1078 = vmatmul.mubr.bf16.gmra.mrb[0].mxu0 %v764
      %v1079 = vpop.f32.mrb[0].mxu0
      %v1080 = vadd.f32 0.0, %v1079
      %v1081 = vpop.f32.mrb[0].mxu0
      %v1082 = vpop.f32.mrb[0].mxu0
      %v1083 = vadd.f32 0.0, %v1082
      %v1084 = vpop.f32.mrb[0].mxu0
      %1085 = vmatprep.mubr.bf16.mxu0 0
      %1086 = vmatmul.mubr.bf16.gmra.mrb[0].mxu0 %v767
      %v1087 = vpop.f32.mrb[0].mxu0
      %v1088 = vadd.f32 0.0, %v1087
      %v1089 = vpop.f32.mrb[0].mxu0
      %v1090 = vpop.f32.mrb[0].mxu0
      %v1091 = vadd.f32 0.0, %v1090
      %v1092 = vpop.f32.mrb[0].mxu0
      %1093 = vmatprep.mubr.bf16.mxu0 0
      %1094 = vmatmul.mubr.bf16.gmra.mrb[0].mxu0 %v770
      %v1095 = vpop.f32.mrb[0].mxu0
      %v1096 = vadd.f32 0.0, %v1095
      %v1097 = vpop.f32.mrb[0].mxu0
      %v1098 = vpop.f32.mrb[0].mxu0
      %v1099 = vadd.f32 0.0, %v1098
      %v1100 = vpop.f32.mrb[0].mxu0
      %1101 = vmatprep.mubr.bf16.mxu0 0
      %1102 = vmatmul.mubr.bf16.gmra.mrb[0].mxu0 %v773
      %v1103 = vpop.f32.mrb[0].mxu0
      %v1104 = vadd.f32 0.0, %v1103
      %v1105 = vpop.f32.mrb[0].mxu0
      %v1106 = vpop.f32.mrb[0].mxu0
      %v1107 = vadd.f32 0.0, %v1106
      %v1108 = vpop.f32.mrb[0].mxu0
      %1109 = vmatprep.mubr.bf16.mxu0 0
      %1110 = vmatmul.mubr.bf16.gmra.mrb[0].mxu0 %v776
      %v1111 = vpop.f32.mrb[0].mxu0
      %v1112 = vadd.f32 0.0, %v1111
      %v1113 = vpop.f32.mrb[0].mxu0
      %v1114 = vpop.f32.mrb[0].mxu0
      %v1115 = vadd.f32 0.0, %v1114
      %v1116 = vpop.f32.mrb[0].mxu0
      %1117 = vmatprep.mubr.bf16.mxu0 0
      %1118 = vmatmul.mubr.bf16.gmra.mrb[0].mxu0 %v779
      %v1119 = vpop.f32.mrb[0].mxu0
      %v1120 = vadd.f32 0.0, %v1119
      %v1121 = vpop.f32.mrb[0].mxu0
      %v1122 = vpop.f32.mrb[0].mxu0
      %v1123 = vadd.f32 0.0, %v1122
      %v1124 = vpop.f32.mrb[0].mxu0
      %1125 = vmatprep.mubr.bf16.mxu0 0
      %1126 = vmatmul.mubr.bf16.gmra.mrb[0].mxu0 %v782
      %v1127 = vpop.f32.mrb[0].mxu0
      %v1128 = vadd.f32 0.0, %v1127
      %v1129 = vpop.f32.mrb[0].mxu0
      %v1130 = vpop.f32.mrb[0].mxu0
      %v1131 = vadd.f32 0.0, %v1130
      %v1132 = vpop.f32.mrb[0].mxu0
      %1133 = vmatprep.mubr.bf16.mxu0 0
      %1134 = vmatmul.mubr.bf16.gmra.mrb[0].mxu0 %v785
      %v1135 = vpop.f32.mrb[0].mxu0
      %v1136 = vadd.f32 0.0, %v1135
      %v1137 = vpop.f32.mrb[0].mxu0
      %v1138 = vpop.f32.mrb[0].mxu0
      %v1139 = vadd.f32 0.0, %v1138
      %v1140 = vpop.f32.mrb[0].mxu0
      %1141 = vmatprep.mubr.bf16.mxu0 0
      %1142 = vmatmul.mubr.bf16.gmra.mrb[0].mxu0 %v788
      %v1143 = vpop.f32.mrb[0].mxu0
      %v1144 = vadd.f32 0.0, %v1143
      %v1145 = vpop.f32.mrb[0].mxu0
      %v1146 = vpop.f32.mrb[0].mxu0
      %v1147 = vadd.f32 0.0, %v1146
      %v1148 = vpop.f32.mrb[0].mxu0
      %1149 = vmatprep.mubr.bf16.mxu0 0
      %1150 = vmatmul.mubr.bf16.gmra.mrb[0].mxu0 %v791
      %v1151 = vpop.f32.mrb[0].mxu0
      %v1152 = vadd.f32 0.0, %v1151
      %v1153 = vpop.f32.mrb[0].mxu0
      %v1154 = vpop.f32.mrb[0].mxu0
      %v1155 = vadd.f32 0.0, %v1154
      %v1156 = vpop.f32.mrb[0].mxu0
      %1157 = vmatprep.mubr.bf16.mxu0 0
      %1158 = vmatmul.mubr.bf16.gmra.mrb[0].mxu0 %v794
      %v1159 = vpop.f32.mrb[0].mxu0
      %v1160 = vadd.f32 0.0, %v1159
      %v1161 = vpop.f32.mrb[0].mxu0
      %v1162 = vpop.f32.mrb[0].mxu0
      %v1163 = vadd.f32 0.0, %v1162
      %v1164 = vpop.f32.mrb[0].mxu0
      %1165 = vmatprep.mubr.bf16.mxu0 0
      %1166 = vmatmul.mubr.bf16.gmra.mrb[0].mxu0 %v797
      %v1167 = vpop.f32.mrb[0].mxu0
      %v1168 = vadd.f32 0.0, %v1167
      %v1169 = vpop.f32.mrb[0].mxu0
      %v1170 = vpop.f32.mrb[0].mxu0
      %v1171 = vadd.f32 0.0, %v1170
      %v1172 = vpop.f32.mrb[0].mxu0
      %1173 = vmatprep.mubr.bf16.mxu0 0
      %1174 = vmatmul.mubr.bf16.gmra.mrb[0].mxu0 %v800
      %v1175 = vpop.f32.mrb[0].mxu0
      %v1176 = vadd.f32 0.0, %v1175
      %v1177 = vpop.f32.mrb[0].mxu0
      %v1178 = vpop.f32.mrb[0].mxu0
      %v1179 = vadd.f32 0.0, %v1178
      %v1180 = vpop.f32.mrb[0].mxu0
      %1181 = vmatprep.mubr.bf16.mxu0 0
      %1182 = vmatmul.mubr.bf16.gmra.mrb[0].mxu0 %v803
      %v1183 = vpop.f32.mrb[0].mxu0
      %v1184 = vadd.f32 0.0, %v1183
      %v1185 = vpop.f32.mrb[0].mxu0
      %v1186 = vpop.f32.mrb[0].mxu0
      %v1187 = vadd.f32 0.0, %v1186
      %v1188 = vpop.f32.mrb[0].mxu0
      %1189 = vmatprep.mubr.bf16.mxu0 0
      %1190 = vmatmul.mubr.bf16.gmra.mrb[0].mxu0 %v806
      %v1191 = vpop.f32.mrb[0].mxu0
      %v1192 = vadd.f32 0.0, %v1191
      %v1193 = vpop.f32.mrb[0].mxu0
      %v1194 = vpop.f32.mrb[0].mxu0
      %v1195 = vadd.f32 0.0, %v1194
      %v1196 = vpop.f32.mrb[0].mxu0
      %1197 = vmatprep.mubr.bf16.mxu0 0
      %1198 = vmatmul.mubr.bf16.gmra.mrb[0].mxu0 %v809
      %v1199 = vpop.f32.mrb[0].mxu0
      %v1200 = vadd.f32 0.0, %v1199
      %v1201 = vpop.f32.mrb[0].mxu0
      %v1202 = vpop.f32.mrb[0].mxu0
      %v1203 = vadd.f32 0.0, %v1202
      %v1204 = vpop.f32.mrb[0].mxu0
      %1205 = vmatprep.mubr.bf16.mxu0 0
      %1206 = vmatmul.mubr.bf16.gmra.mrb[0].mxu0 %v812
      %v1207 = vpop.f32.mrb[0].mxu0
      %v1208 = vadd.f32 0.0, %v1207
      %v1209 = vpop.f32.mrb[0].mxu0
      %v1210 = vpop.f32.mrb[0].mxu0
      %v1211 = vadd.f32 0.0, %v1210
      %v1212 = vpop.f32.mrb[0].mxu0
      %1213 = vmatprep.mubr.bf16.mxu0 0
      %1214 = vmatmul.mubr.bf16.gmra.mrb[0].mxu0 %v815
      %v1215 = vpop.f32.mrb[0].mxu0
      %v1216 = vadd.f32 0.0, %v1215
      %v1217 = vpop.f32.mrb[0].mxu0
      %v1218 = vpop.f32.mrb[0].mxu0
      %v1219 = vadd.f32 0.0, %v1218
      %v1220 = vpop.f32.mrb[0].mxu0
      %1221 = vmatprep.mubr.bf16.mxu0 0
      %1222 = vmatmul.mubr.bf16.gmra.mrb[0].mxu0 %v818
      %v1223 = vpop.f32.mrb[0].mxu0
      %v1224 = vadd.f32 0.0, %v1223
      %v1225 = vpop.f32.mrb[0].mxu0
      %v1226 = vpop.f32.mrb[0].mxu0
      %v1227 = vadd.f32 0.0, %v1226
      %v1228 = vpop.f32.mrb[0].mxu0
      %1229 = vmatprep.mubr.bf16.mxu0 0
      %1230 = vmatmul.mubr.bf16.gmra.mrb[0].mxu0 %v821
      %v1231 = vpop.f32.mrb[0].mxu0
      %v1232 = vadd.f32 0.0, %v1231
      %v1233 = vpop.f32.mrb[0].mxu0
      %v1234 = vpop.f32.mrb[0].mxu0
      %v1235 = vadd.f32 0.0, %v1234
      %v1236 = vpop.f32.mrb[0].mxu0
      %1237 = vmatprep.mubr.bf16.mxu0 0
      %1238 = vmatmul.mubr.bf16.gmra.mrb[0].mxu0 %v824
      %v1239 = vpop.f32.mrb[0].mxu0
      %v1240 = vadd.f32 0.0, %v1239
      %v1241 = vpop.f32.mrb[0].mxu0
      %v1242 = vpop.f32.mrb[0].mxu0
      %v1243 = vadd.f32 0.0, %v1242
      %v1244 = vpop.f32.mrb[0].mxu0
      %1245 = vmatprep.mubr.bf16.mxu0 0
      %1246 = vmatmul.mubr.bf16.gmra.mrb[0].mxu0 %v827
      %v1247 = vpop.f32.mrb[0].mxu0
      %v1248 = vadd.f32 0.0, %v1247
      %v1249 = vpop.f32.mrb[0].mxu0
      %v1250 = vpop.f32.mrb[0].mxu0
      %v1251 = vadd.f32 0.0, %v1250
      %v1252 = vpop.f32.mrb[0].mxu0
      %1253 = vdwg.mxu0
      %vm1254 = vcmask 130048
      %1255 = vst.msk [vmem:[#allocation2] sm:$0xff] %vm1254, %v864
      %1256 = vst.msk [vmem:[#allocation2 + $0x8] sm:$0xff] %vm1254, %v867
      %1257 = vst.msk [vmem:[#allocation2 + $0x10] sm:$0xff] %vm1254, %v872
      %1258 = vst.msk [vmem:[#allocation2 + $0x18] sm:$0xff] %vm1254, %v875
      %1259 = vst.msk [vmem:[#allocation2 + $0x20] sm:$0xff] %vm1254, %v880
      %1260 = vst.msk [vmem:[#allocation2 + $0x28] sm:$0xff] %vm1254, %v883
      %1261 = vst.msk [vmem:[#allocation2 + $0x30] sm:$0xff] %vm1254, %v888
      %1262 = vst.msk [vmem:[#allocation2 + $0x38] sm:$0xff] %vm1254, %v891
      %1263 = vst.msk [vmem:[#allocation2 + $0x40] sm:$0xff] %vm1254, %v896
      %1264 = vst.msk [vmem:[#allocation2 + $0x48] sm:$0xff] %vm1254, %v899
      %1265 = vst.msk [vmem:[#allocation2 + $0x50] sm:$0xff] %vm1254, %v904
      %1266 = vst.msk [vmem:[#allocation2 + $0x58] sm:$0xff] %vm1254, %v907
      %1267 = vst.msk [vmem:[#allocation2 + $0x60] sm:$0xff] %vm1254, %v912
      %1268 = vst.msk [vmem:[#allocation2 + $0x68] sm:$0xff] %vm1254, %v915
      %1269 = vst.msk [vmem:[#allocation2 + $0x70] sm:$0xff] %vm1254, %v920
      %1270 = vst.msk [vmem:[#allocation2 + $0x78] sm:$0xff] %vm1254, %v923
      %1271 = vst.msk [vmem:[#allocation2 + $0x80] sm:$0xff] %vm1254, %v928
      %1272 = vst.msk [vmem:[#allocation2 + $0x88] sm:$0xff] %vm1254, %v931
      %1273 = vst.msk [vmem:[#allocation2 + $0x90] sm:$0xff] %vm1254, %v936
      %1274 = vst.msk [vmem:[#allocation2 + $0x98] sm:$0xff] %vm1254, %v939
      %1275 = vst.msk [vmem:[#allocation2 + $0xa0] sm:$0xff] %vm1254, %v944
      %1276 = vst.msk [vmem:[#allocation2 + $0xa8] sm:$0xff] %vm1254, %v947
      %1277 = vst.msk [vmem:[#allocation2 + $0xb0] sm:$0xff] %vm1254, %v952
      %1278 = vst.msk [vmem:[#allocation2 + $0xb8] sm:$0xff] %vm1254, %v955
      %1279 = vst.msk [vmem:[#allocation2 + $0xc0] sm:$0xff] %vm1254, %v960
      %1280 = vst.msk [vmem:[#allocation2 + $0xc8] sm:$0xff] %vm1254, %v963
      %1281 = vst.msk [vmem:[#allocation2 + $0xd0] sm:$0xff] %vm1254, %v968
      %1282 = vst.msk [vmem:[#allocation2 + $0xd8] sm:$0xff] %vm1254, %v971
      %1283 = vst.msk [vmem:[#allocation2 + $0xe0] sm:$0xff] %vm1254, %v976
      %1284 = vst.msk [vmem:[#allocation2 + $0xe8] sm:$0xff] %vm1254, %v979
      %1285 = vst.msk [vmem:[#allocation2 + $0xf0] sm:$0xff] %vm1254, %v984
      %1286 = vst.msk [vmem:[#allocation2 + $0xf8] sm:$0xff] %vm1254, %v987
      %1287 = vst.msk [vmem:[#allocation2 + $0x100] sm:$0xff] %vm1254, %v992
      %1288 = vst.msk [vmem:[#allocation2 + $0x108] sm:$0xff] %vm1254, %v995
      %1289 = vst.msk [vmem:[#allocation2 + $0x110] sm:$0xff] %vm1254, %v1000
      %1290 = vst.msk [vmem:[#allocation2 + $0x118] sm:$0xff] %vm1254, %v1003
      %1291 = vst.msk [vmem:[#allocation2 + $0x120] sm:$0xff] %vm1254, %v1008
      %1292 = vst.msk [vmem:[#allocation2 + $0x128] sm:$0xff] %vm1254, %v1011
      %1293 = vst.msk [vmem:[#allocation2 + $0x130] sm:$0xff] %vm1254, %v1016
      %1294 = vst.msk [vmem:[#allocation2 + $0x138] sm:$0xff] %vm1254, %v1019
      %1295 = vst.msk [vmem:[#allocation2 + $0x140] sm:$0xff] %vm1254, %v1024
      %1296 = vst.msk [vmem:[#allocation2 + $0x148] sm:$0xff] %vm1254, %v1027
      %1297 = vst.msk [vmem:[#allocation2 + $0x150] sm:$0xff] %vm1254, %v1032
      %1298 = vst.msk [vmem:[#allocation2 + $0x158] sm:$0xff] %vm1254, %v1035
      %1299 = vst.msk [vmem:[#allocation2 + $0x160] sm:$0xff] %vm1254, %v1040
      %1300 = vst.msk [vmem:[#allocation2 + $0x168] sm:$0xff] %vm1254, %v1043
      %1301 = vst.msk [vmem:[#allocation2 + $0x170] sm:$0xff] %vm1254, %v1048
      %1302 = vst.msk [vmem:[#allocation2 + $0x178] sm:$0xff] %vm1254, %v1051
      %1303 = vst.msk [vmem:[#allocation2 + $0x180] sm:$0xff] %vm1254, %v1056
      %1304 = vst.msk [vmem:[#allocation2 + $0x188] sm:$0xff] %vm1254, %v1059
      %1305 = vst.msk [vmem:[#allocation2 + $0x190] sm:$0xff] %vm1254, %v1064
      %1306 = vst.msk [vmem:[#allocation2 + $0x198] sm:$0xff] %vm1254, %v1067
      %1307 = vst.msk [vmem:[#allocation2 + $0x1a0] sm:$0xff] %vm1254, %v1072
      %1308 = vst.msk [vmem:[#allocation2 + $0x1a8] sm:$0xff] %vm1254, %v1075
      %1309 = vst.msk [vmem:[#allocation2 + $0x1b0] sm:$0xff] %vm1254, %v1080
      %1310 = vst.msk [vmem:[#allocation2 + $0x1b8] sm:$0xff] %vm1254, %v1083
      %1311 = vst.msk [vmem:[#allocation2 + $0x1c0] sm:$0xff] %vm1254, %v1088
      %1312 = vst.msk [vmem:[#allocation2 + $0x1c8] sm:$0xff] %vm1254, %v1091
      %1313 = vst.msk [vmem:[#allocation2 + $0x1d0] sm:$0xff] %vm1254, %v1096
      %1314 = vst.msk [vmem:[#allocation2 + $0x1d8] sm:$0xff] %vm1254, %v1099
      %1315 = vst.msk [vmem:[#allocation2 + $0x1e0] sm:$0xff] %vm1254, %v1104
      %1316 = vst.msk [vmem:[#allocation2 + $0x1e8] sm:$0xff] %vm1254, %v1107
      %1317 = vst.msk [vmem:[#allocation2 + $0x1f0] sm:$0xff] %vm1254, %v1112
      %1318 = vst.msk [vmem:[#allocation2 + $0x1f8] sm:$0xff] %vm1254, %v1115
      %1319 = vst.msk [vmem:[#allocation2 + $0x200] sm:$0xff] %vm1254, %v1120
      %1320 = vst.msk [vmem:[#allocation2 + $0x208] sm:$0xff] %vm1254, %v1123
      %1321 = vst.msk [vmem:[#allocation2 + $0x210] sm:$0xff] %vm1254, %v1128
      %1322 = vst.msk [vmem:[#allocation2 + $0x218] sm:$0xff] %vm1254, %v1131
      %1323 = vst.msk [vmem:[#allocation2 + $0x220] sm:$0xff] %vm1254, %v1136
      %1324 = vst.msk [vmem:[#allocation2 + $0x228] sm:$0xff] %vm1254, %v1139
      %1325 = vst.msk [vmem:[#allocation2 + $0x230] sm:$0xff] %vm1254, %v1144
      %1326 = vst.msk [vmem:[#allocation2 + $0x238] sm:$0xff] %vm1254, %v1147
      %1327 = vst.msk [vmem:[#allocation2 + $0x240] sm:$0xff] %vm1254, %v1152
      %1328 = vst.msk [vmem:[#allocation2 + $0x248] sm:$0xff] %vm1254, %v1155
      %1329 = vst.msk [vmem:[#allocation2 + $0x250] sm:$0xff] %vm1254, %v1160
      %1330 = vst.msk [vmem:[#allocation2 + $0x258] sm:$0xff] %vm1254, %v1163
      %1331 = vst.msk [vmem:[#allocation2 + $0x260] sm:$0xff] %vm1254, %v1168
      %1332 = vst.msk [vmem:[#allocation2 + $0x268] sm:$0xff] %vm1254, %v1171
      %1333 = vst.msk [vmem:[#allocation2 + $0x270] sm:$0xff] %vm1254, %v1176
      %1334 = vst.msk [vmem:[#allocation2 + $0x278] sm:$0xff] %vm1254, %v1179
      %1335 = vst.msk [vmem:[#allocation2 + $0x280] sm:$0xff] %vm1254, %v1184
      %1336 = vst.msk [vmem:[#allocation2 + $0x288] sm:$0xff] %vm1254, %v1187
      %1337 = vst.msk [vmem:[#allocation2 + $0x290] sm:$0xff] %vm1254, %v1192
      %1338 = vst.msk [vmem:[#allocation2 + $0x298] sm:$0xff] %vm1254, %v1195
      %1339 = vst.msk [vmem:[#allocation2 + $0x2a0] sm:$0xff] %vm1254, %v1200
      %1340 = vst.msk [vmem:[#allocation2 + $0x2a8] sm:$0xff] %vm1254, %v1203
      %1341 = vst.msk [vmem:[#allocation2 + $0x2b0] sm:$0xff] %vm1254, %v1208
      %1342 = vst.msk [vmem:[#allocation2 + $0x2b8] sm:$0xff] %vm1254, %v1211
      %1343 = vst.msk [vmem:[#allocation2 + $0x2c0] sm:$0xff] %vm1254, %v1216
      %1344 = vst.msk [vmem:[#allocation2 + $0x2c8] sm:$0xff] %vm1254, %v1219
      %1345 = vst.msk [vmem:[#allocation2 + $0x2d0] sm:$0xff] %vm1254, %v1224
      %1346 = vst.msk [vmem:[#allocation2 + $0x2d8] sm:$0xff] %vm1254, %v1227
      %1347 = vst.msk [vmem:[#allocation2 + $0x2e0] sm:$0xff] %vm1254, %v1232
      %1348 = vst.msk [vmem:[#allocation2 + $0x2e8] sm:$0xff] %vm1254, %v1235
      %1349 = vst.msk [vmem:[#allocation2 + $0x2f0] sm:$0xff] %vm1254, %v1240
      %1350 = vst.msk [vmem:[#allocation2 + $0x2f8] sm:$0xff] %vm1254, %v1243
      %1351 = vst.msk [vmem:[#allocation2 + $0x300] sm:$0xff] %vm1254, %v1248
      %1352 = vst.msk [vmem:[#allocation2 + $0x308] sm:$0xff] %vm1254, %v1251
      %v1353 = vld [vmem:[#allocation2] ss:$2 sm:$0xff]
      %s1354 = scalar_lea.vmem [#allocation2], 16
      %v1355 = vld [vmem:[%s1354] ss:$2 sm:$0xff]
      %s1356 = scalar_lea.vmem [#allocation2], 32
      %v1357 = vld [vmem:[%s1356] ss:$2 sm:$0xff]
      %s1358 = scalar_lea.vmem [#allocation2], 48
      %v1359 = vld [vmem:[%s1358] ss:$2 sm:$0xff]
      %s1360 = scalar_lea.vmem [#allocation2], 64
      %v1361 = vld [vmem:[%s1360] ss:$2 sm:$0xff]
      %s1362 = scalar_lea.vmem [#allocation2], 80
      %v1363 = vld [vmem:[%s1362] ss:$2 sm:$0xff]
      %s1364 = scalar_lea.vmem [#allocation2], 96
      %v1365 = vld [vmem:[%s1364] ss:$2 sm:$0xff]
      %s1366 = scalar_lea.vmem [#allocation2], 112
      %v1367 = vld [vmem:[%s1366] ss:$2 sm:$0xff]
      %s1368 = scalar_lea.vmem [#allocation2], 128
      %v1369 = vld [vmem:[%s1368] ss:$2 sm:$0xff]
      %s1370 = scalar_lea.vmem [#allocation2], 144
      %v1371 = vld [vmem:[%s1370] ss:$2 sm:$0xff]
      %s1372 = scalar_lea.vmem [#allocation2], 160
      %v1373 = vld [vmem:[%s1372] ss:$2 sm:$0xff]
      %s1374 = scalar_lea.vmem [#allocation2], 176
      %v1375 = vld [vmem:[%s1374] ss:$2 sm:$0xff]
      %s1376 = scalar_lea.vmem [#allocation2], 192
      %v1377 = vld [vmem:[%s1376] ss:$2 sm:$0xff]
      %s1378 = scalar_lea.vmem [#allocation2], 208
      %v1379 = vld [vmem:[%s1378] ss:$2 sm:$0xff]
      %s1380 = scalar_lea.vmem [#allocation2], 224
      %v1381 = vld [vmem:[%s1380] ss:$2 sm:$0xff]
      %s1382 = scalar_lea.vmem [#allocation2], 240
      %v1383 = vld [vmem:[%s1382] ss:$2 sm:$0xff]
      %s1384 = scalar_lea.vmem [#allocation2], 256
      %v1385 = vld [vmem:[%s1384] ss:$2 sm:$0xff]
      %s1386 = scalar_lea.vmem [#allocation2], 272
      %v1387 = vld [vmem:[%s1386] ss:$2 sm:$0xff]
      %s1388 = scalar_lea.vmem [#allocation2], 288
      %v1389 = vld [vmem:[%s1388] ss:$2 sm:$0xff]
      %s1390 = scalar_lea.vmem [#allocation2], 304
      %v1391 = vld [vmem:[%s1390] ss:$2 sm:$0xff]
      %s1392 = scalar_lea.vmem [#allocation2], 320
      %v1393 = vld [vmem:[%s1392] ss:$2 sm:$0xff]
      %s1394 = scalar_lea.vmem [#allocation2], 336
      %v1395 = vld [vmem:[%s1394] ss:$2 sm:$0xff]
      %s1396 = scalar_lea.vmem [#allocation2], 352
      %v1397 = vld [vmem:[%s1396] ss:$2 sm:$0xff]
      %s1398 = scalar_lea.vmem [#allocation2], 368
      %v1399 = vld [vmem:[%s1398] ss:$2 sm:$0xff]
      %s1400 = scalar_lea.vmem [#allocation2], 384
      %v1401 = vld [vmem:[%s1400] ss:$2 sm:$0xff]
      %s1402 = scalar_lea.vmem [#allocation2], 400
      %v1403 = vld [vmem:[%s1402] ss:$2 sm:$0xff]
      %s1404 = scalar_lea.vmem [#allocation2], 416
      %v1405 = vld [vmem:[%s1404] ss:$2 sm:$0xff]
      %s1406 = scalar_lea.vmem [#allocation2], 432
      %v1407 = vld [vmem:[%s1406] ss:$2 sm:$0xff]
      %s1408 = scalar_lea.vmem [#allocation2], 448
      %v1409 = vld [vmem:[%s1408] ss:$2 sm:$0xff]
      %s1410 = scalar_lea.vmem [#allocation2], 464
      %v1411 = vld [vmem:[%s1410] ss:$2 sm:$0xff]
      %s1412 = scalar_lea.vmem [#allocation2], 480
      %v1413 = vld [vmem:[%s1412] ss:$2 sm:$0xff]
      %s1414 = scalar_lea.vmem [#allocation2], 496
      %v1415 = vld [vmem:[%s1414] ss:$2 sm:$0xff]
      %s1416 = scalar_lea.vmem [#allocation2], 512
      %v1417 = vld [vmem:[%s1416] ss:$2 sm:$0xff]
      %s1418 = scalar_lea.vmem [#allocation2], 528
      %v1419 = vld [vmem:[%s1418] ss:$2 sm:$0xff]
      %s1420 = scalar_lea.vmem [#allocation2], 544
      %v1421 = vld [vmem:[%s1420] ss:$2 sm:$0xff]
      %s1422 = scalar_lea.vmem [#allocation2], 560
      %v1423 = vld [vmem:[%s1422] ss:$2 sm:$0xff]
      %s1424 = scalar_lea.vmem [#allocation2], 576
      %v1425 = vld [vmem:[%s1424] ss:$2 sm:$0xff]
      %s1426 = scalar_lea.vmem [#allocation2], 592
      %v1427 = vld [vmem:[%s1426] ss:$2 sm:$0xff]
      %s1428 = scalar_lea.vmem [#allocation2], 608
      %v1429 = vld [vmem:[%s1428] ss:$2 sm:$0xff]
      %s1430 = scalar_lea.vmem [#allocation2], 624
      %v1431 = vld [vmem:[%s1430] ss:$2 sm:$0xff]
      %s1432 = scalar_lea.vmem [#allocation2], 640
      %v1433 = vld [vmem:[%s1432] ss:$2 sm:$0xff]
      %s1434 = scalar_lea.vmem [#allocation2], 656
      %v1435 = vld [vmem:[%s1434] ss:$2 sm:$0xff]
      %s1436 = scalar_lea.vmem [#allocation2], 672
      %v1437 = vld [vmem:[%s1436] ss:$2 sm:$0xff]
      %s1438 = scalar_lea.vmem [#allocation2], 688
      %v1439 = vld [vmem:[%s1438] ss:$2 sm:$0xff]
      %s1440 = scalar_lea.vmem [#allocation2], 704
      %v1441 = vld [vmem:[%s1440] ss:$2 sm:$0xff]
      %s1442 = scalar_lea.vmem [#allocation2], 720
      %v1443 = vld [vmem:[%s1442] ss:$2 sm:$0xff]
      %s1444 = scalar_lea.vmem [#allocation2], 736
      %v1445 = vld [vmem:[%s1444] ss:$2 sm:$0xff]
      %s1446 = scalar_lea.vmem [#allocation2], 752
      %v1447 = vld [vmem:[%s1446] ss:$2 sm:$0xff]
      %s1448 = scalar_lea.vmem [#allocation2], 768
      %v1449 = vld [vmem:[%s1448] ss:$2 sm:$0xff]
      %s1450 = scalar_lea.vmem [#allocation2], 1
      %v1451 = vld [vmem:[%s1450] ss:$2 sm:$0xff]
      %s1452 = scalar_lea.vmem [#allocation2], 17
      %v1453 = vld [vmem:[%s1452] ss:$2 sm:$0xff]
      %s1454 = scalar_lea.vmem [#allocation2], 33
      %v1455 = vld [vmem:[%s1454] ss:$2 sm:$0xff]
      %s1456 = scalar_lea.vmem [#allocation2], 49
      %v1457 = vld [vmem:[%s1456] ss:$2 sm:$0xff]
      %s1458 = scalar_lea.vmem [#allocation2], 65
      %v1459 = vld [vmem:[%s1458] ss:$2 sm:$0xff]
      %s1460 = scalar_lea.vmem [#allocation2], 81
      %v1461 = vld [vmem:[%s1460] ss:$2 sm:$0xff]
      %s1462 = scalar_lea.vmem [#allocation2], 97
      %v1463 = vld [vmem:[%s1462] ss:$2 sm:$0xff]
      %s1464 = scalar_lea.vmem [#allocation2], 113
      %v1465 = vld [vmem:[%s1464] ss:$2 sm:$0xff]
      %s1466 = scalar_lea.vmem [#allocation2], 129
      %v1467 = vld [vmem:[%s1466] ss:$2 sm:$0xff]
      %s1468 = scalar_lea.vmem [#allocation2], 145
      %v1469 = vld [vmem:[%s1468] ss:$2 sm:$0xff]
      %s1470 = scalar_lea.vmem [#allocation2], 161
      %v1471 = vld [vmem:[%s1470] ss:$2 sm:$0xff]
      %s1472 = scalar_lea.vmem [#allocation2], 177
      %v1473 = vld [vmem:[%s1472] ss:$2 sm:$0xff]
      %s1474 = scalar_lea.vmem [#allocation2], 193
      %v1475 = vld [vmem:[%s1474] ss:$2 sm:$0xff]
      %s1476 = scalar_lea.vmem [#allocation2], 209
      %v1477 = vld [vmem:[%s1476] ss:$2 sm:$0xff]
      %s1478 = scalar_lea.vmem [#allocation2], 225
      %v1479 = vld [vmem:[%s1478] ss:$2 sm:$0xff]
      %s1480 = scalar_lea.vmem [#allocation2], 241
      %v1481 = vld [vmem:[%s1480] ss:$2 sm:$0xff]
      %s1482 = scalar_lea.vmem [#allocation2], 257
      %v1483 = vld [vmem:[%s1482] ss:$2 sm:$0xff]
      %s1484 = scalar_lea.vmem [#allocation2], 273
      %v1485 = vld [vmem:[%s1484] ss:$2 sm:$0xff]
      %s1486 = scalar_lea.vmem [#allocation2], 289
      %v1487 = vld [vmem:[%s1486] ss:$2 sm:$0xff]
      %s1488 = scalar_lea.vmem [#allocation2], 305
      %v1489 = vld [vmem:[%s1488] ss:$2 sm:$0xff]
      %s1490 = scalar_lea.vmem [#allocation2], 321
      %v1491 = vld [vmem:[%s1490] ss:$2 sm:$0xff]
      %s1492 = scalar_lea.vmem [#allocation2], 337
      %v1493 = vld [vmem:[%s1492] ss:$2 sm:$0xff]
      %s1494 = scalar_lea.vmem [#allocation2], 353
      %v1495 = vld [vmem:[%s1494] ss:$2 sm:$0xff]
      %s1496 = scalar_lea.vmem [#allocation2], 369
      %v1497 = vld [vmem:[%s1496] ss:$2 sm:$0xff]
      %s1498 = scalar_lea.vmem [#allocation2], 385
      %v1499 = vld [vmem:[%s1498] ss:$2 sm:$0xff]
      %s1500 = scalar_lea.vmem [#allocation2], 401
      %v1501 = vld [vmem:[%s1500] ss:$2 sm:$0xff]
      %s1502 = scalar_lea.vmem [#allocation2], 417
      %v1503 = vld [vmem:[%s1502] ss:$2 sm:$0xff]
      %s1504 = scalar_lea.vmem [#allocation2], 433
      %v1505 = vld [vmem:[%s1504] ss:$2 sm:$0xff]
      %s1506 = scalar_lea.vmem [#allocation2], 449
      %v1507 = vld [vmem:[%s1506] ss:$2 sm:$0xff]
      %s1508 = scalar_lea.vmem [#allocation2], 465
      %v1509 = vld [vmem:[%s1508] ss:$2 sm:$0xff]
      %s1510 = scalar_lea.vmem [#allocation2], 481
      %v1511 = vld [vmem:[%s1510] ss:$2 sm:$0xff]
      %s1512 = scalar_lea.vmem [#allocation2], 497
      %v1513 = vld [vmem:[%s1512] ss:$2 sm:$0xff]
      %s1514 = scalar_lea.vmem [#allocation2], 513
      %v1515 = vld [vmem:[%s1514] ss:$2 sm:$0xff]
      %s1516 = scalar_lea.vmem [#allocation2], 529
      %v1517 = vld [vmem:[%s1516] ss:$2 sm:$0xff]
      %s1518 = scalar_lea.vmem [#allocation2], 545
      %v1519 = vld [vmem:[%s1518] ss:$2 sm:$0xff]
      %s1520 = scalar_lea.vmem [#allocation2], 561
      %v1521 = vld [vmem:[%s1520] ss:$2 sm:$0xff]
      %s1522 = scalar_lea.vmem [#allocation2], 577
      %v1523 = vld [vmem:[%s1522] ss:$2 sm:$0xff]
      %s1524 = scalar_lea.vmem [#allocation2], 593
      %v1525 = vld [vmem:[%s1524] ss:$2 sm:$0xff]
      %s1526 = scalar_lea.vmem [#allocation2], 609
      %v1527 = vld [vmem:[%s1526] ss:$2 sm:$0xff]
      %s1528 = scalar_lea.vmem [#allocation2], 625
      %v1529 = vld [vmem:[%s1528] ss:$2 sm:$0xff]
      %s1530 = scalar_lea.vmem [#allocation2], 641
      %v1531 = vld [vmem:[%s1530] ss:$2 sm:$0xff]
      %s1532 = scalar_lea.vmem [#allocation2], 657
      %v1533 = vld [vmem:[%s1532] ss:$2 sm:$0xff]
      %s1534 = scalar_lea.vmem [#allocation2], 673
      %v1535 = vld [vmem:[%s1534] ss:$2 sm:$0xff]
      %s1536 = scalar_lea.vmem [#allocation2], 689
      %v1537 = vld [vmem:[%s1536] ss:$2 sm:$0xff]
      %s1538 = scalar_lea.vmem [#allocation2], 705
      %v1539 = vld [vmem:[%s1538] ss:$2 sm:$0xff]
      %s1540 = scalar_lea.vmem [#allocation2], 721
      %v1541 = vld [vmem:[%s1540] ss:$2 sm:$0xff]
      %s1542 = scalar_lea.vmem [#allocation2], 737
      %v1543 = vld [vmem:[%s1542] ss:$2 sm:$0xff]
      %s1544 = scalar_lea.vmem [#allocation2], 753
      %v1545 = vld [vmem:[%s1544] ss:$2 sm:$0xff]
      %s1546 = scalar_lea.vmem [#allocation2], 769
      %v1547 = vld [vmem:[%s1546] ss:$2 sm:$0xff]
      %v1548 = vmax.f32 %v1353, %v1451
      %v1549 = vmax.f32 %v1355, %v1453
      %v1550 = vmax.f32 %v1357, %v1455
      %v1551 = vmax.f32 %v1359, %v1457
      %v1552 = vmax.f32 %v1361, %v1459
      %v1553 = vmax.f32 %v1363, %v1461
      %v1554 = vmax.f32 %v1365, %v1463
      %v1555 = vmax.f32 %v1367, %v1465
      %v1556 = vmax.f32 %v1369, %v1467
      %v1557 = vmax.f32 %v1371, %v1469
      %v1558 = vmax.f32 %v1373, %v1471
      %v1559 = vmax.f32 %v1375, %v1473
      %v1560 = vmax.f32 %v1377, %v1475
      %v1561 = vmax.f32 %v1379, %v1477
      %v1562 = vmax.f32 %v1381, %v1479
      %v1563 = vmax.f32 %v1383, %v1481
      %v1564 = vmax.f32 %v1385, %v1483
      %v1565 = vmax.f32 %v1387, %v1485
      %v1566 = vmax.f32 %v1389, %v1487
      %v1567 = vmax.f32 %v1391, %v1489
      %v1568 = vmax.f32 %v1393, %v1491
      %v1569 = vmax.f32 %v1395, %v1493
      %v1570 = vmax.f32 %v1397, %v1495
      %v1571 = vmax.f32 %v1399, %v1497
      %v1572 = vmax.f32 %v1401, %v1499
      %v1573 = vmax.f32 %v1403, %v1501
      %v1574 = vmax.f32 %v1405, %v1503
      %v1575 = vmax.f32 %v1407, %v1505
      %v1576 = vmax.f32 %v1409, %v1507
      %v1577 = vmax.f32 %v1411, %v1509
      %v1578 = vmax.f32 %v1413, %v1511
      %v1579 = vmax.f32 %v1415, %v1513
      %v1580 = vmax.f32 %v1417, %v1515
      %v1581 = vmax.f32 %v1419, %v1517
      %v1582 = vmax.f32 %v1421, %v1519
      %v1583 = vmax.f32 %v1423, %v1521
      %v1584 = vmax.f32 %v1425, %v1523
      %v1585 = vmax.f32 %v1427, %v1525
      %v1586 = vmax.f32 %v1429, %v1527
      %v1587 = vmax.f32 %v1431, %v1529
      %v1588 = vmax.f32 %v1433, %v1531
      %v1589 = vmax.f32 %v1435, %v1533
      %v1590 = vmax.f32 %v1437, %v1535
      %v1591 = vmax.f32 %v1439, %v1537
      %v1592 = vmax.f32 %v1441, %v1539
      %v1593 = vmax.f32 %v1443, %v1541
      %v1594 = vmax.f32 %v1445, %v1543
      %v1595 = vmax.f32 %v1447, %v1545
      %v1596 = vmax.f32 %v1449, %v1547
      %1597 = vst.msk [vmem:[#allocation3] sm:$0xff] %vm1254, %v1548
      %1598 = vst.msk [vmem:[#allocation3 + $0x8] sm:$0xff] %vm1254, %v1549
      %1599 = vst.msk [vmem:[#allocation3 + $0x10] sm:$0xff] %vm1254, %v1550
      %1600 = vst.msk [vmem:[#allocation3 + $0x18] sm:$0xff] %vm1254, %v1551
      %1601 = vst.msk [vmem:[#allocation3 + $0x20] sm:$0xff] %vm1254, %v1552
      %1602 = vst.msk [vmem:[#allocation3 + $0x28] sm:$0xff] %vm1254, %v1553
      %1603 = vst.msk [vmem:[#allocation3 + $0x30] sm:$0xff] %vm1254, %v1554
      %1604 = vst.msk [vmem:[#allocation3 + $0x38] sm:$0xff] %vm1254, %v1555
      %1605 = vst.msk [vmem:[#allocation3 + $0x40] sm:$0xff] %vm1254, %v1556
      %1606 = vst.msk [vmem:[#allocation3 + $0x48] sm:$0xff] %vm1254, %v1557
      %1607 = vst.msk [vmem:[#allocation3 + $0x50] sm:$0xff] %vm1254, %v1558
      %1608 = vst.msk [vmem:[#allocation3 + $0x58] sm:$0xff] %vm1254, %v1559
      %1609 = vst.msk [vmem:[#allocation3 + $0x60] sm:$0xff] %vm1254, %v1560
      %1610 = vst.msk [vmem:[#allocation3 + $0x68] sm:$0xff] %vm1254, %v1561
      %1611 = vst.msk [vmem:[#allocation3 + $0x70] sm:$0xff] %vm1254, %v1562
      %1612 = vst.msk [vmem:[#allocation3 + $0x78] sm:$0xff] %vm1254, %v1563
      %1613 = vst.msk [vmem:[#allocation3 + $0x80] sm:$0xff] %vm1254, %v1564
      %1614 = vst.msk [vmem:[#allocation3 + $0x88] sm:$0xff] %vm1254, %v1565
      %1615 = vst.msk [vmem:[#allocation3 + $0x90] sm:$0xff] %vm1254, %v1566
      %1616 = vst.msk [vmem:[#allocation3 + $0x98] sm:$0xff] %vm1254, %v1567
      %1617 = vst.msk [vmem:[#allocation3 + $0xa0] sm:$0xff] %vm1254, %v1568
      %1618 = vst.msk [vmem:[#allocation3 + $0xa8] sm:$0xff] %vm1254, %v1569
      %1619 = vst.msk [vmem:[#allocation3 + $0xb0] sm:$0xff] %vm1254, %v1570
      %1620 = vst.msk [vmem:[#allocation3 + $0xb8] sm:$0xff] %vm1254, %v1571
      %1621 = vst.msk [vmem:[#allocation3 + $0xc0] sm:$0xff] %vm1254, %v1572
      %1622 = vst.msk [vmem:[#allocation3 + $0xc8] sm:$0xff] %vm1254, %v1573
      %1623 = vst.msk [vmem:[#allocation3 + $0xd0] sm:$0xff] %vm1254, %v1574
      %1624 = vst.msk [vmem:[#allocation3 + $0xd8] sm:$0xff] %vm1254, %v1575
      %1625 = vst.msk [vmem:[#allocation3 + $0xe0] sm:$0xff] %vm1254, %v1576
      %1626 = vst.msk [vmem:[#allocation3 + $0xe8] sm:$0xff] %vm1254, %v1577
      %1627 = vst.msk [vmem:[#allocation3 + $0xf0] sm:$0xff] %vm1254, %v1578
      %1628 = vst.msk [vmem:[#allocation3 + $0xf8] sm:$0xff] %vm1254, %v1579
      %1629 = vst.msk [vmem:[#allocation3 + $0x100] sm:$0xff] %vm1254, %v1580
      %1630 = vst.msk [vmem:[#allocation3 + $0x108] sm:$0xff] %vm1254, %v1581
      %1631 = vst.msk [vmem:[#allocation3 + $0x110] sm:$0xff] %vm1254, %v1582
      %1632 = vst.msk [vmem:[#allocation3 + $0x118] sm:$0xff] %vm1254, %v1583
      %1633 = vst.msk [vmem:[#allocation3 + $0x120] sm:$0xff] %vm1254, %v1584
      %1634 = vst.msk [vmem:[#allocation3 + $0x128] sm:$0xff] %vm1254, %v1585
      %1635 = vst.msk [vmem:[#allocation3 + $0x130] sm:$0xff] %vm1254, %v1586
      %1636 = vst.msk [vmem:[#allocation3 + $0x138] sm:$0xff] %vm1254, %v1587
      %1637 = vst.msk [vmem:[#allocation3 + $0x140] sm:$0xff] %vm1254, %v1588
      %1638 = vst.msk [vmem:[#allocation3 + $0x148] sm:$0xff] %vm1254, %v1589
      %1639 = vst.msk [vmem:[#allocation3 + $0x150] sm:$0xff] %vm1254, %v1590
      %1640 = vst.msk [vmem:[#allocation3 + $0x158] sm:$0xff] %vm1254, %v1591
      %1641 = vst.msk [vmem:[#allocation3 + $0x160] sm:$0xff] %vm1254, %v1592
      %1642 = vst.msk [vmem:[#allocation3 + $0x168] sm:$0xff] %vm1254, %v1593
      %1643 = vst.msk [vmem:[#allocation3 + $0x170] sm:$0xff] %vm1254, %v1594
      %1644 = vst.msk [vmem:[#allocation3 + $0x178] sm:$0xff] %vm1254, %v1595
      %1645 = vst.msk [vmem:[#allocation3 + $0x180] sm:$0xff] %vm1254, %v1596
      %v1646 = vld [vmem:[%s2] sm:$0x1]
      %v1647 = vld [vmem:[#allocation3] sm:$0xff]
      %v1648 = vld [vmem:[#allocation3 + $0x8] sm:$0x3f]
      %v1649 = vld [vmem:[#allocation3 + $0xe] sm:$0xff]
      %v1650 = vld [vmem:[#allocation3 + $0x16] sm:$0x3f]
      %v1651 = vmax.f32 %v1647, %v1649
      %v1652 = vmax.f32 %v1648, %v1650
      %v1654 = vlaneseq
      %v1655 = vshrl.u32 %v1654, 7
      %v1656 = vsub.s32 0, %v1655
      %v1657 = vrot.slane %v1646, %v1656
      %v1659 = vadd.f32 %v1651, %v1657
      %v1660 = vadd.f32 %v1652, %v1657
      %v1661 = vmax.f32 %v1659, 0.0
      %v1662 = vmax.f32 %v1660, 0.0
      %1663 = vst.msk [vmem:[#allocation4 + $0x26] sm:$0xff] %vm1254, %v1661
      %vm1664 = vcmask 128000
      %1665 = vst.msk [vmem:[#allocation4 + $0x2e] sm:$0x3f] %vm1664, %v1662
      %1668 = vrot.lane.b32.xlu0 %v1661, 16
      %v1669 = vpop.permute.xlu0 %1668
      %1670 = vrot.lane.b32.xlu0 %v1662, 16
      %v1671 = vpop.permute.xlu0 %1670
      %vm1674 = vcmask 261248
      %1675 = vst.msk [vmem:[#allocation4 + $0x25] sm:$0xff] %vm1674, %v1669
      %vm1676 = vcmask 259200
      %1677 = vst.msk [vmem:[#allocation4 + $0x2d] sm:$0x3f] %vm1676, %v1671
      %1678 = vrot.lane.b32.xlu0 %v1661, 32
      %v1679 = vpop.permute.xlu0 %1678
      %1680 = vrot.lane.b32.xlu0 %v1662, 32
      %v1681 = vpop.permute.xlu0 %1680
      %vm1684 = vcmask 392448
      %1685 = vst.msk [vmem:[#allocation4 + $0x24] sm:$0xff] %vm1684, %v1679
      %vm1686 = vcmask 390400
      %1687 = vst.msk [vmem:[#allocation4 + $0x2c] sm:$0x3f] %vm1686, %v1681
      %1688 = vrot.lane.b32.xlu0 %v1661, 48
      %v1689 = vpop.permute.xlu0 %1688
      %1690 = vrot.lane.b32.xlu0 %v1662, 48
      %v1691 = vpop.permute.xlu0 %1690
      %vm1694 = vcmask 523648
      %1695 = vst.msk [vmem:[#allocation4 + $0x23] sm:$0xff] %vm1694, %v1689
      %vm1696 = vcmask 521600
      %1697 = vst.msk [vmem:[#allocation4 + $0x2b] sm:$0x3f] %vm1696, %v1691
      %1698 = vrot.lane.b32.xlu0 %v1661, 64
      %v1699 = vpop.permute.xlu0 %1698
      %1700 = vrot.lane.b32.xlu0 %v1662, 64
      %v1701 = vpop.permute.xlu0 %1700
      %vm1704 = vcmask 654848
      %1705 = vst.msk [vmem:[#allocation4 + $0x22] sm:$0xff] %vm1704, %v1699
      %vm1706 = vcmask 652800
      %1707 = vst.msk [vmem:[#allocation4 + $0x2a] sm:$0x3f] %vm1706, %v1701
      %v1708 = vld [vmem:[#allocation3 + $0x1c] sm:$0xff]
      %v1709 = vld [vmem:[#allocation3 + $0x24] sm:$0x3f]
      %v1710 = vld [vmem:[#allocation3 + $0x2a] sm:$0xff]
      %v1711 = vld [vmem:[#allocation3 + $0x32] sm:$0x3f]
      %v1712 = vmax.f32 %v1708, %v1710
      %v1713 = vmax.f32 %v1709, %v1711
      %v1714 = vadd.f32 %v1712, %v1657
      %v1715 = vadd.f32 %v1713, %v1657
      %v1716 = vmax.f32 %v1714, 0.0
      %v1717 = vmax.f32 %v1715, 0.0
      %1718 = vst.msk [vmem:[#allocation4 + $0x38] sm:$0xff] %vm1254, %v1716
      %1719 = vst.msk [vmem:[#allocation4 + $0x40] sm:$0x3f] %vm1664, %v1717
      %1722 = vrot.lane.b32.xlu0 %v1716, 16
      %v1723 = vpop.permute.xlu0 %1722
      %1724 = vrot.lane.b32.xlu0 %v1717, 16
      %v1725 = vpop.permute.xlu0 %1724
      %1728 = vst.msk [vmem:[#allocation4 + $0x37] sm:$0xff] %vm1674, %v1723
      %1729 = vst.msk [vmem:[#allocation4 + $0x3f] sm:$0x3f] %vm1676, %v1725
      %1730 = vrot.lane.b32.xlu0 %v1716, 32
      %v1731 = vpop.permute.xlu0 %1730
      %1732 = vrot.lane.b32.xlu0 %v1717, 32
      %v1733 = vpop.permute.xlu0 %1732
      %1736 = vst.msk [vmem:[#allocation4 + $0x36] sm:$0xff] %vm1684, %v1731
      %1737 = vst.msk [vmem:[#allocation4 + $0x3e] sm:$0x3f] %vm1686, %v1733
      %1738 = vrot.lane.b32.xlu0 %v1716, 48
      %v1739 = vpop.permute.xlu0 %1738
      %1740 = vrot.lane.b32.xlu0 %v1717, 48
      %v1741 = vpop.permute.xlu0 %1740
      %1744 = vst.msk [vmem:[#allocation4 + $0x35] sm:$0xff] %vm1694, %v1739
      %1745 = vst.msk [vmem:[#allocation4 + $0x3d] sm:$0x3f] %vm1696, %v1741
      %1746 = vrot.lane.b32.xlu0 %v1716, 64
      %v1747 = vpop.permute.xlu0 %1746
      %1748 = vrot.lane.b32.xlu0 %v1717, 64
      %v1749 = vpop.permute.xlu0 %1748
      %1752 = vst.msk [vmem:[#allocation4 + $0x34] sm:$0xff] %vm1704, %v1747
      %1753 = vst.msk [vmem:[#allocation4 + $0x3c] sm:$0x3f] %vm1706, %v1749
      %v1754 = vld [vmem:[#allocation3 + $0x38] sm:$0xff]
      %v1755 = vld [vmem:[#allocation3 + $0x40] sm:$0x3f]
      %v1756 = vld [vmem:[#allocation3 + $0x46] sm:$0xff]
      %v1757 = vld [vmem:[#allocation3 + $0x4e] sm:$0x3f]
      %v1758 = vmax.f32 %v1754, %v1756
      %v1759 = vmax.f32 %v1755, %v1757
      %v1760 = vadd.f32 %v1758, %v1657
      %v1761 = vadd.f32 %v1759, %v1657
      %v1762 = vmax.f32 %v1760, 0.0
      %v1763 = vmax.f32 %v1761, 0.0
      %1764 = vst.msk [vmem:[#allocation4 + $0x4a] sm:$0xff] %vm1254, %v1762
      %1765 = vst.msk [vmem:[#allocation4 + $0x52] sm:$0x3f] %vm1664, %v1763
      %1768 = vrot.lane.b32.xlu0 %v1762, 16
      %v1769 = vpop.permute.xlu0 %1768
      %1770 = vrot.lane.b32.xlu0 %v1763, 16
      %v1771 = vpop.permute.xlu0 %1770
      %1774 = vst.msk [vmem:[#allocation4 + $0x49] sm:$0xff] %vm1674, %v1769
      %1775 = vst.msk [vmem:[#allocation4 + $0x51] sm:$0x3f] %vm1676, %v1771
      %1776 = vrot.lane.b32.xlu0 %v1762, 32
      %v1777 = vpop.permute.xlu0 %1776
      %1778 = vrot.lane.b32.xlu0 %v1763, 32
      %v1779 = vpop.permute.xlu0 %1778
      %1782 = vst.msk [vmem:[#allocation4 + $0x48] sm:$0xff] %vm1684, %v1777
      %1783 = vst.msk [vmem:[#allocation4 + $0x50] sm:$0x3f] %vm1686, %v1779
      %1784 = vrot.lane.b32.xlu0 %v1762, 48
      %v1785 = vpop.permute.xlu0 %1784
      %1786 = vrot.lane.b32.xlu0 %v1763, 48
      %v1787 = vpop.permute.xlu0 %1786
      %1790 = vst.msk [vmem:[#allocation4 + $0x47] sm:$0xff] %vm1694, %v1785
      %1791 = vst.msk [vmem:[#allocation4 + $0x4f] sm:$0x3f] %vm1696, %v1787
      %1792 = vrot.lane.b32.xlu0 %v1762, 64
      %v1793 = vpop.permute.xlu0 %1792
      %1794 = vrot.lane.b32.xlu0 %v1763, 64
      %v1795 = vpop.permute.xlu0 %1794
      %1798 = vst.msk [vmem:[#allocation4 + $0x46] sm:$0xff] %vm1704, %v1793
      %1799 = vst.msk [vmem:[#allocation4 + $0x4e] sm:$0x3f] %vm1706, %v1795
      %v1800 = vld [vmem:[#allocation3 + $0x54] sm:$0xff]
      %v1801 = vld [vmem:[#allocation3 + $0x5c] sm:$0x3f]
      %v1802 = vld [vmem:[#allocation3 + $0x62] sm:$0xff]
      %v1803 = vld [vmem:[#allocation3 + $0x6a] sm:$0x3f]
      %v1804 = vmax.f32 %v1800, %v1802
      %v1805 = vmax.f32 %v1801, %v1803
      %v1806 = vadd.f32 %v1804, %v1657
      %v1807 = vadd.f32 %v1805, %v1657
      %v1808 = vmax.f32 %v1806, 0.0
      %v1809 = vmax.f32 %v1807, 0.0
      %1810 = vst.msk [vmem:[#allocation4 + $0x5c] sm:$0xff] %vm1254, %v1808
      %1811 = vst.msk [vmem:[#allocation4 + $0x64] sm:$0x3f] %vm1664, %v1809
      %1814 = vrot.lane.b32.xlu0 %v1808, 16
      %v1815 = vpop.permute.xlu0 %1814
      %1816 = vrot.lane.b32.xlu0 %v1809, 16
      %v1817 = vpop.permute.xlu0 %1816
      %1820 = vst.msk [vmem:[#allocation4 + $0x5b] sm:$0xff] %vm1674, %v1815
      %1821 = vst.msk [vmem:[#allocation4 + $0x63] sm:$0x3f] %vm1676, %v1817
      %1822 = vrot.lane.b32.xlu0 %v1808, 32
      %v1823 = vpop.permute.xlu0 %1822
      %1824 = vrot.lane.b32.xlu0 %v1809, 32
      %v1825 = vpop.permute.xlu0 %1824
      %1828 = vst.msk [vmem:[#allocation4 + $0x5a] sm:$0xff] %vm1684, %v1823
      %1829 = vst.msk [vmem:[#allocation4 + $0x62] sm:$0x3f] %vm1686, %v1825
      %1830 = vrot.lane.b32.xlu0 %v1808, 48
      %v1831 = vpop.permute.xlu0 %1830
      %1832 = vrot.lane.b32.xlu0 %v1809, 48
      %v1833 = vpop.permute.xlu0 %1832
      %1836 = vst.msk [vmem:[#allocation4 + $0x59] sm:$0xff] %vm1694, %v1831
      %1837 = vst.msk [vmem:[#allocation4 + $0x61] sm:$0x3f] %vm1696, %v1833
      %1838 = vrot.lane.b32.xlu0 %v1808, 64
      %v1839 = vpop.permute.xlu0 %1838
      %1840 = vrot.lane.b32.xlu0 %v1809, 64
      %v1841 = vpop.permute.xlu0 %1840
      %1844 = vst.msk [vmem:[#allocation4 + $0x58] sm:$0xff] %vm1704, %v1839
      %1845 = vst.msk [vmem:[#allocation4 + $0x60] sm:$0x3f] %vm1706, %v1841
      %v1846 = vld [vmem:[#allocation3 + $0x70] sm:$0xff]
      %v1847 = vld [vmem:[#allocation3 + $0x78] sm:$0x3f]
      %v1848 = vld [vmem:[#allocation3 + $0x7e] sm:$0xff]
      %v1849 = vld [vmem:[#allocation3 + $0x86] sm:$0x3f]
      %v1850 = vmax.f32 %v1846, %v1848
      %v1851 = vmax.f32 %v1847, %v1849
      %v1852 = vadd.f32 %v1850, %v1657
      %v1853 = vadd.f32 %v1851, %v1657
      %v1854 = vmax.f32 %v1852, 0.0
      %v1855 = vmax.f32 %v1853, 0.0
      %1856 = vst.msk [vmem:[#allocation4 + $0x6e] sm:$0xff] %vm1254, %v1854
      %1857 = vst.msk [vmem:[#allocation4 + $0x76] sm:$0x3f] %vm1664, %v1855
      %1860 = vrot.lane.b32.xlu0 %v1854, 16
      %v1861 = vpop.permute.xlu0 %1860
      %1862 = vrot.lane.b32.xlu0 %v1855, 16
      %v1863 = vpop.permute.xlu0 %1862
      %1866 = vst.msk [vmem:[#allocation4 + $0x6d] sm:$0xff] %vm1674, %v1861
      %1867 = vst.msk [vmem:[#allocation4 + $0x75] sm:$0x3f] %vm1676, %v1863
      %1868 = vrot.lane.b32.xlu0 %v1854, 32
      %v1869 = vpop.permute.xlu0 %1868
      %1870 = vrot.lane.b32.xlu0 %v1855, 32
      %v1871 = vpop.permute.xlu0 %1870
      %1874 = vst.msk [vmem:[#allocation4 + $0x6c] sm:$0xff] %vm1684, %v1869
      %1875 = vst.msk [vmem:[#allocation4 + $0x74] sm:$0x3f] %vm1686, %v1871
      %1876 = vrot.lane.b32.xlu0 %v1854, 48
      %v1877 = vpop.permute.xlu0 %1876
      %1878 = vrot.lane.b32.xlu0 %v1855, 48
      %v1879 = vpop.permute.xlu0 %1878
      %1882 = vst.msk [vmem:[#allocation4 + $0x6b] sm:$0xff] %vm1694, %v1877
      %1883 = vst.msk [vmem:[#allocation4 + $0x73] sm:$0x3f] %vm1696, %v1879
      %1884 = vrot.lane.b32.xlu0 %v1854, 64
      %v1885 = vpop.permute.xlu0 %1884
      %1886 = vrot.lane.b32.xlu0 %v1855, 64
      %v1887 = vpop.permute.xlu0 %1886
      %1890 = vst.msk [vmem:[#allocation4 + $0x6a] sm:$0xff] %vm1704, %v1885
      %1891 = vst.msk [vmem:[#allocation4 + $0x72] sm:$0x3f] %vm1706, %v1887
      %v1892 = vld [vmem:[#allocation3 + $0x8c] sm:$0xff]
      %v1893 = vld [vmem:[#allocation3 + $0x94] sm:$0x3f]
      %v1894 = vld [vmem:[#allocation3 + $0x9a] sm:$0xff]
      %v1895 = vld [vmem:[#allocation3 + $0xa2] sm:$0x3f]
      %v1896 = vmax.f32 %v1892, %v1894
      %v1897 = vmax.f32 %v1893, %v1895
      %v1898 = vadd.f32 %v1896, %v1657
      %v1899 = vadd.f32 %v1897, %v1657
      %v1900 = vmax.f32 %v1898, 0.0
      %v1901 = vmax.f32 %v1899, 0.0
      %1902 = vst.msk [vmem:[#allocation4 + $0x80] sm:$0xff] %vm1254, %v1900
      %1903 = vst.msk [vmem:[#allocation4 + $0x88] sm:$0x3f] %vm1664, %v1901
      %1906 = vrot.lane.b32.xlu0 %v1900, 16
      %v1907 = vpop.permute.xlu0 %1906
      %1908 = vrot.lane.b32.xlu0 %v1901, 16
      %v1909 = vpop.permute.xlu0 %1908
      %1912 = vst.msk [vmem:[#allocation4 + $0x7f] sm:$0xff] %vm1674, %v1907
      %1913 = vst.msk [vmem:[#allocation4 + $0x87] sm:$0x3f] %vm1676, %v1909
      %1914 = vrot.lane.b32.xlu0 %v1900, 32
      %v1915 = vpop.permute.xlu0 %1914
      %1916 = vrot.lane.b32.xlu0 %v1901, 32
      %v1917 = vpop.permute.xlu0 %1916
      %1920 = vst.msk [vmem:[#allocation4 + $0x7e] sm:$0xff] %vm1684, %v1915
      %1921 = vst.msk [vmem:[#allocation4 + $0x86] sm:$0x3f] %vm1686, %v1917
      %1922 = vrot.lane.b32.xlu0 %v1900, 48
      %v1923 = vpop.permute.xlu0 %1922
      %1924 = vrot.lane.b32.xlu0 %v1901, 48
      %v1925 = vpop.permute.xlu0 %1924
      %1928 = vst.msk [vmem:[#allocation4 + $0x7d] sm:$0xff] %vm1694, %v1923
      %1929 = vst.msk [vmem:[#allocation4 + $0x85] sm:$0x3f] %vm1696, %v1925
      %1930 = vrot.lane.b32.xlu0 %v1900, 64
      %v1931 = vpop.permute.xlu0 %1930
      %1932 = vrot.lane.b32.xlu0 %v1901, 64
      %v1933 = vpop.permute.xlu0 %1932
      %1936 = vst.msk [vmem:[#allocation4 + $0x7c] sm:$0xff] %vm1704, %v1931
      %1937 = vst.msk [vmem:[#allocation4 + $0x84] sm:$0x3f] %vm1706, %v1933
      %v1938 = vld [vmem:[#allocation3 + $0xa8] sm:$0xff]
      %v1939 = vld [vmem:[#allocation3 + $0xb0] sm:$0x3f]
      %v1940 = vld [vmem:[#allocation3 + $0xb6] sm:$0xff]
      %v1941 = vld [vmem:[#allocation3 + $0xbe] sm:$0x3f]
      %v1942 = vmax.f32 %v1938, %v1940
      %v1943 = vmax.f32 %v1939, %v1941
      %v1944 = vadd.f32 %v1942, %v1657
      %v1945 = vadd.f32 %v1943, %v1657
      %v1946 = vmax.f32 %v1944, 0.0
      %v1947 = vmax.f32 %v1945, 0.0
      %1948 = vst.msk [vmem:[#allocation4 + $0x92] sm:$0xff] %vm1254, %v1946
      %1949 = vst.msk [vmem:[#allocation4 + $0x9a] sm:$0x3f] %vm1664, %v1947
      %1952 = vrot.lane.b32.xlu0 %v1946, 16
      %v1953 = vpop.permute.xlu0 %1952
      %1954 = vrot.lane.b32.xlu0 %v1947, 16
      %v1955 = vpop.permute.xlu0 %1954
      %1958 = vst.msk [vmem:[#allocation4 + $0x91] sm:$0xff] %vm1674, %v1953
      %1959 = vst.msk [vmem:[#allocation4 + $0x99] sm:$0x3f] %vm1676, %v1955
      %1960 = vrot.lane.b32.xlu0 %v1946, 32
      %v1961 = vpop.permute.xlu0 %1960
      %1962 = vrot.lane.b32.xlu0 %v1947, 32
      %v1963 = vpop.permute.xlu0 %1962
      %1966 = vst.msk [vmem:[#allocation4 + $0x90] sm:$0xff] %vm1684, %v1961
      %1967 = vst.msk [vmem:[#allocation4 + $0x98] sm:$0x3f] %vm1686, %v1963
      %1968 = vrot.lane.b32.xlu0 %v1946, 48
      %v1969 = vpop.permute.xlu0 %1968
      %1970 = vrot.lane.b32.xlu0 %v1947, 48
      %v1971 = vpop.permute.xlu0 %1970
      %1974 = vst.msk [vmem:[#allocation4 + $0x8f] sm:$0xff] %vm1694, %v1969
      %1975 = vst.msk [vmem:[#allocation4 + $0x97] sm:$0x3f] %vm1696, %v1971
      %1976 = vrot.lane.b32.xlu0 %v1946, 64
      %v1977 = vpop.permute.xlu0 %1976
      %1978 = vrot.lane.b32.xlu0 %v1947, 64
      %v1979 = vpop.permute.xlu0 %1978
      %1982 = vst.msk [vmem:[#allocation4 + $0x8e] sm:$0xff] %vm1704, %v1977
      %1983 = vst.msk [vmem:[#allocation4 + $0x96] sm:$0x3f] %vm1706, %v1979
      %v1984 = vld [vmem:[#allocation3 + $0xc4] sm:$0xff]
      %v1985 = vld [vmem:[#allocation3 + $0xcc] sm:$0x3f]
      %v1986 = vld [vmem:[#allocation3 + $0xd2] sm:$0xff]
      %v1987 = vld [vmem:[#allocation3 + $0xda] sm:$0x3f]
      %v1988 = vmax.f32 %v1984, %v1986
      %v1989 = vmax.f32 %v1985, %v1987
      %v1990 = vadd.f32 %v1988, %v1657
      %v1991 = vadd.f32 %v1989, %v1657
      %v1992 = vmax.f32 %v1990, 0.0
      %v1993 = vmax.f32 %v1991, 0.0
      %1994 = vst.msk [vmem:[#allocation4 + $0xa4] sm:$0xff] %vm1254, %v1992
      %1995 = vst.msk [vmem:[#allocation4 + $0xac] sm:$0x3f] %vm1664, %v1993
      %1998 = vrot.lane.b32.xlu0 %v1992, 16
      %v1999 = vpop.permute.xlu0 %1998
      %2000 = vrot.lane.b32.xlu0 %v1993, 16
      %v2001 = vpop.permute.xlu0 %2000
      %2004 = vst.msk [vmem:[#allocation4 + $0xa3] sm:$0xff] %vm1674, %v1999
      %2005 = vst.msk [vmem:[#allocation4 + $0xab] sm:$0x3f] %vm1676, %v2001
      %2006 = vrot.lane.b32.xlu0 %v1992, 32
      %v2007 = vpop.permute.xlu0 %2006
      %2008 = vrot.lane.b32.xlu0 %v1993, 32
      %v2009 = vpop.permute.xlu0 %2008
      %2012 = vst.msk [vmem:[#allocation4 + $0xa2] sm:$0xff] %vm1684, %v2007
      %2013 = vst.msk [vmem:[#allocation4 + $0xaa] sm:$0x3f] %vm1686, %v2009
      %2014 = vrot.lane.b32.xlu0 %v1992, 48
      %v2015 = vpop.permute.xlu0 %2014
      %2016 = vrot.lane.b32.xlu0 %v1993, 48
      %v2017 = vpop.permute.xlu0 %2016
      %2020 = vst.msk [vmem:[#allocation4 + $0xa1] sm:$0xff] %vm1694, %v2015
      %2021 = vst.msk [vmem:[#allocation4 + $0xa9] sm:$0x3f] %vm1696, %v2017
      %2022 = vrot.lane.b32.xlu0 %v1992, 64
      %v2023 = vpop.permute.xlu0 %2022
      %2024 = vrot.lane.b32.xlu0 %v1993, 64
      %v2025 = vpop.permute.xlu0 %2024
      %2028 = vst.msk [vmem:[#allocation4 + $0xa0] sm:$0xff] %vm1704, %v2023
      %2029 = vst.msk [vmem:[#allocation4 + $0xa8] sm:$0x3f] %vm1706, %v2025
      %v2030 = vld [vmem:[#allocation3 + $0xe0] sm:$0xff]
      %v2031 = vld [vmem:[#allocation3 + $0xe8] sm:$0x3f]
      %v2032 = vld [vmem:[#allocation3 + $0xee] sm:$0xff]
      %v2033 = vld [vmem:[#allocation3 + $0xf6] sm:$0x3f]
      %v2034 = vmax.f32 %v2030, %v2032
      %v2035 = vmax.f32 %v2031, %v2033
      %v2036 = vadd.f32 %v2034, %v1657
      %v2037 = vadd.f32 %v2035, %v1657
      %v2038 = vmax.f32 %v2036, 0.0
      %v2039 = vmax.f32 %v2037, 0.0
      %2040 = vst.msk [vmem:[#allocation4 + $0xb6] sm:$0xff] %vm1254, %v2038
      %2041 = vst.msk [vmem:[#allocation4 + $0xbe] sm:$0x3f] %vm1664, %v2039
      %2044 = vrot.lane.b32.xlu0 %v2038, 16
      %v2045 = vpop.permute.xlu0 %2044
      %2046 = vrot.lane.b32.xlu0 %v2039, 16
      %v2047 = vpop.permute.xlu0 %2046
      %2050 = vst.msk [vmem:[#allocation4 + $0xb5] sm:$0xff] %vm1674, %v2045
      %2051 = vst.msk [vmem:[#allocation4 + $0xbd] sm:$0x3f] %vm1676, %v2047
      %2052 = vrot.lane.b32.xlu0 %v2038, 32
      %v2053 = vpop.permute.xlu0 %2052
      %2054 = vrot.lane.b32.xlu0 %v2039, 32
      %v2055 = vpop.permute.xlu0 %2054
      %2058 = vst.msk [vmem:[#allocation4 + $0xb4] sm:$0xff] %vm1684, %v2053
      %2059 = vst.msk [vmem:[#allocation4 + $0xbc] sm:$0x3f] %vm1686, %v2055
      %2060 = vrot.lane.b32.xlu0 %v2038, 48
      %v2061 = vpop.permute.xlu0 %2060
      %2062 = vrot.lane.b32.xlu0 %v2039, 48
      %v2063 = vpop.permute.xlu0 %2062
      %2066 = vst.msk [vmem:[#allocation4 + $0xb3] sm:$0xff] %vm1694, %v2061
      %2067 = vst.msk [vmem:[#allocation4 + $0xbb] sm:$0x3f] %vm1696, %v2063
      %2068 = vrot.lane.b32.xlu0 %v2038, 64
      %v2069 = vpop.permute.xlu0 %2068
      %2070 = vrot.lane.b32.xlu0 %v2039, 64
      %v2071 = vpop.permute.xlu0 %2070
      %2074 = vst.msk [vmem:[#allocation4 + $0xb2] sm:$0xff] %vm1704, %v2069
      %2075 = vst.msk [vmem:[#allocation4 + $0xba] sm:$0x3f] %vm1706, %v2071
      %v2076 = vld [vmem:[#allocation3 + $0xfc] sm:$0xff]
      %v2077 = vld [vmem:[#allocation3 + $0x104] sm:$0x3f]
      %v2078 = vld [vmem:[#allocation3 + $0x10a] sm:$0xff]
      %v2079 = vld [vmem:[#allocation3 + $0x112] sm:$0x3f]
      %v2080 = vmax.f32 %v2076, %v2078
      %v2081 = vmax.f32 %v2077, %v2079
      %v2082 = vadd.f32 %v2080, %v1657
      %v2083 = vadd.f32 %v2081, %v1657
      %v2084 = vmax.f32 %v2082, 0.0
      %v2085 = vmax.f32 %v2083, 0.0
      %2086 = vst.msk [vmem:[#allocation4 + $0xc8] sm:$0xff] %vm1254, %v2084
      %2087 = vst.msk [vmem:[#allocation4 + $0xd0] sm:$0x3f] %vm1664, %v2085
      %2090 = vrot.lane.b32.xlu0 %v2084, 16
      %v2091 = vpop.permute.xlu0 %2090
      %2092 = vrot.lane.b32.xlu0 %v2085, 16
      %v2093 = vpop.permute.xlu0 %2092
      %2096 = vst.msk [vmem:[#allocation4 + $0xc7] sm:$0xff] %vm1674, %v2091
      %2097 = vst.msk [vmem:[#allocation4 + $0xcf] sm:$0x3f] %vm1676, %v2093
      %2098 = vrot.lane.b32.xlu0 %v2084, 32
      %v2099 = vpop.permute.xlu0 %2098
      %2100 = vrot.lane.b32.xlu0 %v2085, 32
      %v2101 = vpop.permute.xlu0 %2100
      %2104 = vst.msk [vmem:[#allocation4 + $0xc6] sm:$0xff] %vm1684, %v2099
      %2105 = vst.msk [vmem:[#allocation4 + $0xce] sm:$0x3f] %vm1686, %v2101
      %2106 = vrot.lane.b32.xlu0 %v2084, 48
      %v2107 = vpop.permute.xlu0 %2106
      %2108 = vrot.lane.b32.xlu0 %v2085, 48
      %v2109 = vpop.permute.xlu0 %2108
      %2112 = vst.msk [vmem:[#allocation4 + $0xc5] sm:$0xff] %vm1694, %v2107
      %2113 = vst.msk [vmem:[#allocation4 + $0xcd] sm:$0x3f] %vm1696, %v2109
      %2114 = vrot.lane.b32.xlu0 %v2084, 64
      %v2115 = vpop.permute.xlu0 %2114
      %2116 = vrot.lane.b32.xlu0 %v2085, 64
      %v2117 = vpop.permute.xlu0 %2116
      %2120 = vst.msk [vmem:[#allocation4 + $0xc4] sm:$0xff] %vm1704, %v2115
      %2121 = vst.msk [vmem:[#allocation4 + $0xcc] sm:$0x3f] %vm1706, %v2117
      %v2122 = vld [vmem:[#allocation3 + $0x118] sm:$0xff]
      %v2123 = vld [vmem:[#allocation3 + $0x120] sm:$0x3f]
      %v2124 = vld [vmem:[#allocation3 + $0x126] sm:$0xff]
      %v2125 = vld [vmem:[#allocation3 + $0x12e] sm:$0x3f]
      %v2126 = vmax.f32 %v2122, %v2124
      %v2127 = vmax.f32 %v2123, %v2125
      %v2128 = vadd.f32 %v2126, %v1657
      %v2129 = vadd.f32 %v2127, %v1657
      %v2130 = vmax.f32 %v2128, 0.0
      %v2131 = vmax.f32 %v2129, 0.0
      %2132 = vst.msk [vmem:[#allocation4 + $0xda] sm:$0xff] %vm1254, %v2130
      %2133 = vst.msk [vmem:[#allocation4 + $0xe2] sm:$0x3f] %vm1664, %v2131
      %2136 = vrot.lane.b32.xlu0 %v2130, 16
      %v2137 = vpop.permute.xlu0 %2136
      %2138 = vrot.lane.b32.xlu0 %v2131, 16
      %v2139 = vpop.permute.xlu0 %2138
      %2142 = vst.msk [vmem:[#allocation4 + $0xd9] sm:$0xff] %vm1674, %v2137
      %2143 = vst.msk [vmem:[#allocation4 + $0xe1] sm:$0x3f] %vm1676, %v2139
      %2144 = vrot.lane.b32.xlu0 %v2130, 32
      %v2145 = vpop.permute.xlu0 %2144
      %2146 = vrot.lane.b32.xlu0 %v2131, 32
      %v2147 = vpop.permute.xlu0 %2146
      %2150 = vst.msk [vmem:[#allocation4 + $0xd8] sm:$0xff] %vm1684, %v2145
      %2151 = vst.msk [vmem:[#allocation4 + $0xe0] sm:$0x3f] %vm1686, %v2147
      %2152 = vrot.lane.b32.xlu0 %v2130, 48
      %v2153 = vpop.permute.xlu0 %2152
      %2154 = vrot.lane.b32.xlu0 %v2131, 48
      %v2155 = vpop.permute.xlu0 %2154
      %2158 = vst.msk [vmem:[#allocation4 + $0xd7] sm:$0xff] %vm1694, %v2153
      %2159 = vst.msk [vmem:[#allocation4 + $0xdf] sm:$0x3f] %vm1696, %v2155
      %2160 = vrot.lane.b32.xlu0 %v2130, 64
      %v2161 = vpop.permute.xlu0 %2160
      %2162 = vrot.lane.b32.xlu0 %v2131, 64
      %v2163 = vpop.permute.xlu0 %2162
      %2166 = vst.msk [vmem:[#allocation4 + $0xd6] sm:$0xff] %vm1704, %v2161
      %2167 = vst.msk [vmem:[#allocation4 + $0xde] sm:$0x3f] %vm1706, %v2163
      %v2168 = vld [vmem:[#allocation3 + $0x134] sm:$0xff]
      %v2169 = vld [vmem:[#allocation3 + $0x13c] sm:$0x3f]
      %v2170 = vld [vmem:[#allocation3 + $0x142] sm:$0xff]
      %v2171 = vld [vmem:[#allocation3 + $0x14a] sm:$0x3f]
      %v2172 = vmax.f32 %v2168, %v2170
      %v2173 = vmax.f32 %v2169, %v2171
      %v2174 = vadd.f32 %v2172, %v1657
      %v2175 = vadd.f32 %v2173, %v1657
      %v2176 = vmax.f32 %v2174, 0.0
      %v2177 = vmax.f32 %v2175, 0.0
      %2178 = vst.msk [vmem:[#allocation4 + $0xec] sm:$0xff] %vm1254, %v2176
      %2179 = vst.msk [vmem:[#allocation4 + $0xf4] sm:$0x3f] %vm1664, %v2177
      %2182 = vrot.lane.b32.xlu0 %v2176, 16
      %v2183 = vpop.permute.xlu0 %2182
      %2184 = vrot.lane.b32.xlu0 %v2177, 16
      %v2185 = vpop.permute.xlu0 %2184
      %2188 = vst.msk [vmem:[#allocation4 + $0xeb] sm:$0xff] %vm1674, %v2183
      %2189 = vst.msk [vmem:[#allocation4 + $0xf3] sm:$0x3f] %vm1676, %v2185
      %2190 = vrot.lane.b32.xlu0 %v2176, 32
      %v2191 = vpop.permute.xlu0 %2190
      %2192 = vrot.lane.b32.xlu0 %v2177, 32
      %v2193 = vpop.permute.xlu0 %2192
      %2196 = vst.msk [vmem:[#allocation4 + $0xea] sm:$0xff] %vm1684, %v2191
      %2197 = vst.msk [vmem:[#allocation4 + $0xf2] sm:$0x3f] %vm1686, %v2193
      %2198 = vrot.lane.b32.xlu0 %v2176, 48
      %v2199 = vpop.permute.xlu0 %2198
      %2200 = vrot.lane.b32.xlu0 %v2177, 48
      %v2201 = vpop.permute.xlu0 %2200
      %2204 = vst.msk [vmem:[#allocation4 + $0xe9] sm:$0xff] %vm1694, %v2199
      %2205 = vst.msk [vmem:[#allocation4 + $0xf1] sm:$0x3f] %vm1696, %v2201
      %2206 = vrot.lane.b32.xlu0 %v2176, 64
      %v2207 = vpop.permute.xlu0 %2206
      %2208 = vrot.lane.b32.xlu0 %v2177, 64
      %v2209 = vpop.permute.xlu0 %2208
      %2212 = vst.msk [vmem:[#allocation4 + $0xe8] sm:$0xff] %vm1704, %v2207
      %2213 = vst.msk [vmem:[#allocation4 + $0xf0] sm:$0x3f] %vm1706, %v2209
      %v2214 = vld [vmem:[#allocation3 + $0x150] sm:$0xff]
      %v2215 = vld [vmem:[#allocation3 + $0x158] sm:$0x3f]
      %v2216 = vld [vmem:[#allocation3 + $0x15e] sm:$0xff]
      %v2217 = vld [vmem:[#allocation3 + $0x166] sm:$0x3f]
      %v2218 = vmax.f32 %v2214, %v2216
      %v2219 = vmax.f32 %v2215, %v2217
      %v2220 = vadd.f32 %v2218, %v1657
      %v2221 = vadd.f32 %v2219, %v1657
      %v2222 = vmax.f32 %v2220, 0.0
      %v2223 = vmax.f32 %v2221, 0.0
      %2224 = vst.msk [vmem:[#allocation4 + $0xfe] sm:$0xff] %vm1254, %v2222
      %2225 = vst.msk [vmem:[#allocation4 + $0x106] sm:$0x3f] %vm1664, %v2223
      %2228 = vrot.lane.b32.xlu0 %v2222, 16
      %v2229 = vpop.permute.xlu0 %2228
      %2230 = vrot.lane.b32.xlu0 %v2223, 16
      %v2231 = vpop.permute.xlu0 %2230
      %2234 = vst.msk [vmem:[#allocation4 + $0xfd] sm:$0xff] %vm1674, %v2229
      %2235 = vst.msk [vmem:[#allocation4 + $0x105] sm:$0x3f] %vm1676, %v2231
      %2236 = vrot.lane.b32.xlu0 %v2222, 32
      %v2237 = vpop.permute.xlu0 %2236
      %2238 = vrot.lane.b32.xlu0 %v2223, 32
      %v2239 = vpop.permute.xlu0 %2238
      %2242 = vst.msk [vmem:[#allocation4 + $0xfc] sm:$0xff] %vm1684, %v2237
      %2243 = vst.msk [vmem:[#allocation4 + $0x104] sm:$0x3f] %vm1686, %v2239
      %2244 = vrot.lane.b32.xlu0 %v2222, 48
      %v2245 = vpop.permute.xlu0 %2244
      %2246 = vrot.lane.b32.xlu0 %v2223, 48
      %v2247 = vpop.permute.xlu0 %2246
      %2250 = vst.msk [vmem:[#allocation4 + $0xfb] sm:$0xff] %vm1694, %v2245
      %2251 = vst.msk [vmem:[#allocation4 + $0x103] sm:$0x3f] %vm1696, %v2247
      %2252 = vrot.lane.b32.xlu0 %v2222, 64
      %v2253 = vpop.permute.xlu0 %2252
      %2254 = vrot.lane.b32.xlu0 %v2223, 64
      %v2255 = vpop.permute.xlu0 %2254
      %2258 = vst.msk [vmem:[#allocation4 + $0xfa] sm:$0xff] %vm1704, %v2253
      %2259 = vst.msk [vmem:[#allocation4 + $0x102] sm:$0x3f] %vm1706, %v2255
      %v2260 = vld [vmem:[#allocation3 + $0x16c] sm:$0xff]
      %v2261 = vld [vmem:[#allocation3 + $0x174] sm:$0x3f]
      %v2262 = vld [vmem:[#allocation3 + $0x17a] sm:$0xff]
      %v2263 = vld [vmem:[#allocation3 + $0x182] sm:$0x3f]
      %v2264 = vmax.f32 %v2260, %v2262
      %v2265 = vmax.f32 %v2261, %v2263
      %v2266 = vadd.f32 %v2264, %v1657
      %v2267 = vadd.f32 %v2265, %v1657
      %v2268 = vmax.f32 %v2266, 0.0
      %v2269 = vmax.f32 %v2267, 0.0
      %2270 = vst.msk [vmem:[#allocation4 + $0x110] sm:$0xff] %vm1254, %v2268
      %2271 = vst.msk [vmem:[#allocation4 + $0x118] sm:$0x3f] %vm1664, %v2269
      %2274 = vrot.lane.b32.xlu0 %v2268, 16
      %v2275 = vpop.permute.xlu0 %2274
      %2276 = vrot.lane.b32.xlu0 %v2269, 16
      %v2277 = vpop.permute.xlu0 %2276
      %2280 = vst.msk [vmem:[#allocation4 + $0x10f] sm:$0xff] %vm1674, %v2275
      %2281 = vst.msk [vmem:[#allocation4 + $0x117] sm:$0x3f] %vm1676, %v2277
      %2282 = vrot.lane.b32.xlu0 %v2268, 32
      %v2283 = vpop.permute.xlu0 %2282
      %2284 = vrot.lane.b32.xlu0 %v2269, 32
      %v2285 = vpop.permute.xlu0 %2284
      %2288 = vst.msk [vmem:[#allocation4 + $0x10e] sm:$0xff] %vm1684, %v2283
      %2289 = vst.msk [vmem:[#allocation4 + $0x116] sm:$0x3f] %vm1686, %v2285
      %2290 = vrot.lane.b32.xlu0 %v2268, 48
      %v2291 = vpop.permute.xlu0 %2290
      %2292 = vrot.lane.b32.xlu0 %v2269, 48
      %v2293 = vpop.permute.xlu0 %2292
      %2296 = vst.msk [vmem:[#allocation4 + $0x10d] sm:$0xff] %vm1694, %v2291
      %2297 = vst.msk [vmem:[#allocation4 + $0x115] sm:$0x3f] %vm1696, %v2293
      %2298 = vrot.lane.b32.xlu0 %v2268, 64
      %v2299 = vpop.permute.xlu0 %2298
      %2300 = vrot.lane.b32.xlu0 %v2269, 64
      %v2301 = vpop.permute.xlu0 %2300
      %2304 = vst.msk [vmem:[#allocation4 + $0x10c] sm:$0xff] %vm1704, %v2299
      %2305 = vst.msk [vmem:[#allocation4 + $0x114] sm:$0x3f] %vm1706, %v2301
      %v2306 = vld [vmem:[#allocation4] sm:$0xff]
      %v2307 = vld [vmem:[#allocation4 + $0x8] sm:$0xff]
      %v2308 = vld [vmem:[#allocation4 + $0x10] sm:$0xff]
      %v2309 = vld [vmem:[#allocation4 + $0x18] sm:$0xff]
      %v2310 = vld [vmem:[#allocation4 + $0x20] sm:$0xff]
      %v2311 = vld [vmem:[#allocation4 + $0x28] sm:$0xff]
      %v2312 = vld [vmem:[#allocation4 + $0x30] sm:$0xff]
      %v2313 = vld [vmem:[#allocation4 + $0x38] sm:$0xff]
      %v2314 = vld [vmem:[#allocation4 + $0x40] sm:$0xff]
      %v2315 = vld [vmem:[#allocation4 + $0x48] sm:$0xff]
      %v2316 = vld [vmem:[#allocation4 + $0x50] sm:$0xff]
      %v2317 = vld [vmem:[#allocation4 + $0x58] sm:$0xff]
      %v2318 = vld [vmem:[#allocation4 + $0x60] sm:$0xff]
      %v2319 = vld [vmem:[#allocation4 + $0x68] sm:$0xff]
      %v2320 = vld [vmem:[#allocation4 + $0x70] sm:$0xff]
      %v2321 = vld [vmem:[#allocation4 + $0x78] sm:$0xff]
      %v2322 = vld [vmem:[#allocation4 + $0x80] sm:$0xff]
      %v2323 = vld [vmem:[#allocation4 + $0x88] sm:$0xff]
      %v2324 = vld [vmem:[#allocation4 + $0x90] sm:$0xff]
      %v2325 = vld [vmem:[#allocation4 + $0x98] sm:$0xff]
      %v2326 = vld [vmem:[#allocation4 + $0xa0] sm:$0xff]
      %v2327 = vld [vmem:[#allocation4 + $0xa8] sm:$0xff]
      %v2328 = vld [vmem:[#allocation4 + $0xb0] sm:$0xff]
      %v2329 = vld [vmem:[#allocation4 + $0xb8] sm:$0xff]
      %v2330 = vld [vmem:[#allocation4 + $0xc0] sm:$0xff]
      %v2331 = vld [vmem:[#allocation4 + $0xc8] sm:$0xff]
      %v2332 = vld [vmem:[#allocation4 + $0xd0] sm:$0xff]
      %v2333 = vld [vmem:[#allocation4 + $0xd8] sm:$0xff]
      %v2334 = vld [vmem:[#allocation4 + $0xe0] sm:$0xff]
      %v2335 = vld [vmem:[#allocation4 + $0xe8] sm:$0xff]
      %v2336 = vld [vmem:[#allocation4 + $0xf0] sm:$0xff]
      %v2337 = vld [vmem:[#allocation4 + $0xf8] sm:$0xf]
      %v2338 = vpack.c.bf16 %v2307, %v2306
      %v2339 = vpack.c.bf16 %v2309, %v2308
      %v2340 = vpack.c.bf16 %v2311, %v2310
      %v2341 = vpack.c.bf16 %v2313, %v2312
      %v2342 = vpack.c.bf16 %v2315, %v2314
      %v2343 = vpack.c.bf16 %v2317, %v2316
      %v2344 = vpack.c.bf16 %v2319, %v2318
      %v2345 = vpack.c.bf16 %v2321, %v2320
      %v2346 = vpack.c.bf16 %v2323, %v2322
      %v2347 = vpack.c.bf16 %v2325, %v2324
      %v2348 = vpack.c.bf16 %v2327, %v2326
      %v2349 = vpack.c.bf16 %v2329, %v2328
      %v2350 = vpack.c.bf16 %v2331, %v2330
      %v2351 = vpack.c.bf16 %v2333, %v2332
      %v2352 = vpack.c.bf16 %v2335, %v2334
      %v2353 = vpack.c.bf16 %v2337, %v2336
      %v2354 = vld [vmem:[%s3] sm:$0xf]
      %v2355 = vld [vmem:[%s3 + $0x4] sm:$0xf]
      %v2356 = vld [vmem:[%s3 + $0x8] sm:$0xf]
      %v2357 = vld [vmem:[%s3 + $0xc] sm:$0xf]
      %v2358 = vld [vmem:[%s3 + $0x10] sm:$0xf]
      %v2359 = vld [vmem:[%s3 + $0x14] sm:$0xf]
      %v2360 = vld [vmem:[%s3 + $0x18] sm:$0xf]
      %v2361 = vld [vmem:[%s3 + $0x1c] sm:$0xf]
      %v2362 = vld [vmem:[%s3 + $0x20] sm:$0xf]
      %v2363 = vld [vmem:[%s3 + $0x24] sm:$0xf]
      %v2374 = vunpack.c.l.b16 %v2354
      %v2375 = vunpack.c.l.b16 %v2355
      %v2376 = vunpack.c.l.b16 %v2356
      %v2377 = vunpack.c.l.b16 %v2357
      %v2378 = vunpack.c.l.b16 %v2358
      %v2379 = vunpack.c.l.b16 %v2359
      %v2380 = vunpack.c.l.b16 %v2360
      %v2381 = vunpack.c.l.b16 %v2361
      %v2382 = vunpack.c.l.b16 %v2362
      %v2383 = vunpack.c.l.b16 %v2363
      %v2384 = vpack.c.b16 %v2375, %v2374
      %v2385 = vpack.c.b16 %v2377, %v2376
      %v2386 = vpack.c.b16 %v2379, %v2378
      %v2387 = vpack.c.b16 %v2381, %v2380
      %v2388 = vpack.c.b16 %v2383, %v2382
      %v2395 = vsel %vm280, %v2338, 0
      %v2398 = vsel %vm280, %v2339, 0
      %v2401 = vsel %vm280, %v2340, 0
      %v2404 = vsel %vm280, %v2341, 0
      %v2407 = vsel %vm280, %v2342, 0
      %v2410 = vsel %vm280, %v2343, 0
      %v2413 = vsel %vm280, %v2344, 0
      %v2416 = vsel %vm280, %v2345, 0
      %v2419 = vsel %vm280, %v2346, 0
      %v2422 = vsel %vm280, %v2347, 0
      %v2425 = vsel %vm280, %v2348, 0
      %v2428 = vsel %vm280, %v2349, 0
      %v2431 = vsel %vm280, %v2350, 0
      %v2434 = vsel %vm280, %v2351, 0
      %v2437 = vsel %vm280, %v2352, 0
      %v2440 = vsel %vm280, %v2353, 0
      %2442 = vmatprep.subr.bf16.mxu0 0
      %2443 = vmatpush1.bf16.msra.mxu0 %v2384
      %2444 = vmatprep.subr.bf16.mxu0 0
      %2445 = vmatpush1.bf16.msra.mxu0 %v2385
      %2446 = vmatprep.subr.bf16.mxu0 0
      %2447 = vmatpush1.bf16.msra.mxu0 %v2386
      %2448 = vmatprep.subr.bf16.mxu0 0
      %2449 = vmatpush1.bf16.msra.mxu0 %v2387
      %2450 = vmatprep.subr.bf16.mxu0 0
      %2451 = vmatpush1.bf16.msra.mxu0 %v2388
      %2452 = vmatprep.subr.bf16.mxu0 0
      %2453 = vmatpush1.bf16.msra.mxu0 0
      %2454 = vmatprep.subr.bf16.mxu0 0
      %2455 = vmatpush1.bf16.msra.mxu0 0
      %2456 = vmatprep.subr.bf16.mxu0 0
      %2457 = vmatpush1.bf16.msra.mxu0 0
      %2458 = vmatprep.subr.bf16.mxu0 0
      %2459 = vmatpush1.bf16.msra.mxu0 0
      %2460 = vmatprep.subr.bf16.mxu0 0
      %2461 = vmatpush1.bf16.msra.mxu0 0
      %2462 = vmatprep.subr.bf16.mxu0 0
      %2463 = vmatpush1.bf16.msra.mxu0 0
      %2464 = vmatprep.subr.bf16.mxu0 0
      %2465 = vmatpush1.bf16.msra.mxu0 0
      %2466 = vmatprep.subr.bf16.mxu0 0
      %2467 = vmatpush1.bf16.msra.mxu0 0
      %2468 = vmatprep.subr.bf16.mxu0 0
      %2469 = vmatpush1.bf16.msra.mxu0 0
      %2470 = vmatprep.subr.bf16.mxu0 0
      %2471 = vmatpush1.bf16.msra.mxu0 0
      %2472 = vmatprep.subr.bf16.mxu0 0
      %2473 = vmatpush1.bf16.msra.mxu0 0
      %2474 = vmatprep.mubr.bf16.mxu0 0
      %2475 = vmatmul.mubr.bf16.gmra.mrb[0].mxu0 %v2395
      %v2476 = vpop.f32.mrb[0].mxu0
      %v2477 = vadd.f32 0.0, %v2476
      %v2478 = vpop.f32.mrb[0].mxu0
      %v2479 = vpop.f32.mrb[0].mxu0
      %v2480 = vadd.f32 0.0, %v2479
      %v2481 = vpop.f32.mrb[0].mxu0
      %2482 = vmatprep.mubr.bf16.mxu0 0
      %2483 = vmatmul.mubr.bf16.gmra.mrb[0].mxu0 %v2398
      %v2484 = vpop.f32.mrb[0].mxu0
      %v2485 = vadd.f32 0.0, %v2484
      %v2486 = vpop.f32.mrb[0].mxu0
      %v2487 = vpop.f32.mrb[0].mxu0
      %v2488 = vadd.f32 0.0, %v2487
      %v2489 = vpop.f32.mrb[0].mxu0
      %2490 = vmatprep.mubr.bf16.mxu0 0
      %2491 = vmatmul.mubr.bf16.gmra.mrb[0].mxu0 %v2401
      %v2492 = vpop.f32.mrb[0].mxu0
      %v2493 = vadd.f32 0.0, %v2492
      %v2494 = vpop.f32.mrb[0].mxu0
      %v2495 = vpop.f32.mrb[0].mxu0
      %v2496 = vadd.f32 0.0, %v2495
      %v2497 = vpop.f32.mrb[0].mxu0
      %2498 = vmatprep.mubr.bf16.mxu0 0
      %2499 = vmatmul.mubr.bf16.gmra.mrb[0].mxu0 %v2404
      %v2500 = vpop.f32.mrb[0].mxu0
      %v2501 = vadd.f32 0.0, %v2500
      %v2502 = vpop.f32.mrb[0].mxu0
      %v2503 = vpop.f32.mrb[0].mxu0
      %v2504 = vadd.f32 0.0, %v2503
      %v2505 = vpop.f32.mrb[0].mxu0
      %2506 = vmatprep.mubr.bf16.mxu0 0
      %2507 = vmatmul.mubr.bf16.gmra.mrb[0].mxu0 %v2407
      %v2508 = vpop.f32.mrb[0].mxu0
      %v2509 = vadd.f32 0.0, %v2508
      %v2510 = vpop.f32.mrb[0].mxu0
      %v2511 = vpop.f32.mrb[0].mxu0
      %v2512 = vadd.f32 0.0, %v2511
      %v2513 = vpop.f32.mrb[0].mxu0
      %2514 = vmatprep.mubr.bf16.mxu0 0
      %2515 = vmatmul.mubr.bf16.gmra.mrb[0].mxu0 %v2410
      %v2516 = vpop.f32.mrb[0].mxu0
      %v2517 = vadd.f32 0.0, %v2516
      %v2518 = vpop.f32.mrb[0].mxu0
      %v2519 = vpop.f32.mrb[0].mxu0
      %v2520 = vadd.f32 0.0, %v2519
      %v2521 = vpop.f32.mrb[0].mxu0
      %2522 = vmatprep.mubr.bf16.mxu0 0
      %2523 = vmatmul.mubr.bf16.gmra.mrb[0].mxu0 %v2413
      %v2524 = vpop.f32.mrb[0].mxu0
      %v2525 = vadd.f32 0.0, %v2524
      %v2526 = vpop.f32.mrb[0].mxu0
      %v2527 = vpop.f32.mrb[0].mxu0
      %v2528 = vadd.f32 0.0, %v2527
      %v2529 = vpop.f32.mrb[0].mxu0
      %2530 = vmatprep.mubr.bf16.mxu0 0
      %2531 = vmatmul.mubr.bf16.gmra.mrb[0].mxu0 %v2416
      %v2532 = vpop.f32.mrb[0].mxu0
      %v2533 = vadd.f32 0.0, %v2532
      %v2534 = vpop.f32.mrb[0].mxu0
      %v2535 = vpop.f32.mrb[0].mxu0
      %v2536 = vadd.f32 0.0, %v2535
      %v2537 = vpop.f32.mrb[0].mxu0
      %2538 = vmatprep.mubr.bf16.mxu0 0
      %2539 = vmatmul.mubr.bf16.gmra.mrb[0].mxu0 %v2419
      %v2540 = vpop.f32.mrb[0].mxu0
      %v2541 = vadd.f32 0.0, %v2540
      %v2542 = vpop.f32.mrb[0].mxu0
      %v2543 = vpop.f32.mrb[0].mxu0
      %v2544 = vadd.f32 0.0, %v2543
      %v2545 = vpop.f32.mrb[0].mxu0
      %2546 = vmatprep.mubr.bf16.mxu0 0
      %2547 = vmatmul.mubr.bf16.gmra.mrb[0].mxu0 %v2422
      %v2548 = vpop.f32.mrb[0].mxu0
      %v2549 = vadd.f32 0.0, %v2548
      %v2550 = vpop.f32.mrb[0].mxu0
      %v2551 = vpop.f32.mrb[0].mxu0
      %v2552 = vadd.f32 0.0, %v2551
      %v2553 = vpop.f32.mrb[0].mxu0
      %2554 = vmatprep.mubr.bf16.mxu0 0
      %2555 = vmatmul.mubr.bf16.gmra.mrb[0].mxu0 %v2425
      %v2556 = vpop.f32.mrb[0].mxu0
      %v2557 = vadd.f32 0.0, %v2556
      %v2558 = vpop.f32.mrb[0].mxu0
      %v2559 = vpop.f32.mrb[0].mxu0
      %v2560 = vadd.f32 0.0, %v2559
      %v2561 = vpop.f32.mrb[0].mxu0
      %2562 = vmatprep.mubr.bf16.mxu0 0
      %2563 = vmatmul.mubr.bf16.gmra.mrb[0].mxu0 %v2428
      %v2564 = vpop.f32.mrb[0].mxu0
      %v2565 = vadd.f32 0.0, %v2564
      %v2566 = vpop.f32.mrb[0].mxu0
      %v2567 = vpop.f32.mrb[0].mxu0
      %v2568 = vadd.f32 0.0, %v2567
      %v2569 = vpop.f32.mrb[0].mxu0
      %2570 = vmatprep.mubr.bf16.mxu0 0
      %2571 = vmatmul.mubr.bf16.gmra.mrb[0].mxu0 %v2431
      %v2572 = vpop.f32.mrb[0].mxu0
      %v2573 = vadd.f32 0.0, %v2572
      %v2574 = vpop.f32.mrb[0].mxu0
      %v2575 = vpop.f32.mrb[0].mxu0
      %v2576 = vadd.f32 0.0, %v2575
      %v2577 = vpop.f32.mrb[0].mxu0
      %2578 = vmatprep.mubr.bf16.mxu0 0
      %2579 = vmatmul.mubr.bf16.gmra.mrb[0].mxu0 %v2434
      %v2580 = vpop.f32.mrb[0].mxu0
      %v2581 = vadd.f32 0.0, %v2580
      %v2582 = vpop.f32.mrb[0].mxu0
      %v2583 = vpop.f32.mrb[0].mxu0
      %v2584 = vadd.f32 0.0, %v2583
      %v2585 = vpop.f32.mrb[0].mxu0
      %2586 = vmatprep.mubr.bf16.mxu0 0
      %2587 = vmatmul.mubr.bf16.gmra.mrb[0].mxu0 %v2437
      %v2588 = vpop.f32.mrb[0].mxu0
      %v2589 = vadd.f32 0.0, %v2588
      %v2590 = vpop.f32.mrb[0].mxu0
      %v2591 = vpop.f32.mrb[0].mxu0
      %v2592 = vadd.f32 0.0, %v2591
      %v2593 = vpop.f32.mrb[0].mxu0
      %2594 = vmatprep.mubr.bf16.mxu0 0
      %2595 = vmatmul.mubr.bf16.gmra.mrb[0].mxu0 %v2440
      %v2596 = vpop.f32.mrb[0].mxu0
      %v2597 = vadd.f32 0.0, %v2596
      %v2598 = vpop.f32.mrb[0].mxu0
      %v2599 = vpop.f32.mrb[0].mxu0
      %v2600 = vadd.f32 0.0, %v2599
      %v2601 = vpop.f32.mrb[0].mxu0
      %2602 = vdwg.mxu0
      %2603 = vst.msk [vmem:[#allocation5] sm:$0xff] %vm681, %v2477
      %2604 = vst.msk [vmem:[#allocation5 + $0x8] sm:$0xff] %vm681, %v2480
      %2605 = vst.msk [vmem:[#allocation5 + $0x10] sm:$0xff] %vm681, %v2485
      %2606 = vst.msk [vmem:[#allocation5 + $0x18] sm:$0xff] %vm681, %v2488
      %2607 = vst.msk [vmem:[#allocation5 + $0x20] sm:$0xff] %vm681, %v2493
      %2608 = vst.msk [vmem:[#allocation5 + $0x28] sm:$0xff] %vm681, %v2496
      %2609 = vst.msk [vmem:[#allocation5 + $0x30] sm:$0xff] %vm681, %v2501
      %2610 = vst.msk [vmem:[#allocation5 + $0x38] sm:$0xff] %vm681, %v2504
      %2611 = vst.msk [vmem:[#allocation5 + $0x40] sm:$0xff] %vm681, %v2509
      %2612 = vst.msk [vmem:[#allocation5 + $0x48] sm:$0xff] %vm681, %v2512
      %2613 = vst.msk [vmem:[#allocation5 + $0x50] sm:$0xff] %vm681, %v2517
      %2614 = vst.msk [vmem:[#allocation5 + $0x58] sm:$0xff] %vm681, %v2520
      %2615 = vst.msk [vmem:[#allocation5 + $0x60] sm:$0xff] %vm681, %v2525
      %2616 = vst.msk [vmem:[#allocation5 + $0x68] sm:$0xff] %vm681, %v2528
      %2617 = vst.msk [vmem:[#allocation5 + $0x70] sm:$0xff] %vm681, %v2533
      %2618 = vst.msk [vmem:[#allocation5 + $0x78] sm:$0xff] %vm681, %v2536
      %2619 = vst.msk [vmem:[#allocation5 + $0x80] sm:$0xff] %vm681, %v2541
      %2620 = vst.msk [vmem:[#allocation5 + $0x88] sm:$0xff] %vm681, %v2544
      %2621 = vst.msk [vmem:[#allocation5 + $0x90] sm:$0xff] %vm681, %v2549
      %2622 = vst.msk [vmem:[#allocation5 + $0x98] sm:$0xff] %vm681, %v2552
      %2623 = vst.msk [vmem:[#allocation5 + $0xa0] sm:$0xff] %vm681, %v2557
      %2624 = vst.msk [vmem:[#allocation5 + $0xa8] sm:$0xff] %vm681, %v2560
      %2625 = vst.msk [vmem:[#allocation5 + $0xb0] sm:$0xff] %vm681, %v2565
      %2626 = vst.msk [vmem:[#allocation5 + $0xb8] sm:$0xff] %vm681, %v2568
      %2627 = vst.msk [vmem:[#allocation5 + $0xc0] sm:$0xff] %vm681, %v2573
      %2628 = vst.msk [vmem:[#allocation5 + $0xc8] sm:$0xff] %vm681, %v2576
      %2629 = vst.msk [vmem:[#allocation5 + $0xd0] sm:$0xff] %vm681, %v2581
      %2630 = vst.msk [vmem:[#allocation5 + $0xd8] sm:$0xff] %vm681, %v2584
      %2631 = vst.msk [vmem:[#allocation5 + $0xe0] sm:$0xff] %vm681, %v2589
      %2632 = vst.msk [vmem:[#allocation5 + $0xe8] sm:$0xff] %vm681, %v2592
      %2633 = vst.msk [vmem:[#allocation5 + $0xf0] sm:$0xff] %vm681, %v2597
      %vm2634 = vcmask 257024
      %2635 = vst.msk [vmem:[#allocation5 + $0xf8] sm:$0xf] %vm2634, %v2600
      %v2636 = vld [vmem:[#allocation4 + $0x12] sm:$0xff]
      %v2637 = vld [vmem:[#allocation4 + $0x1a] sm:$0xff]
      %v2638 = vld [vmem:[#allocation4 + $0x22] sm:$0xff]
      %v2639 = vld [vmem:[#allocation4 + $0x2a] sm:$0xff]
      %v2640 = vld [vmem:[#allocation4 + $0x32] sm:$0xff]
      %v2641 = vld [vmem:[#allocation4 + $0x3a] sm:$0xff]
      %v2642 = vld [vmem:[#allocation4 + $0x42] sm:$0xff]
      %v2643 = vld [vmem:[#allocation4 + $0x4a] sm:$0xff]
      %v2644 = vld [vmem:[#allocation4 + $0x52] sm:$0xff]
      %v2645 = vld [vmem:[#allocation4 + $0x5a] sm:$0xff]
      %v2646 = vld [vmem:[#allocation4 + $0x62] sm:$0xff]
      %v2647 = vld [vmem:[#allocation4 + $0x6a] sm:$0xff]
      %v2648 = vld [vmem:[#allocation4 + $0x72] sm:$0xff]
      %v2649 = vld [vmem:[#allocation4 + $0x7a] sm:$0xff]
      %v2650 = vld [vmem:[#allocation4 + $0x82] sm:$0xff]
      %v2651 = vld [vmem:[#allocation4 + $0x8a] sm:$0xff]
      %v2652 = vld [vmem:[#allocation4 + $0x92] sm:$0xff]
      %v2653 = vld [vmem:[#allocation4 + $0x9a] sm:$0xff]
      %v2654 = vld [vmem:[#allocation4 + $0xa2] sm:$0xff]
      %v2655 = vld [vmem:[#allocation4 + $0xaa] sm:$0xff]
      %v2656 = vld [vmem:[#allocation4 + $0xb2] sm:$0xff]
      %v2657 = vld [vmem:[#allocation4 + $0xba] sm:$0xff]
      %v2658 = vld [vmem:[#allocation4 + $0xc2] sm:$0xff]
      %v2659 = vld [vmem:[#allocation4 + $0xca] sm:$0xff]
      %v2660 = vld [vmem:[#allocation4 + $0xd2] sm:$0xff]
      %v2661 = vld [vmem:[#allocation4 + $0xda] sm:$0xff]
      %v2662 = vld [vmem:[#allocation4 + $0xe2] sm:$0xff]
      %v2663 = vld [vmem:[#allocation4 + $0xea] sm:$0xff]
      %v2664 = vld [vmem:[#allocation4 + $0xf2] sm:$0xff]
      %v2665 = vld [vmem:[#allocation4 + $0xfa] sm:$0xff]
      %v2666 = vld [vmem:[#allocation4 + $0x102] sm:$0xff]
      %v2667 = vld [vmem:[#allocation4 + $0x10a] sm:$0xf]
      %v2668 = vpack.c.bf16 %v2637, %v2636
      %v2669 = vpack.c.bf16 %v2639, %v2638
      %v2670 = vpack.c.bf16 %v2641, %v2640
      %v2671 = vpack.c.bf16 %v2643, %v2642
      %v2672 = vpack.c.bf16 %v2645, %v2644
      %v2673 = vpack.c.bf16 %v2647, %v2646
      %v2674 = vpack.c.bf16 %v2649, %v2648
      %v2675 = vpack.c.bf16 %v2651, %v2650
      %v2676 = vpack.c.bf16 %v2653, %v2652
      %v2677 = vpack.c.bf16 %v2655, %v2654
      %v2678 = vpack.c.bf16 %v2657, %v2656
      %v2679 = vpack.c.bf16 %v2659, %v2658
      %v2680 = vpack.c.bf16 %v2661, %v2660
      %v2681 = vpack.c.bf16 %v2663, %v2662
      %v2682 = vpack.c.bf16 %v2665, %v2664
      %v2683 = vpack.c.bf16 %v2667, %v2666
      %s2684 = scalar_lea.vmem %s3, 40
      %v2685 = vld [vmem:[%s2684] sm:$0xf]
      %v2686 = vld [vmem:[%s2684 + $0x4] sm:$0xf]
      %v2687 = vld [vmem:[%s2684 + $0x8] sm:$0xf]
      %v2688 = vld [vmem:[%s2684 + $0xc] sm:$0xf]
      %v2689 = vld [vmem:[%s2684 + $0x10] sm:$0xf]
      %v2690 = vld [vmem:[%s2684 + $0x14] sm:$0xf]
      %v2691 = vld [vmem:[%s2684 + $0x18] sm:$0xf]
      %v2692 = vld [vmem:[%s2684 + $0x1c] sm:$0xf]
      %v2693 = vld [vmem:[%s2684 + $0x20] sm:$0xf]
      %v2694 = vld [vmem:[%s2684 + $0x24] sm:$0xf]
      %v2705 = vunpack.c.l.b16 %v2685
      %v2706 = vunpack.c.l.b16 %v2686
      %v2707 = vunpack.c.l.b16 %v2687
      %v2708 = vunpack.c.l.b16 %v2688
      %v2709 = vunpack.c.l.b16 %v2689
      %v2710 = vunpack.c.l.b16 %v2690
      %v2711 = vunpack.c.l.b16 %v2691
      %v2712 = vunpack.c.l.b16 %v2692
      %v2713 = vunpack.c.l.b16 %v2693
      %v2714 = vunpack.c.l.b16 %v2694
      %v2715 = vpack.c.b16 %v2706, %v2705
      %v2716 = vpack.c.b16 %v2708, %v2707
      %v2717 = vpack.c.b16 %v2710, %v2709
      %v2718 = vpack.c.b16 %v2712, %v2711
      %v2719 = vpack.c.b16 %v2714, %v2713
      %v2726 = vsel %vm280, %v2668, 0
      %v2729 = vsel %vm280, %v2669, 0
      %v2732 = vsel %vm280, %v2670, 0
      %v2735 = vsel %vm280, %v2671, 0
      %v2738 = vsel %vm280, %v2672, 0
      %v2741 = vsel %vm280, %v2673, 0
      %v2744 = vsel %vm280, %v2674, 0
      %v2747 = vsel %vm280, %v2675, 0
      %v2750 = vsel %vm280, %v2676, 0
      %v2753 = vsel %vm280, %v2677, 0
      %v2756 = vsel %vm280, %v2678, 0
      %v2759 = vsel %vm280, %v2679, 0
      %v2762 = vsel %vm280, %v2680, 0
      %v2765 = vsel %vm280, %v2681, 0
      %v2768 = vsel %vm280, %v2682, 0
      %v2771 = vsel %vm280, %v2683, 0
      %2773 = vmatprep.subr.bf16.mxu0 0
      %2774 = vmatpush1.bf16.msra.mxu0 %v2715
      %2775 = vmatprep.subr.bf16.mxu0 0
      %2776 = vmatpush1.bf16.msra.mxu0 %v2716
      %2777 = vmatprep.subr.bf16.mxu0 0
      %2778 = vmatpush1.bf16.msra.mxu0 %v2717
      %2779 = vmatprep.subr.bf16.mxu0 0
      %2780 = vmatpush1.bf16.msra.mxu0 %v2718
      %2781 = vmatprep.subr.bf16.mxu0 0
      %2782 = vmatpush1.bf16.msra.mxu0 %v2719
      %2783 = vmatprep.subr.bf16.mxu0 0
      %2784 = vmatpush1.bf16.msra.mxu0 0
      %2785 = vmatprep.subr.bf16.mxu0 0
      %2786 = vmatpush1.bf16.msra.mxu0 0
      %2787 = vmatprep.subr.bf16.mxu0 0
      %2788 = vmatpush1.bf16.msra.mxu0 0
      %2789 = vmatprep.subr.bf16.mxu0 0
      %2790 = vmatpush1.bf16.msra.mxu0 0
      %2791 = vmatprep.subr.bf16.mxu0 0
      %2792 = vmatpush1.bf16.msra.mxu0 0
      %2793 = vmatprep.subr.bf16.mxu0 0
      %2794 = vmatpush1.bf16.msra.mxu0 0
      %2795 = vmatprep.subr.bf16.mxu0 0
      %2796 = vmatpush1.bf16.msra.mxu0 0
      %2797 = vmatprep.subr.bf16.mxu0 0
      %2798 = vmatpush1.bf16.msra.mxu0 0
      %2799 = vmatprep.subr.bf16.mxu0 0
      %2800 = vmatpush1.bf16.msra.mxu0 0
      %2801 = vmatprep.subr.bf16.mxu0 0
      %2802 = vmatpush1.bf16.msra.mxu0 0
      %2803 = vmatprep.subr.bf16.mxu0 0
      %2804 = vmatpush1.bf16.msra.mxu0 0
      %2805 = vmatprep.mubr.bf16.mxu0 0
      %2806 = vmatmul.mubr.bf16.gmra.mrb[0].mxu0 %v2726
      %v2807 = vpop.f32.mrb[0].mxu0
      %v2808 = vadd.f32 0.0, %v2807
      %v2809 = vpop.f32.mrb[0].mxu0
      %v2810 = vpop.f32.mrb[0].mxu0
      %v2811 = vadd.f32 0.0, %v2810
      %v2812 = vpop.f32.mrb[0].mxu0
      %2813 = vmatprep.mubr.bf16.mxu0 0
      %2814 = vmatmul.mubr.bf16.gmra.mrb[0].mxu0 %v2729
      %v2815 = vpop.f32.mrb[0].mxu0
      %v2816 = vadd.f32 0.0, %v2815
      %v2817 = vpop.f32.mrb[0].mxu0
      %v2818 = vpop.f32.mrb[0].mxu0
      %v2819 = vadd.f32 0.0, %v2818
      %v2820 = vpop.f32.mrb[0].mxu0
      %2821 = vmatprep.mubr.bf16.mxu0 0
      %2822 = vmatmul.mubr.bf16.gmra.mrb[0].mxu0 %v2732
      %v2823 = vpop.f32.mrb[0].mxu0
      %v2824 = vadd.f32 0.0, %v2823
      %v2825 = vpop.f32.mrb[0].mxu0
      %v2826 = vpop.f32.mrb[0].mxu0
      %v2827 = vadd.f32 0.0, %v2826
      %v2828 = vpop.f32.mrb[0].mxu0
      %2829 = vmatprep.mubr.bf16.mxu0 0
      %2830 = vmatmul.mubr.bf16.gmra.mrb[0].mxu0 %v2735
      %v2831 = vpop.f32.mrb[0].mxu0
      %v2832 = vadd.f32 0.0, %v2831
      %v2833 = vpop.f32.mrb[0].mxu0
      %v2834 = vpop.f32.mrb[0].mxu0
      %v2835 = vadd.f32 0.0, %v2834
      %v2836 = vpop.f32.mrb[0].mxu0
      %2837 = vmatprep.mubr.bf16.mxu0 0
      %2838 = vmatmul.mubr.bf16.gmra.mrb[0].mxu0 %v2738
      %v2839 = vpop.f32.mrb[0].mxu0
      %v2840 = vadd.f32 0.0, %v2839
      %v2841 = vpop.f32.mrb[0].mxu0
      %v2842 = vpop.f32.mrb[0].mxu0
      %v2843 = vadd.f32 0.0, %v2842
      %v2844 = vpop.f32.mrb[0].mxu0
      %2845 = vmatprep.mubr.bf16.mxu0 0
      %2846 = vmatmul.mubr.bf16.gmra.mrb[0].mxu0 %v2741
      %v2847 = vpop.f32.mrb[0].mxu0
      %v2848 = vadd.f32 0.0, %v2847
      %v2849 = vpop.f32.mrb[0].mxu0
      %v2850 = vpop.f32.mrb[0].mxu0
      %v2851 = vadd.f32 0.0, %v2850
      %v2852 = vpop.f32.mrb[0].mxu0
      %2853 = vmatprep.mubr.bf16.mxu0 0
      %2854 = vmatmul.mubr.bf16.gmra.mrb[0].mxu0 %v2744
      %v2855 = vpop.f32.mrb[0].mxu0
      %v2856 = vadd.f32 0.0, %v2855
      %v2857 = vpop.f32.mrb[0].mxu0
      %v2858 = vpop.f32.mrb[0].mxu0
      %v2859 = vadd.f32 0.0, %v2858
      %v2860 = vpop.f32.mrb[0].mxu0
      %2861 = vmatprep.mubr.bf16.mxu0 0
      %2862 = vmatmul.mubr.bf16.gmra.mrb[0].mxu0 %v2747
      %v2863 = vpop.f32.mrb[0].mxu0
      %v2864 = vadd.f32 0.0, %v2863
      %v2865 = vpop.f32.mrb[0].mxu0
      %v2866 = vpop.f32.mrb[0].mxu0
      %v2867 = vadd.f32 0.0, %v2866
      %v2868 = vpop.f32.mrb[0].mxu0
      %2869 = vmatprep.mubr.bf16.mxu0 0
      %2870 = vmatmul.mubr.bf16.gmra.mrb[0].mxu0 %v2750
      %v2871 = vpop.f32.mrb[0].mxu0
      %v2872 = vadd.f32 0.0, %v2871
      %v2873 = vpop.f32.mrb[0].mxu0
      %v2874 = vpop.f32.mrb[0].mxu0
      %v2875 = vadd.f32 0.0, %v2874
      %v2876 = vpop.f32.mrb[0].mxu0
      %2877 = vmatprep.mubr.bf16.mxu0 0
      %2878 = vmatmul.mubr.bf16.gmra.mrb[0].mxu0 %v2753
      %v2879 = vpop.f32.mrb[0].mxu0
      %v2880 = vadd.f32 0.0, %v2879
      %v2881 = vpop.f32.mrb[0].mxu0
      %v2882 = vpop.f32.mrb[0].mxu0
      %v2883 = vadd.f32 0.0, %v2882
      %v2884 = vpop.f32.mrb[0].mxu0
      %2885 = vmatprep.mubr.bf16.mxu0 0
      %2886 = vmatmul.mubr.bf16.gmra.mrb[0].mxu0 %v2756
      %v2887 = vpop.f32.mrb[0].mxu0
      %v2888 = vadd.f32 0.0, %v2887
      %v2889 = vpop.f32.mrb[0].mxu0
      %v2890 = vpop.f32.mrb[0].mxu0
      %v2891 = vadd.f32 0.0, %v2890
      %v2892 = vpop.f32.mrb[0].mxu0
      %2893 = vmatprep.mubr.bf16.mxu0 0
      %2894 = vmatmul.mubr.bf16.gmra.mrb[0].mxu0 %v2759
      %v2895 = vpop.f32.mrb[0].mxu0
      %v2896 = vadd.f32 0.0, %v2895
      %v2897 = vpop.f32.mrb[0].mxu0
      %v2898 = vpop.f32.mrb[0].mxu0
      %v2899 = vadd.f32 0.0, %v2898
      %v2900 = vpop.f32.mrb[0].mxu0
      %2901 = vmatprep.mubr.bf16.mxu0 0
      %2902 = vmatmul.mubr.bf16.gmra.mrb[0].mxu0 %v2762
      %v2903 = vpop.f32.mrb[0].mxu0
      %v2904 = vadd.f32 0.0, %v2903
      %v2905 = vpop.f32.mrb[0].mxu0
      %v2906 = vpop.f32.mrb[0].mxu0
      %v2907 = vadd.f32 0.0, %v2906
      %v2908 = vpop.f32.mrb[0].mxu0
      %2909 = vmatprep.mubr.bf16.mxu0 0
      %2910 = vmatmul.mubr.bf16.gmra.mrb[0].mxu0 %v2765
      %v2911 = vpop.f32.mrb[0].mxu0
      %v2912 = vadd.f32 0.0, %v2911
      %v2913 = vpop.f32.mrb[0].mxu0
      %v2914 = vpop.f32.mrb[0].mxu0
      %v2915 = vadd.f32 0.0, %v2914
      %v2916 = vpop.f32.mrb[0].mxu0
      %2917 = vmatprep.mubr.bf16.mxu0 0
      %2918 = vmatmul.mubr.bf16.gmra.mrb[0].mxu0 %v2768
      %v2919 = vpop.f32.mrb[0].mxu0
      %v2920 = vadd.f32 0.0, %v2919
      %v2921 = vpop.f32.mrb[0].mxu0
      %v2922 = vpop.f32.mrb[0].mxu0
      %v2923 = vadd.f32 0.0, %v2922
      %v2924 = vpop.f32.mrb[0].mxu0
      %2925 = vmatprep.mubr.bf16.mxu0 0
      %2926 = vmatmul.mubr.bf16.gmra.mrb[0].mxu0 %v2771
      %v2927 = vpop.f32.mrb[0].mxu0
      %v2928 = vadd.f32 0.0, %v2927
      %v2929 = vpop.f32.mrb[0].mxu0
      %v2930 = vpop.f32.mrb[0].mxu0
      %v2931 = vadd.f32 0.0, %v2930
      %v2932 = vpop.f32.mrb[0].mxu0
      %2933 = vdwg.mxu0
      %v2934 = vld [vmem:[#allocation5] sm:$0xff]
      %v2935 = vld [vmem:[#allocation5 + $0x8] sm:$0xff]
      %v2936 = vld [vmem:[#allocation5 + $0x10] sm:$0xff]
      %v2937 = vld [vmem:[#allocation5 + $0x18] sm:$0xff]
      %v2938 = vld [vmem:[#allocation5 + $0x20] sm:$0xff]
      %v2939 = vld [vmem:[#allocation5 + $0x28] sm:$0xff]
      %v2940 = vld [vmem:[#allocation5 + $0x30] sm:$0xff]
      %v2941 = vld [vmem:[#allocation5 + $0x38] sm:$0xff]
      %v2942 = vld [vmem:[#allocation5 + $0x40] sm:$0xff]
      %v2943 = vld [vmem:[#allocation5 + $0x48] sm:$0xff]
      %v2944 = vld [vmem:[#allocation5 + $0x50] sm:$0xff]
      %v2945 = vld [vmem:[#allocation5 + $0x58] sm:$0xff]
      %v2946 = vld [vmem:[#allocation5 + $0x60] sm:$0xff]
      %v2947 = vld [vmem:[#allocation5 + $0x68] sm:$0xff]
      %v2948 = vld [vmem:[#allocation5 + $0x70] sm:$0xff]
      %v2949 = vld [vmem:[#allocation5 + $0x78] sm:$0xff]
      %v2950 = vld [vmem:[#allocation5 + $0x80] sm:$0xff]
      %v2951 = vld [vmem:[#allocation5 + $0x88] sm:$0xff]
      %v2952 = vld [vmem:[#allocation5 + $0x90] sm:$0xff]
      %v2953 = vld [vmem:[#allocation5 + $0x98] sm:$0xff]
      %v2954 = vld [vmem:[#allocation5 + $0xa0] sm:$0xff]
      %v2955 = vld [vmem:[#allocation5 + $0xa8] sm:$0xff]
      %v2956 = vld [vmem:[#allocation5 + $0xb0] sm:$0xff]
      %v2957 = vld [vmem:[#allocation5 + $0xb8] sm:$0xff]
      %v2958 = vld [vmem:[#allocation5 + $0xc0] sm:$0xff]
      %v2959 = vld [vmem:[#allocation5 + $0xc8] sm:$0xff]
      %v2960 = vld [vmem:[#allocation5 + $0xd0] sm:$0xff]
      %v2961 = vld [vmem:[#allocation5 + $0xd8] sm:$0xff]
      %v2962 = vld [vmem:[#allocation5 + $0xe0] sm:$0xff]
      %v2963 = vld [vmem:[#allocation5 + $0xe8] sm:$0xff]
      %v2964 = vld [vmem:[#allocation5 + $0xf0] sm:$0xff]
      %v2965 = vld [vmem:[#allocation5 + $0xf8] sm:$0xf]
      %v2966 = vadd.f32 %v2934, %v2808
      %v2967 = vadd.f32 %v2935, %v2811
      %v2968 = vadd.f32 %v2936, %v2816
      %v2969 = vadd.f32 %v2937, %v2819
      %v2970 = vadd.f32 %v2938, %v2824
      %v2971 = vadd.f32 %v2939, %v2827
      %v2972 = vadd.f32 %v2940, %v2832
      %v2973 = vadd.f32 %v2941, %v2835
      %v2974 = vadd.f32 %v2942, %v2840
      %v2975 = vadd.f32 %v2943, %v2843
      %v2976 = vadd.f32 %v2944, %v2848
      %v2977 = vadd.f32 %v2945, %v2851
      %v2978 = vadd.f32 %v2946, %v2856
      %v2979 = vadd.f32 %v2947, %v2859
      %v2980 = vadd.f32 %v2948, %v2864
      %v2981 = vadd.f32 %v2949, %v2867
      %v2982 = vadd.f32 %v2950, %v2872
      %v2983 = vadd.f32 %v2951, %v2875
      %v2984 = vadd.f32 %v2952, %v2880
      %v2985 = vadd.f32 %v2953, %v2883
      %v2986 = vadd.f32 %v2954, %v2888
      %v2987 = vadd.f32 %v2955, %v2891
      %v2988 = vadd.f32 %v2956, %v2896
      %v2989 = vadd.f32 %v2957, %v2899
      %v2990 = vadd.f32 %v2958, %v2904
      %v2991 = vadd.f32 %v2959, %v2907
      %v2992 = vadd.f32 %v2960, %v2912
      %v2993 = vadd.f32 %v2961, %v2915
      %v2994 = vadd.f32 %v2962, %v2920
      %v2995 = vadd.f32 %v2963, %v2923
      %v2996 = vadd.f32 %v2964, %v2928
      %v2997 = vadd.f32 %v2965, %v2931
      %2998 = vst.msk [vmem:[#allocation5] sm:$0xff] %vm681, %v2966
      %2999 = vst.msk [vmem:[#allocation5 + $0x8] sm:$0xff] %vm681, %v2967
      %3000 = vst.msk [vmem:[#allocation5 + $0x10] sm:$0xff] %vm681, %v2968
      %3001 = vst.msk [vmem:[#allocation5 + $0x18] sm:$0xff] %vm681, %v2969
      %3002 = vst.msk [vmem:[#allocation5 + $0x20] sm:$0xff] %vm681, %v2970
      %3003 = vst.msk [vmem:[#allocation5 + $0x28] sm:$0xff] %vm681, %v2971
      %3004 = vst.msk [vmem:[#allocation5 + $0x30] sm:$0xff] %vm681, %v2972
      %3005 = vst.msk [vmem:[#allocation5 + $0x38] sm:$0xff] %vm681, %v2973
      %3006 = vst.msk [vmem:[#allocation5 + $0x40] sm:$0xff] %vm681, %v2974
      %3007 = vst.msk [vmem:[#allocation5 + $0x48] sm:$0xff] %vm681, %v2975
      %3008 = vst.msk [vmem:[#allocation5 + $0x50] sm:$0xff] %vm681, %v2976
      %3009 = vst.msk [vmem:[#allocation5 + $0x58] sm:$0xff] %vm681, %v2977
      %3010 = vst.msk [vmem:[#allocation5 + $0x60] sm:$0xff] %vm681, %v2978
      %3011 = vst.msk [vmem:[#allocation5 + $0x68] sm:$0xff] %vm681, %v2979
      %3012 = vst.msk [vmem:[#allocation5 + $0x70] sm:$0xff] %vm681, %v2980
      %3013 = vst.msk [vmem:[#allocation5 + $0x78] sm:$0xff] %vm681, %v2981
      %3014 = vst.msk [vmem:[#allocation5 + $0x80] sm:$0xff] %vm681, %v2982
      %3015 = vst.msk [vmem:[#allocation5 + $0x88] sm:$0xff] %vm681, %v2983
      %3016 = vst.msk [vmem:[#allocation5 + $0x90] sm:$0xff] %vm681, %v2984
      %3017 = vst.msk [vmem:[#allocation5 + $0x98] sm:$0xff] %vm681, %v2985
      %3018 = vst.msk [vmem:[#allocation5 + $0xa0] sm:$0xff] %vm681, %v2986
      %3019 = vst.msk [vmem:[#allocation5 + $0xa8] sm:$0xff] %vm681, %v2987
      %3020 = vst.msk [vmem:[#allocation5 + $0xb0] sm:$0xff] %vm681, %v2988
      %3021 = vst.msk [vmem:[#allocation5 + $0xb8] sm:$0xff] %vm681, %v2989
      %3022 = vst.msk [vmem:[#allocation5 + $0xc0] sm:$0xff] %vm681, %v2990
      %3023 = vst.msk [vmem:[#allocation5 + $0xc8] sm:$0xff] %vm681, %v2991
      %3024 = vst.msk [vmem:[#allocation5 + $0xd0] sm:$0xff] %vm681, %v2992
      %3025 = vst.msk [vmem:[#allocation5 + $0xd8] sm:$0xff] %vm681, %v2993
      %3026 = vst.msk [vmem:[#allocation5 + $0xe0] sm:$0xff] %vm681, %v2994
      %3027 = vst.msk [vmem:[#allocation5 + $0xe8] sm:$0xff] %vm681, %v2995
      %3028 = vst.msk [vmem:[#allocation5 + $0xf0] sm:$0xff] %vm681, %v2996
      %3029 = vst.msk [vmem:[#allocation5 + $0xf8] sm:$0xf] %vm2634, %v2997
      %v3030 = vld [vmem:[#allocation4 + $0x24] sm:$0xff]
      %v3031 = vld [vmem:[#allocation4 + $0x2c] sm:$0xff]
      %v3032 = vld [vmem:[#allocation4 + $0x34] sm:$0xff]
      %v3033 = vld [vmem:[#allocation4 + $0x3c] sm:$0xff]
      %v3034 = vld [vmem:[#allocation4 + $0x44] sm:$0xff]
      %v3035 = vld [vmem:[#allocation4 + $0x4c] sm:$0xff]
      %v3036 = vld [vmem:[#allocation4 + $0x54] sm:$0xff]
      %v3037 = vld [vmem:[#allocation4 + $0x5c] sm:$0xff]
      %v3038 = vld [vmem:[#allocation4 + $0x64] sm:$0xff]
      %v3039 = vld [vmem:[#allocation4 + $0x6c] sm:$0xff]
      %v3040 = vld [vmem:[#allocation4 + $0x74] sm:$0xff]
      %v3041 = vld [vmem:[#allocation4 + $0x7c] sm:$0xff]
      %v3042 = vld [vmem:[#allocation4 + $0x84] sm:$0xff]
      %v3043 = vld [vmem:[#allocation4 + $0x8c] sm:$0xff]
      %v3044 = vld [vmem:[#allocation4 + $0x94] sm:$0xff]
      %v3045 = vld [vmem:[#allocation4 + $0x9c] sm:$0xff]
      %v3046 = vld [vmem:[#allocation4 + $0xa4] sm:$0xff]
      %v3047 = vld [vmem:[#allocation4 + $0xac] sm:$0xff]
      %v3048 = vld [vmem:[#allocation4 + $0xb4] sm:$0xff]
      %v3049 = vld [vmem:[#allocation4 + $0xbc] sm:$0xff]
      %v3050 = vld [vmem:[#allocation4 + $0xc4] sm:$0xff]
      %v3051 = vld [vmem:[#allocation4 + $0xcc] sm:$0xff]
      %v3052 = vld [vmem:[#allocation4 + $0xd4] sm:$0xff]
      %v3053 = vld [vmem:[#allocation4 + $0xdc] sm:$0xff]
      %v3054 = vld [vmem:[#allocation4 + $0xe4] sm:$0xff]
      %v3055 = vld [vmem:[#allocation4 + $0xec] sm:$0xff]
      %v3056 = vld [vmem:[#allocation4 + $0xf4] sm:$0xff]
      %v3057 = vld [vmem:[#allocation4 + $0xfc] sm:$0xff]
      %v3058 = vld [vmem:[#allocation4 + $0x104] sm:$0xff]
      %v3059 = vld [vmem:[#allocation4 + $0x10c] sm:$0xff]
      %v3060 = vld [vmem:[#allocation4 + $0x114] sm:$0xff]
      %v3061 = vld [vmem:[#allocation4 + $0x11c] sm:$0xf]
      %v3062 = vpack.c.bf16 %v3031, %v3030
      %v3063 = vpack.c.bf16 %v3033, %v3032
      %v3064 = vpack.c.bf16 %v3035, %v3034
      %v3065 = vpack.c.bf16 %v3037, %v3036
      %v3066 = vpack.c.bf16 %v3039, %v3038
      %v3067 = vpack.c.bf16 %v3041, %v3040
      %v3068 = vpack.c.bf16 %v3043, %v3042
      %v3069 = vpack.c.bf16 %v3045, %v3044
      %v3070 = vpack.c.bf16 %v3047, %v3046
      %v3071 = vpack.c.bf16 %v3049, %v3048
      %v3072 = vpack.c.bf16 %v3051, %v3050
      %v3073 = vpack.c.bf16 %v3053, %v3052
      %v3074 = vpack.c.bf16 %v3055, %v3054
      %v3075 = vpack.c.bf16 %v3057, %v3056
      %v3076 = vpack.c.bf16 %v3059, %v3058
      %v3077 = vpack.c.bf16 %v3061, %v3060
      %s3078 = scalar_lea.vmem %s3, 80
      %v3079 = vld [vmem:[%s3078] sm:$0xf]
      %v3080 = vld [vmem:[%s3078 + $0x4] sm:$0xf]
      %v3081 = vld [vmem:[%s3078 + $0x8] sm:$0xf]
      %v3082 = vld [vmem:[%s3078 + $0xc] sm:$0xf]
      %v3083 = vld [vmem:[%s3078 + $0x10] sm:$0xf]
      %v3084 = vld [vmem:[%s3078 + $0x14] sm:$0xf]
      %v3085 = vld [vmem:[%s3078 + $0x18] sm:$0xf]
      %v3086 = vld [vmem:[%s3078 + $0x1c] sm:$0xf]
      %v3087 = vld [vmem:[%s3078 + $0x20] sm:$0xf]
      %v3088 = vld [vmem:[%s3078 + $0x24] sm:$0xf]
      %v3099 = vunpack.c.l.b16 %v3079
      %v3100 = vunpack.c.l.b16 %v3080
      %v3101 = vunpack.c.l.b16 %v3081
      %v3102 = vunpack.c.l.b16 %v3082
      %v3103 = vunpack.c.l.b16 %v3083
      %v3104 = vunpack.c.l.b16 %v3084
      %v3105 = vunpack.c.l.b16 %v3085
      %v3106 = vunpack.c.l.b16 %v3086
      %v3107 = vunpack.c.l.b16 %v3087
      %v3108 = vunpack.c.l.b16 %v3088
      %v3109 = vpack.c.b16 %v3100, %v3099
      %v3110 = vpack.c.b16 %v3102, %v3101
      %v3111 = vpack.c.b16 %v3104, %v3103
      %v3112 = vpack.c.b16 %v3106, %v3105
      %v3113 = vpack.c.b16 %v3108, %v3107
      %v3120 = vsel %vm280, %v3062, 0
      %v3123 = vsel %vm280, %v3063, 0
      %v3126 = vsel %vm280, %v3064, 0
      %v3129 = vsel %vm280, %v3065, 0
      %v3132 = vsel %vm280, %v3066, 0
      %v3135 = vsel %vm280, %v3067, 0
      %v3138 = vsel %vm280, %v3068, 0
      %v3141 = vsel %vm280, %v3069, 0
      %v3144 = vsel %vm280, %v3070, 0
      %v3147 = vsel %vm280, %v3071, 0
      %v3150 = vsel %vm280, %v3072, 0
      %v3153 = vsel %vm280, %v3073, 0
      %v3156 = vsel %vm280, %v3074, 0
      %v3159 = vsel %vm280, %v3075, 0
      %v3162 = vsel %vm280, %v3076, 0
      %v3165 = vsel %vm280, %v3077, 0
      %3167 = vmatprep.subr.bf16.mxu0 0
      %3168 = vmatpush1.bf16.msra.mxu0 %v3109
      %3169 = vmatprep.subr.bf16.mxu0 0
      %3170 = vmatpush1.bf16.msra.mxu0 %v3110
      %3171 = vmatprep.subr.bf16.mxu0 0
      %3172 = vmatpush1.bf16.msra.mxu0 %v3111
      %3173 = vmatprep.subr.bf16.mxu0 0
      %3174 = vmatpush1.bf16.msra.mxu0 %v3112
      %3175 = vmatprep.subr.bf16.mxu0 0
      %3176 = vmatpush1.bf16.msra.mxu0 %v3113
      %3177 = vmatprep.subr.bf16.mxu0 0
      %3178 = vmatpush1.bf16.msra.mxu0 0
      %3179 = vmatprep.subr.bf16.mxu0 0
      %3180 = vmatpush1.bf16.msra.mxu0 0
      %3181 = vmatprep.subr.bf16.mxu0 0
      %3182 = vmatpush1.bf16.msra.mxu0 0
      %3183 = vmatprep.subr.bf16.mxu0 0
      %3184 = vmatpush1.bf16.msra.mxu0 0
      %3185 = vmatprep.subr.bf16.mxu0 0
      %3186 = vmatpush1.bf16.msra.mxu0 0
      %3187 = vmatprep.subr.bf16.mxu0 0
      %3188 = vmatpush1.bf16.msra.mxu0 0
      %3189 = vmatprep.subr.bf16.mxu0 0
      %3190 = vmatpush1.bf16.msra.mxu0 0
      %3191 = vmatprep.subr.bf16.mxu0 0
      %3192 = vmatpush1.bf16.msra.mxu0 0
      %3193 = vmatprep.subr.bf16.mxu0 0
      %3194 = vmatpush1.bf16.msra.mxu0 0
      %3195 = vmatprep.subr.bf16.mxu0 0
      %3196 = vmatpush1.bf16.msra.mxu0 0
      %3197 = vmatprep.subr.bf16.mxu0 0
      %3198 = vmatpush1.bf16.msra.mxu0 0
      %3199 = vmatprep.mubr.bf16.mxu0 0
      %3200 = vmatmul.mubr.bf16.gmra.mrb[0].mxu0 %v3120
      %v3201 = vpop.f32.mrb[0].mxu0
      %v3202 = vadd.f32 0.0, %v3201
      %v3203 = vpop.f32.mrb[0].mxu0
      %v3204 = vpop.f32.mrb[0].mxu0
      %v3205 = vadd.f32 0.0, %v3204
      %v3206 = vpop.f32.mrb[0].mxu0
      %3207 = vmatprep.mubr.bf16.mxu0 0
      %3208 = vmatmul.mubr.bf16.gmra.mrb[0].mxu0 %v3123
      %v3209 = vpop.f32.mrb[0].mxu0
      %v3210 = vadd.f32 0.0, %v3209
      %v3211 = vpop.f32.mrb[0].mxu0
      %v3212 = vpop.f32.mrb[0].mxu0
      %v3213 = vadd.f32 0.0, %v3212
      %v3214 = vpop.f32.mrb[0].mxu0
      %3215 = vmatprep.mubr.bf16.mxu0 0
      %3216 = vmatmul.mubr.bf16.gmra.mrb[0].mxu0 %v3126
      %v3217 = vpop.f32.mrb[0].mxu0
      %v3218 = vadd.f32 0.0, %v3217
      %v3219 = vpop.f32.mrb[0].mxu0
      %v3220 = vpop.f32.mrb[0].mxu0
      %v3221 = vadd.f32 0.0, %v3220
      %v3222 = vpop.f32.mrb[0].mxu0
      %3223 = vmatprep.mubr.bf16.mxu0 0
      %3224 = vmatmul.mubr.bf16.gmra.mrb[0].mxu0 %v3129
      %v3225 = vpop.f32.mrb[0].mxu0
      %v3226 = vadd.f32 0.0, %v3225
      %v3227 = vpop.f32.mrb[0].mxu0
      %v3228 = vpop.f32.mrb[0].mxu0
      %v3229 = vadd.f32 0.0, %v3228
      %v3230 = vpop.f32.mrb[0].mxu0
      %3231 = vmatprep.mubr.bf16.mxu0 0
      %3232 = vmatmul.mubr.bf16.gmra.mrb[0].mxu0 %v3132
      %v3233 = vpop.f32.mrb[0].mxu0
      %v3234 = vadd.f32 0.0, %v3233
      %v3235 = vpop.f32.mrb[0].mxu0
      %v3236 = vpop.f32.mrb[0].mxu0
      %v3237 = vadd.f32 0.0, %v3236
      %v3238 = vpop.f32.mrb[0].mxu0
      %3239 = vmatprep.mubr.bf16.mxu0 0
      %3240 = vmatmul.mubr.bf16.gmra.mrb[0].mxu0 %v3135
      %v3241 = vpop.f32.mrb[0].mxu0
      %v3242 = vadd.f32 0.0, %v3241
      %v3243 = vpop.f32.mrb[0].mxu0
      %v3244 = vpop.f32.mrb[0].mxu0
      %v3245 = vadd.f32 0.0, %v3244
      %v3246 = vpop.f32.mrb[0].mxu0
      %3247 = vmatprep.mubr.bf16.mxu0 0
      %3248 = vmatmul.mubr.bf16.gmra.mrb[0].mxu0 %v3138
      %v3249 = vpop.f32.mrb[0].mxu0
      %v3250 = vadd.f32 0.0, %v3249
      %v3251 = vpop.f32.mrb[0].mxu0
      %v3252 = vpop.f32.mrb[0].mxu0
      %v3253 = vadd.f32 0.0, %v3252
      %v3254 = vpop.f32.mrb[0].mxu0
      %3255 = vmatprep.mubr.bf16.mxu0 0
      %3256 = vmatmul.mubr.bf16.gmra.mrb[0].mxu0 %v3141
      %v3257 = vpop.f32.mrb[0].mxu0
      %v3258 = vadd.f32 0.0, %v3257
      %v3259 = vpop.f32.mrb[0].mxu0
      %v3260 = vpop.f32.mrb[0].mxu0
      %v3261 = vadd.f32 0.0, %v3260
      %v3262 = vpop.f32.mrb[0].mxu0
      %3263 = vmatprep.mubr.bf16.mxu0 0
      %3264 = vmatmul.mubr.bf16.gmra.mrb[0].mxu0 %v3144
      %v3265 = vpop.f32.mrb[0].mxu0
      %v3266 = vadd.f32 0.0, %v3265
      %v3267 = vpop.f32.mrb[0].mxu0
      %v3268 = vpop.f32.mrb[0].mxu0
      %v3269 = vadd.f32 0.0, %v3268
      %v3270 = vpop.f32.mrb[0].mxu0
      %3271 = vmatprep.mubr.bf16.mxu0 0
      %3272 = vmatmul.mubr.bf16.gmra.mrb[0].mxu0 %v3147
      %v3273 = vpop.f32.mrb[0].mxu0
      %v3274 = vadd.f32 0.0, %v3273
      %v3275 = vpop.f32.mrb[0].mxu0
      %v3276 = vpop.f32.mrb[0].mxu0
      %v3277 = vadd.f32 0.0, %v3276
      %v3278 = vpop.f32.mrb[0].mxu0
      %3279 = vmatprep.mubr.bf16.mxu0 0
      %3280 = vmatmul.mubr.bf16.gmra.mrb[0].mxu0 %v3150
      %v3281 = vpop.f32.mrb[0].mxu0
      %v3282 = vadd.f32 0.0, %v3281
      %v3283 = vpop.f32.mrb[0].mxu0
      %v3284 = vpop.f32.mrb[0].mxu0
      %v3285 = vadd.f32 0.0, %v3284
      %v3286 = vpop.f32.mrb[0].mxu0
      %3287 = vmatprep.mubr.bf16.mxu0 0
      %3288 = vmatmul.mubr.bf16.gmra.mrb[0].mxu0 %v3153
      %v3289 = vpop.f32.mrb[0].mxu0
      %v3290 = vadd.f32 0.0, %v3289
      %v3291 = vpop.f32.mrb[0].mxu0
      %v3292 = vpop.f32.mrb[0].mxu0
      %v3293 = vadd.f32 0.0, %v3292
      %v3294 = vpop.f32.mrb[0].mxu0
      %3295 = vmatprep.mubr.bf16.mxu0 0
      %3296 = vmatmul.mubr.bf16.gmra.mrb[0].mxu0 %v3156
      %v3297 = vpop.f32.mrb[0].mxu0
      %v3298 = vadd.f32 0.0, %v3297
      %v3299 = vpop.f32.mrb[0].mxu0
      %v3300 = vpop.f32.mrb[0].mxu0
      %v3301 = vadd.f32 0.0, %v3300
      %v3302 = vpop.f32.mrb[0].mxu0
      %3303 = vmatprep.mubr.bf16.mxu0 0
      %3304 = vmatmul.mubr.bf16.gmra.mrb[0].mxu0 %v3159
      %v3305 = vpop.f32.mrb[0].mxu0
      %v3306 = vadd.f32 0.0, %v3305
      %v3307 = vpop.f32.mrb[0].mxu0
      %v3308 = vpop.f32.mrb[0].mxu0
      %v3309 = vadd.f32 0.0, %v3308
      %v3310 = vpop.f32.mrb[0].mxu0
      %3311 = vmatprep.mubr.bf16.mxu0 0
      %3312 = vmatmul.mubr.bf16.gmra.mrb[0].mxu0 %v3162
      %v3313 = vpop.f32.mrb[0].mxu0
      %v3314 = vadd.f32 0.0, %v3313
      %v3315 = vpop.f32.mrb[0].mxu0
      %v3316 = vpop.f32.mrb[0].mxu0
      %v3317 = vadd.f32 0.0, %v3316
      %v3318 = vpop.f32.mrb[0].mxu0
      %3319 = vmatprep.mubr.bf16.mxu0 0
      %3320 = vmatmul.mubr.bf16.gmra.mrb[0].mxu0 %v3165
      %v3321 = vpop.f32.mrb[0].mxu0
      %v3322 = vadd.f32 0.0, %v3321
      %v3323 = vpop.f32.mrb[0].mxu0
      %v3324 = vpop.f32.mrb[0].mxu0
      %v3325 = vadd.f32 0.0, %v3324
      %v3326 = vpop.f32.mrb[0].mxu0
      %3327 = vdwg.mxu0
      %v3328 = vld [vmem:[#allocation5] sm:$0xff]
      %v3329 = vld [vmem:[#allocation5 + $0x8] sm:$0xff]
      %v3330 = vld [vmem:[#allocation5 + $0x10] sm:$0xff]
      %v3331 = vld [vmem:[#allocation5 + $0x18] sm:$0xff]
      %v3332 = vld [vmem:[#allocation5 + $0x20] sm:$0xff]
      %v3333 = vld [vmem:[#allocation5 + $0x28] sm:$0xff]
      %v3334 = vld [vmem:[#allocation5 + $0x30] sm:$0xff]
      %v3335 = vld [vmem:[#allocation5 + $0x38] sm:$0xff]
      %v3336 = vld [vmem:[#allocation5 + $0x40] sm:$0xff]
      %v3337 = vld [vmem:[#allocation5 + $0x48] sm:$0xff]
      %v3338 = vld [vmem:[#allocation5 + $0x50] sm:$0xff]
      %v3339 = vld [vmem:[#allocation5 + $0x58] sm:$0xff]
      %v3340 = vld [vmem:[#allocation5 + $0x60] sm:$0xff]
      %v3341 = vld [vmem:[#allocation5 + $0x68] sm:$0xff]
      %v3342 = vld [vmem:[#allocation5 + $0x70] sm:$0xff]
      %v3343 = vld [vmem:[#allocation5 + $0x78] sm:$0xff]
      %v3344 = vld [vmem:[#allocation5 + $0x80] sm:$0xff]
      %v3345 = vld [vmem:[#allocation5 + $0x88] sm:$0xff]
      %v3346 = vld [vmem:[#allocation5 + $0x90] sm:$0xff]
      %v3347 = vld [vmem:[#allocation5 + $0x98] sm:$0xff]
      %v3348 = vld [vmem:[#allocation5 + $0xa0] sm:$0xff]
      %v3349 = vld [vmem:[#allocation5 + $0xa8] sm:$0xff]
      %v3350 = vld [vmem:[#allocation5 + $0xb0] sm:$0xff]
      %v3351 = vld [vmem:[#allocation5 + $0xb8] sm:$0xff]
      %v3352 = vld [vmem:[#allocation5 + $0xc0] sm:$0xff]
      %v3353 = vld [vmem:[#allocation5 + $0xc8] sm:$0xff]
      %v3354 = vld [vmem:[#allocation5 + $0xd0] sm:$0xff]
      %v3355 = vld [vmem:[#allocation5 + $0xd8] sm:$0xff]
      %v3356 = vld [vmem:[#allocation5 + $0xe0] sm:$0xff]
      %v3357 = vld [vmem:[#allocation5 + $0xe8] sm:$0xff]
      %v3358 = vld [vmem:[#allocation5 + $0xf0] sm:$0xff]
      %v3359 = vld [vmem:[#allocation5 + $0xf8] sm:$0xf]
      %v3360 = vadd.f32 %v3328, %v3202
      %v3361 = vadd.f32 %v3329, %v3205
      %v3362 = vadd.f32 %v3330, %v3210
      %v3363 = vadd.f32 %v3331, %v3213
      %v3364 = vadd.f32 %v3332, %v3218
      %v3365 = vadd.f32 %v3333, %v3221
      %v3366 = vadd.f32 %v3334, %v3226
      %v3367 = vadd.f32 %v3335, %v3229
      %v3368 = vadd.f32 %v3336, %v3234
      %v3369 = vadd.f32 %v3337, %v3237
      %v3370 = vadd.f32 %v3338, %v3242
      %v3371 = vadd.f32 %v3339, %v3245
      %v3372 = vadd.f32 %v3340, %v3250
      %v3373 = vadd.f32 %v3341, %v3253
      %v3374 = vadd.f32 %v3342, %v3258
      %v3375 = vadd.f32 %v3343, %v3261
      %v3376 = vadd.f32 %v3344, %v3266
      %v3377 = vadd.f32 %v3345, %v3269
      %v3378 = vadd.f32 %v3346, %v3274
      %v3379 = vadd.f32 %v3347, %v3277
      %v3380 = vadd.f32 %v3348, %v3282
      %v3381 = vadd.f32 %v3349, %v3285
      %v3382 = vadd.f32 %v3350, %v3290
      %v3383 = vadd.f32 %v3351, %v3293
      %v3384 = vadd.f32 %v3352, %v3298
      %v3385 = vadd.f32 %v3353, %v3301
      %v3386 = vadd.f32 %v3354, %v3306
      %v3387 = vadd.f32 %v3355, %v3309
      %v3388 = vadd.f32 %v3356, %v3314
      %v3389 = vadd.f32 %v3357, %v3317
      %v3390 = vadd.f32 %v3358, %v3322
      %v3391 = vadd.f32 %v3359, %v3325
      %3392 = vst.msk [vmem:[#allocation5] sm:$0xff] %vm681, %v3360
      %3393 = vst.msk [vmem:[#allocation5 + $0x8] sm:$0xff] %vm681, %v3361
      %3394 = vst.msk [vmem:[#allocation5 + $0x10] sm:$0xff] %vm681, %v3362
      %3395 = vst.msk [vmem:[#allocation5 + $0x18] sm:$0xff] %vm681, %v3363
      %3396 = vst.msk [vmem:[#allocation5 + $0x20] sm:$0xff] %vm681, %v3364
      %3397 = vst.msk [vmem:[#allocation5 + $0x28] sm:$0xff] %vm681, %v3365
      %3398 = vst.msk [vmem:[#allocation5 + $0x30] sm:$0xff] %vm681, %v3366
      %3399 = vst.msk [vmem:[#allocation5 + $0x38] sm:$0xff] %vm681, %v3367
      %3400 = vst.msk [vmem:[#allocation5 + $0x40] sm:$0xff] %vm681, %v3368
      %3401 = vst.msk [vmem:[#allocation5 + $0x48] sm:$0xff] %vm681, %v3369
      %3402 = vst.msk [vmem:[#allocation5 + $0x50] sm:$0xff] %vm681, %v3370
      %3403 = vst.msk [vmem:[#allocation5 + $0x58] sm:$0xff] %vm681, %v3371
      %3404 = vst.msk [vmem:[#allocation5 + $0x60] sm:$0xff] %vm681, %v3372
      %3405 = vst.msk [vmem:[#allocation5 + $0x68] sm:$0xff] %vm681, %v3373
      %3406 = vst.msk [vmem:[#allocation5 + $0x70] sm:$0xff] %vm681, %v3374
      %3407 = vst.msk [vmem:[#allocation5 + $0x78] sm:$0xff] %vm681, %v3375
      %3408 = vst.msk [vmem:[#allocation5 + $0x80] sm:$0xff] %vm681, %v3376
      %3409 = vst.msk [vmem:[#allocation5 + $0x88] sm:$0xff] %vm681, %v3377
      %3410 = vst.msk [vmem:[#allocation5 + $0x90] sm:$0xff] %vm681, %v3378
      %3411 = vst.msk [vmem:[#allocation5 + $0x98] sm:$0xff] %vm681, %v3379
      %3412 = vst.msk [vmem:[#allocation5 + $0xa0] sm:$0xff] %vm681, %v3380
      %3413 = vst.msk [vmem:[#allocation5 + $0xa8] sm:$0xff] %vm681, %v3381
      %3414 = vst.msk [vmem:[#allocation5 + $0xb0] sm:$0xff] %vm681, %v3382
      %3415 = vst.msk [vmem:[#allocation5 + $0xb8] sm:$0xff] %vm681, %v3383
      %3416 = vst.msk [vmem:[#allocation5 + $0xc0] sm:$0xff] %vm681, %v3384
      %3417 = vst.msk [vmem:[#allocation5 + $0xc8] sm:$0xff] %vm681, %v3385
      %3418 = vst.msk [vmem:[#allocation5 + $0xd0] sm:$0xff] %vm681, %v3386
      %3419 = vst.msk [vmem:[#allocation5 + $0xd8] sm:$0xff] %vm681, %v3387
      %3420 = vst.msk [vmem:[#allocation5 + $0xe0] sm:$0xff] %vm681, %v3388
      %3421 = vst.msk [vmem:[#allocation5 + $0xe8] sm:$0xff] %vm681, %v3389
      %3422 = vst.msk [vmem:[#allocation5 + $0xf0] sm:$0xff] %vm681, %v3390
      %3423 = vst.msk [vmem:[#allocation5 + $0xf8] sm:$0xf] %vm2634, %v3391
      %v3424 = vld [vmem:[#allocation4 + $0x36] sm:$0xff]
      %v3425 = vld [vmem:[#allocation4 + $0x3e] sm:$0xff]
      %v3426 = vld [vmem:[#allocation4 + $0x46] sm:$0xff]
      %v3427 = vld [vmem:[#allocation4 + $0x4e] sm:$0xff]
      %v3428 = vld [vmem:[#allocation4 + $0x56] sm:$0xff]
      %v3429 = vld [vmem:[#allocation4 + $0x5e] sm:$0xff]
      %v3430 = vld [vmem:[#allocation4 + $0x66] sm:$0xff]
      %v3431 = vld [vmem:[#allocation4 + $0x6e] sm:$0xff]
      %v3432 = vld [vmem:[#allocation4 + $0x76] sm:$0xff]
      %v3433 = vld [vmem:[#allocation4 + $0x7e] sm:$0xff]
      %v3434 = vld [vmem:[#allocation4 + $0x86] sm:$0xff]
      %v3435 = vld [vmem:[#allocation4 + $0x8e] sm:$0xff]
      %v3436 = vld [vmem:[#allocation4 + $0x96] sm:$0xff]
      %v3437 = vld [vmem:[#allocation4 + $0x9e] sm:$0xff]
      %v3438 = vld [vmem:[#allocation4 + $0xa6] sm:$0xff]
      %v3439 = vld [vmem:[#allocation4 + $0xae] sm:$0xff]
      %v3440 = vld [vmem:[#allocation4 + $0xb6] sm:$0xff]
      %v3441 = vld [vmem:[#allocation4 + $0xbe] sm:$0xff]
      %v3442 = vld [vmem:[#allocation4 + $0xc6] sm:$0xff]
      %v3443 = vld [vmem:[#allocation4 + $0xce] sm:$0xff]
      %v3444 = vld [vmem:[#allocation4 + $0xd6] sm:$0xff]
      %v3445 = vld [vmem:[#allocation4 + $0xde] sm:$0xff]
      %v3446 = vld [vmem:[#allocation4 + $0xe6] sm:$0xff]
      %v3447 = vld [vmem:[#allocation4 + $0xee] sm:$0xff]
      %v3448 = vld [vmem:[#allocation4 + $0xf6] sm:$0xff]
      %v3449 = vld [vmem:[#allocation4 + $0xfe] sm:$0xff]
      %v3450 = vld [vmem:[#allocation4 + $0x106] sm:$0xff]
      %v3451 = vld [vmem:[#allocation4 + $0x10e] sm:$0xff]
      %v3452 = vld [vmem:[#allocation4 + $0x116] sm:$0xff]
      %v3453 = vld [vmem:[#allocation4 + $0x11e] sm:$0xff]
      %v3454 = vld [vmem:[#allocation4 + $0x126] sm:$0xff]
      %v3455 = vld [vmem:[#allocation4 + $0x12e] sm:$0xf]
      %v3456 = vpack.c.bf16 %v3425, %v3424
      %v3457 = vpack.c.bf16 %v3427, %v3426
      %v3458 = vpack.c.bf16 %v3429, %v3428
      %v3459 = vpack.c.bf16 %v3431, %v3430
      %v3460 = vpack.c.bf16 %v3433, %v3432
      %v3461 = vpack.c.bf16 %v3435, %v3434
      %v3462 = vpack.c.bf16 %v3437, %v3436
      %v3463 = vpack.c.bf16 %v3439, %v3438
      %v3464 = vpack.c.bf16 %v3441, %v3440
      %v3465 = vpack.c.bf16 %v3443, %v3442
      %v3466 = vpack.c.bf16 %v3445, %v3444
      %v3467 = vpack.c.bf16 %v3447, %v3446
      %v3468 = vpack.c.bf16 %v3449, %v3448
      %v3469 = vpack.c.bf16 %v3451, %v3450
      %v3470 = vpack.c.bf16 %v3453, %v3452
      %v3471 = vpack.c.bf16 %v3455, %v3454
      %s3472 = scalar_lea.vmem %s3, 120
      %v3473 = vld [vmem:[%s3472] sm:$0xf]
      %v3474 = vld [vmem:[%s3472 + $0x4] sm:$0xf]
      %v3475 = vld [vmem:[%s3472 + $0x8] sm:$0xf]
      %v3476 = vld [vmem:[%s3472 + $0xc] sm:$0xf]
      %v3477 = vld [vmem:[%s3472 + $0x10] sm:$0xf]
      %v3478 = vld [vmem:[%s3472 + $0x14] sm:$0xf]
      %v3479 = vld [vmem:[%s3472 + $0x18] sm:$0xf]
      %v3480 = vld [vmem:[%s3472 + $0x1c] sm:$0xf]
      %v3481 = vld [vmem:[%s3472 + $0x20] sm:$0xf]
      %v3482 = vld [vmem:[%s3472 + $0x24] sm:$0xf]
      %v3493 = vunpack.c.l.b16 %v3473
      %v3494 = vunpack.c.l.b16 %v3474
      %v3495 = vunpack.c.l.b16 %v3475
      %v3496 = vunpack.c.l.b16 %v3476
      %v3497 = vunpack.c.l.b16 %v3477
      %v3498 = vunpack.c.l.b16 %v3478
      %v3499 = vunpack.c.l.b16 %v3479
      %v3500 = vunpack.c.l.b16 %v3480
      %v3501 = vunpack.c.l.b16 %v3481
      %v3502 = vunpack.c.l.b16 %v3482
      %v3503 = vpack.c.b16 %v3494, %v3493
      %v3504 = vpack.c.b16 %v3496, %v3495
      %v3505 = vpack.c.b16 %v3498, %v3497
      %v3506 = vpack.c.b16 %v3500, %v3499
      %v3507 = vpack.c.b16 %v3502, %v3501
      %v3514 = vsel %vm280, %v3456, 0
      %v3517 = vsel %vm280, %v3457, 0
      %v3520 = vsel %vm280, %v3458, 0
      %v3523 = vsel %vm280, %v3459, 0
      %v3526 = vsel %vm280, %v3460, 0
      %v3529 = vsel %vm280, %v3461, 0
      %v3532 = vsel %vm280, %v3462, 0
      %v3535 = vsel %vm280, %v3463, 0
      %v3538 = vsel %vm280, %v3464, 0
      %v3541 = vsel %vm280, %v3465, 0
      %v3544 = vsel %vm280, %v3466, 0
      %v3547 = vsel %vm280, %v3467, 0
      %v3550 = vsel %vm280, %v3468, 0
      %v3553 = vsel %vm280, %v3469, 0
      %v3556 = vsel %vm280, %v3470, 0
      %v3559 = vsel %vm280, %v3471, 0
      %3561 = vmatprep.subr.bf16.mxu0 0
      %3562 = vmatpush1.bf16.msra.mxu0 %v3503
      %3563 = vmatprep.subr.bf16.mxu0 0
      %3564 = vmatpush1.bf16.msra.mxu0 %v3504
      %3565 = vmatprep.subr.bf16.mxu0 0
      %3566 = vmatpush1.bf16.msra.mxu0 %v3505
      %3567 = vmatprep.subr.bf16.mxu0 0
      %3568 = vmatpush1.bf16.msra.mxu0 %v3506
      %3569 = vmatprep.subr.bf16.mxu0 0
      %3570 = vmatpush1.bf16.msra.mxu0 %v3507
      %3571 = vmatprep.subr.bf16.mxu0 0
      %3572 = vmatpush1.bf16.msra.mxu0 0
      %3573 = vmatprep.subr.bf16.mxu0 0
      %3574 = vmatpush1.bf16.msra.mxu0 0
      %3575 = vmatprep.subr.bf16.mxu0 0
      %3576 = vmatpush1.bf16.msra.mxu0 0
      %3577 = vmatprep.subr.bf16.mxu0 0
      %3578 = vmatpush1.bf16.msra.mxu0 0
      %3579 = vmatprep.subr.bf16.mxu0 0
      %3580 = vmatpush1.bf16.msra.mxu0 0
      %3581 = vmatprep.subr.bf16.mxu0 0
      %3582 = vmatpush1.bf16.msra.mxu0 0
      %3583 = vmatprep.subr.bf16.mxu0 0
      %3584 = vmatpush1.bf16.msra.mxu0 0
      %3585 = vmatprep.subr.bf16.mxu0 0
      %3586 = vmatpush1.bf16.msra.mxu0 0
      %3587 = vmatprep.subr.bf16.mxu0 0
      %3588 = vmatpush1.bf16.msra.mxu0 0
      %3589 = vmatprep.subr.bf16.mxu0 0
      %3590 = vmatpush1.bf16.msra.mxu0 0
      %3591 = vmatprep.subr.bf16.mxu0 0
      %3592 = vmatpush1.bf16.msra.mxu0 0
      %3593 = vmatprep.mubr.bf16.mxu0 0
      %3594 = vmatmul.mubr.bf16.gmra.mrb[0].mxu0 %v3514
      %v3595 = vpop.f32.mrb[0].mxu0
      %v3596 = vadd.f32 0.0, %v3595
      %v3597 = vpop.f32.mrb[0].mxu0
      %v3598 = vpop.f32.mrb[0].mxu0
      %v3599 = vadd.f32 0.0, %v3598
      %v3600 = vpop.f32.mrb[0].mxu0
      %3601 = vmatprep.mubr.bf16.mxu0 0
      %3602 = vmatmul.mubr.bf16.gmra.mrb[0].mxu0 %v3517
      %v3603 = vpop.f32.mrb[0].mxu0
      %v3604 = vadd.f32 0.0, %v3603
      %v3605 = vpop.f32.mrb[0].mxu0
      %v3606 = vpop.f32.mrb[0].mxu0
      %v3607 = vadd.f32 0.0, %v3606
      %v3608 = vpop.f32.mrb[0].mxu0
      %3609 = vmatprep.mubr.bf16.mxu0 0
      %3610 = vmatmul.mubr.bf16.gmra.mrb[0].mxu0 %v3520
      %v3611 = vpop.f32.mrb[0].mxu0
      %v3612 = vadd.f32 0.0, %v3611
      %v3613 = vpop.f32.mrb[0].mxu0
      %v3614 = vpop.f32.mrb[0].mxu0
      %v3615 = vadd.f32 0.0, %v3614
      %v3616 = vpop.f32.mrb[0].mxu0
      %3617 = vmatprep.mubr.bf16.mxu0 0
      %3618 = vmatmul.mubr.bf16.gmra.mrb[0].mxu0 %v3523
      %v3619 = vpop.f32.mrb[0].mxu0
      %v3620 = vadd.f32 0.0, %v3619
      %v3621 = vpop.f32.mrb[0].mxu0
      %v3622 = vpop.f32.mrb[0].mxu0
      %v3623 = vadd.f32 0.0, %v3622
      %v3624 = vpop.f32.mrb[0].mxu0
      %3625 = vmatprep.mubr.bf16.mxu0 0
      %3626 = vmatmul.mubr.bf16.gmra.mrb[0].mxu0 %v3526
      %v3627 = vpop.f32.mrb[0].mxu0
      %v3628 = vadd.f32 0.0, %v3627
      %v3629 = vpop.f32.mrb[0].mxu0
      %v3630 = vpop.f32.mrb[0].mxu0
      %v3631 = vadd.f32 0.0, %v3630
      %v3632 = vpop.f32.mrb[0].mxu0
      %3633 = vmatprep.mubr.bf16.mxu0 0
      %3634 = vmatmul.mubr.bf16.gmra.mrb[0].mxu0 %v3529
      %v3635 = vpop.f32.mrb[0].mxu0
      %v3636 = vadd.f32 0.0, %v3635
      %v3637 = vpop.f32.mrb[0].mxu0
      %v3638 = vpop.f32.mrb[0].mxu0
      %v3639 = vadd.f32 0.0, %v3638
      %v3640 = vpop.f32.mrb[0].mxu0
      %3641 = vmatprep.mubr.bf16.mxu0 0
      %3642 = vmatmul.mubr.bf16.gmra.mrb[0].mxu0 %v3532
      %v3643 = vpop.f32.mrb[0].mxu0
      %v3644 = vadd.f32 0.0, %v3643
      %v3645 = vpop.f32.mrb[0].mxu0
      %v3646 = vpop.f32.mrb[0].mxu0
      %v3647 = vadd.f32 0.0, %v3646
      %v3648 = vpop.f32.mrb[0].mxu0
      %3649 = vmatprep.mubr.bf16.mxu0 0
      %3650 = vmatmul.mubr.bf16.gmra.mrb[0].mxu0 %v3535
      %v3651 = vpop.f32.mrb[0].mxu0
      %v3652 = vadd.f32 0.0, %v3651
      %v3653 = vpop.f32.mrb[0].mxu0
      %v3654 = vpop.f32.mrb[0].mxu0
      %v3655 = vadd.f32 0.0, %v3654
      %v3656 = vpop.f32.mrb[0].mxu0
      %3657 = vmatprep.mubr.bf16.mxu0 0
      %3658 = vmatmul.mubr.bf16.gmra.mrb[0].mxu0 %v3538
      %v3659 = vpop.f32.mrb[0].mxu0
      %v3660 = vadd.f32 0.0, %v3659
      %v3661 = vpop.f32.mrb[0].mxu0
      %v3662 = vpop.f32.mrb[0].mxu0
      %v3663 = vadd.f32 0.0, %v3662
      %v3664 = vpop.f32.mrb[0].mxu0
      %3665 = vmatprep.mubr.bf16.mxu0 0
      %3666 = vmatmul.mubr.bf16.gmra.mrb[0].mxu0 %v3541
      %v3667 = vpop.f32.mrb[0].mxu0
      %v3668 = vadd.f32 0.0, %v3667
      %v3669 = vpop.f32.mrb[0].mxu0
      %v3670 = vpop.f32.mrb[0].mxu0
      %v3671 = vadd.f32 0.0, %v3670
      %v3672 = vpop.f32.mrb[0].mxu0
      %3673 = vmatprep.mubr.bf16.mxu0 0
      %3674 = vmatmul.mubr.bf16.gmra.mrb[0].mxu0 %v3544
      %v3675 = vpop.f32.mrb[0].mxu0
      %v3676 = vadd.f32 0.0, %v3675
      %v3677 = vpop.f32.mrb[0].mxu0
      %v3678 = vpop.f32.mrb[0].mxu0
      %v3679 = vadd.f32 0.0, %v3678
      %v3680 = vpop.f32.mrb[0].mxu0
      %3681 = vmatprep.mubr.bf16.mxu0 0
      %3682 = vmatmul.mubr.bf16.gmra.mrb[0].mxu0 %v3547
      %v3683 = vpop.f32.mrb[0].mxu0
      %v3684 = vadd.f32 0.0, %v3683
      %v3685 = vpop.f32.mrb[0].mxu0
      %v3686 = vpop.f32.mrb[0].mxu0
      %v3687 = vadd.f32 0.0, %v3686
      %v3688 = vpop.f32.mrb[0].mxu0
      %3689 = vmatprep.mubr.bf16.mxu0 0
      %3690 = vmatmul.mubr.bf16.gmra.mrb[0].mxu0 %v3550
      %v3691 = vpop.f32.mrb[0].mxu0
      %v3692 = vadd.f32 0.0, %v3691
      %v3693 = vpop.f32.mrb[0].mxu0
      %v3694 = vpop.f32.mrb[0].mxu0
      %v3695 = vadd.f32 0.0, %v3694
      %v3696 = vpop.f32.mrb[0].mxu0
      %3697 = vmatprep.mubr.bf16.mxu0 0
      %3698 = vmatmul.mubr.bf16.gmra.mrb[0].mxu0 %v3553
      %v3699 = vpop.f32.mrb[0].mxu0
      %v3700 = vadd.f32 0.0, %v3699
      %v3701 = vpop.f32.mrb[0].mxu0
      %v3702 = vpop.f32.mrb[0].mxu0
      %v3703 = vadd.f32 0.0, %v3702
      %v3704 = vpop.f32.mrb[0].mxu0
      %3705 = vmatprep.mubr.bf16.mxu0 0
      %3706 = vmatmul.mubr.bf16.gmra.mrb[0].mxu0 %v3556
      %v3707 = vpop.f32.mrb[0].mxu0
      %v3708 = vadd.f32 0.0, %v3707
      %v3709 = vpop.f32.mrb[0].mxu0
      %v3710 = vpop.f32.mrb[0].mxu0
      %v3711 = vadd.f32 0.0, %v3710
      %v3712 = vpop.f32.mrb[0].mxu0
      %3713 = vmatprep.mubr.bf16.mxu0 0
      %3714 = vmatmul.mubr.bf16.gmra.mrb[0].mxu0 %v3559
      %v3715 = vpop.f32.mrb[0].mxu0
      %v3716 = vadd.f32 0.0, %v3715
      %v3717 = vpop.f32.mrb[0].mxu0
      %v3718 = vpop.f32.mrb[0].mxu0
      %v3719 = vadd.f32 0.0, %v3718
      %v3720 = vpop.f32.mrb[0].mxu0
      %3721 = vdwg.mxu0
      %v3722 = vld [vmem:[#allocation5] sm:$0xff]
      %v3723 = vld [vmem:[#allocation5 + $0x8] sm:$0xff]
      %v3724 = vld [vmem:[#allocation5 + $0x10] sm:$0xff]
      %v3725 = vld [vmem:[#allocation5 + $0x18] sm:$0xff]
      %v3726 = vld [vmem:[#allocation5 + $0x20] sm:$0xff]
      %v3727 = vld [vmem:[#allocation5 + $0x28] sm:$0xff]
      %v3728 = vld [vmem:[#allocation5 + $0x30] sm:$0xff]
      %v3729 = vld [vmem:[#allocation5 + $0x38] sm:$0xff]
      %v3730 = vld [vmem:[#allocation5 + $0x40] sm:$0xff]
      %v3731 = vld [vmem:[#allocation5 + $0x48] sm:$0xff]
      %v3732 = vld [vmem:[#allocation5 + $0x50] sm:$0xff]
      %v3733 = vld [vmem:[#allocation5 + $0x58] sm:$0xff]
      %v3734 = vld [vmem:[#allocation5 + $0x60] sm:$0xff]
      %v3735 = vld [vmem:[#allocation5 + $0x68] sm:$0xff]
      %v3736 = vld [vmem:[#allocation5 + $0x70] sm:$0xff]
      %v3737 = vld [vmem:[#allocation5 + $0x78] sm:$0xff]
      %v3738 = vld [vmem:[#allocation5 + $0x80] sm:$0xff]
      %v3739 = vld [vmem:[#allocation5 + $0x88] sm:$0xff]
      %v3740 = vld [vmem:[#allocation5 + $0x90] sm:$0xff]
      %v3741 = vld [vmem:[#allocation5 + $0x98] sm:$0xff]
      %v3742 = vld [vmem:[#allocation5 + $0xa0] sm:$0xff]
      %v3743 = vld [vmem:[#allocation5 + $0xa8] sm:$0xff]
      %v3744 = vld [vmem:[#allocation5 + $0xb0] sm:$0xff]
      %v3745 = vld [vmem:[#allocation5 + $0xb8] sm:$0xff]
      %v3746 = vld [vmem:[#allocation5 + $0xc0] sm:$0xff]
      %v3747 = vld [vmem:[#allocation5 + $0xc8] sm:$0xff]
      %v3748 = vld [vmem:[#allocation5 + $0xd0] sm:$0xff]
      %v3749 = vld [vmem:[#allocation5 + $0xd8] sm:$0xff]
      %v3750 = vld [vmem:[#allocation5 + $0xe0] sm:$0xff]
      %v3751 = vld [vmem:[#allocation5 + $0xe8] sm:$0xff]
      %v3752 = vld [vmem:[#allocation5 + $0xf0] sm:$0xff]
      %v3753 = vld [vmem:[#allocation5 + $0xf8] sm:$0xf]
      %v3754 = vadd.f32 %v3722, %v3596
      %v3755 = vadd.f32 %v3723, %v3599
      %v3756 = vadd.f32 %v3724, %v3604
      %v3757 = vadd.f32 %v3725, %v3607
      %v3758 = vadd.f32 %v3726, %v3612
      %v3759 = vadd.f32 %v3727, %v3615
      %v3760 = vadd.f32 %v3728, %v3620
      %v3761 = vadd.f32 %v3729, %v3623
      %v3762 = vadd.f32 %v3730, %v3628
      %v3763 = vadd.f32 %v3731, %v3631
      %v3764 = vadd.f32 %v3732, %v3636
      %v3765 = vadd.f32 %v3733, %v3639
      %v3766 = vadd.f32 %v3734, %v3644
      %v3767 = vadd.f32 %v3735, %v3647
      %v3768 = vadd.f32 %v3736, %v3652
      %v3769 = vadd.f32 %v3737, %v3655
      %v3770 = vadd.f32 %v3738, %v3660
      %v3771 = vadd.f32 %v3739, %v3663
      %v3772 = vadd.f32 %v3740, %v3668
      %v3773 = vadd.f32 %v3741, %v3671
      %v3774 = vadd.f32 %v3742, %v3676
      %v3775 = vadd.f32 %v3743, %v3679
      %v3776 = vadd.f32 %v3744, %v3684
      %v3777 = vadd.f32 %v3745, %v3687
      %v3778 = vadd.f32 %v3746, %v3692
      %v3779 = vadd.f32 %v3747, %v3695
      %v3780 = vadd.f32 %v3748, %v3700
      %v3781 = vadd.f32 %v3749, %v3703
      %v3782 = vadd.f32 %v3750, %v3708
      %v3783 = vadd.f32 %v3751, %v3711
      %v3784 = vadd.f32 %v3752, %v3716
      %v3785 = vadd.f32 %v3753, %v3719
      %3786 = vst.msk [vmem:[#allocation5] sm:$0xff] %vm681, %v3754
      %3787 = vst.msk [vmem:[#allocation5 + $0x8] sm:$0xff] %vm681, %v3755
      %3788 = vst.msk [vmem:[#allocation5 + $0x10] sm:$0xff] %vm681, %v3756
      %3789 = vst.msk [vmem:[#allocation5 + $0x18] sm:$0xff] %vm681, %v3757
      %3790 = vst.msk [vmem:[#allocation5 + $0x20] sm:$0xff] %vm681, %v3758
      %3791 = vst.msk [vmem:[#allocation5 + $0x28] sm:$0xff] %vm681, %v3759
      %3792 = vst.msk [vmem:[#allocation5 + $0x30] sm:$0xff] %vm681, %v3760
      %3793 = vst.msk [vmem:[#allocation5 + $0x38] sm:$0xff] %vm681, %v3761
      %3794 = vst.msk [vmem:[#allocation5 + $0x40] sm:$0xff] %vm681, %v3762
      %3795 = vst.msk [vmem:[#allocation5 + $0x48] sm:$0xff] %vm681, %v3763
      %3796 = vst.msk [vmem:[#allocation5 + $0x50] sm:$0xff] %vm681, %v3764
      %3797 = vst.msk [vmem:[#allocation5 + $0x58] sm:$0xff] %vm681, %v3765
      %3798 = vst.msk [vmem:[#allocation5 + $0x60] sm:$0xff] %vm681, %v3766
      %3799 = vst.msk [vmem:[#allocation5 + $0x68] sm:$0xff] %vm681, %v3767
      %3800 = vst.msk [vmem:[#allocation5 + $0x70] sm:$0xff] %vm681, %v3768
      %3801 = vst.msk [vmem:[#allocation5 + $0x78] sm:$0xff] %vm681, %v3769
      %3802 = vst.msk [vmem:[#allocation5 + $0x80] sm:$0xff] %vm681, %v3770
      %3803 = vst.msk [vmem:[#allocation5 + $0x88] sm:$0xff] %vm681, %v3771
      %3804 = vst.msk [vmem:[#allocation5 + $0x90] sm:$0xff] %vm681, %v3772
      %3805 = vst.msk [vmem:[#allocation5 + $0x98] sm:$0xff] %vm681, %v3773
      %3806 = vst.msk [vmem:[#allocation5 + $0xa0] sm:$0xff] %vm681, %v3774
      %3807 = vst.msk [vmem:[#allocation5 + $0xa8] sm:$0xff] %vm681, %v3775
      %3808 = vst.msk [vmem:[#allocation5 + $0xb0] sm:$0xff] %vm681, %v3776
      %3809 = vst.msk [vmem:[#allocation5 + $0xb8] sm:$0xff] %vm681, %v3777
      %3810 = vst.msk [vmem:[#allocation5 + $0xc0] sm:$0xff] %vm681, %v3778
      %3811 = vst.msk [vmem:[#allocation5 + $0xc8] sm:$0xff] %vm681, %v3779
      %3812 = vst.msk [vmem:[#allocation5 + $0xd0] sm:$0xff] %vm681, %v3780
      %3813 = vst.msk [vmem:[#allocation5 + $0xd8] sm:$0xff] %vm681, %v3781
      %3814 = vst.msk [vmem:[#allocation5 + $0xe0] sm:$0xff] %vm681, %v3782
      %3815 = vst.msk [vmem:[#allocation5 + $0xe8] sm:$0xff] %vm681, %v3783
      %3816 = vst.msk [vmem:[#allocation5 + $0xf0] sm:$0xff] %vm681, %v3784
      %3817 = vst.msk [vmem:[#allocation5 + $0xf8] sm:$0xf] %vm2634, %v3785
      %v3818 = vld [vmem:[#allocation4 + $0x48] sm:$0xff]
      %v3819 = vld [vmem:[#allocation4 + $0x50] sm:$0xff]
      %v3820 = vld [vmem:[#allocation4 + $0x58] sm:$0xff]
      %v3821 = vld [vmem:[#allocation4 + $0x60] sm:$0xff]
      %v3822 = vld [vmem:[#allocation4 + $0x68] sm:$0xff]
      %v3823 = vld [vmem:[#allocation4 + $0x70] sm:$0xff]
      %v3824 = vld [vmem:[#allocation4 + $0x78] sm:$0xff]
      %v3825 = vld [vmem:[#allocation4 + $0x80] sm:$0xff]
      %v3826 = vld [vmem:[#allocation4 + $0x88] sm:$0xff]
      %v3827 = vld [vmem:[#allocation4 + $0x90] sm:$0xff]
      %v3828 = vld [vmem:[#allocation4 + $0x98] sm:$0xff]
      %v3829 = vld [vmem:[#allocation4 + $0xa0] sm:$0xff]
      %v3830 = vld [vmem:[#allocation4 + $0xa8] sm:$0xff]
      %v3831 = vld [vmem:[#allocation4 + $0xb0] sm:$0xff]
      %v3832 = vld [vmem:[#allocation4 + $0xb8] sm:$0xff]
      %v3833 = vld [vmem:[#allocation4 + $0xc0] sm:$0xff]
      %v3834 = vld [vmem:[#allocation4 + $0xc8] sm:$0xff]
      %v3835 = vld [vmem:[#allocation4 + $0xd0] sm:$0xff]
      %v3836 = vld [vmem:[#allocation4 + $0xd8] sm:$0xff]
      %v3837 = vld [vmem:[#allocation4 + $0xe0] sm:$0xff]
      %v3838 = vld [vmem:[#allocation4 + $0xe8] sm:$0xff]
      %v3839 = vld [vmem:[#allocation4 + $0xf0] sm:$0xff]
      %v3840 = vld [vmem:[#allocation4 + $0xf8] sm:$0xff]
      %v3841 = vld [vmem:[#allocation4 + $0x100] sm:$0xff]
      %v3842 = vld [vmem:[#allocation4 + $0x108] sm:$0xff]
      %v3843 = vld [vmem:[#allocation4 + $0x110] sm:$0xff]
      %v3844 = vld [vmem:[#allocation4 + $0x118] sm:$0xff]
      %v3845 = vld [vmem:[#allocation4 + $0x120] sm:$0xff]
      %v3846 = vld [vmem:[#allocation4 + $0x128] sm:$0xff]
      %v3847 = vld [vmem:[#allocation4 + $0x130] sm:$0xff]
      %v3848 = vld [vmem:[#allocation4 + $0x138] sm:$0xff]
      %v3849 = vld [vmem:[#allocation4 + $0x140] sm:$0xf]
      %v3850 = vpack.c.bf16 %v3819, %v3818
      %v3851 = vpack.c.bf16 %v3821, %v3820
      %v3852 = vpack.c.bf16 %v3823, %v3822
      %v3853 = vpack.c.bf16 %v3825, %v3824
      %v3854 = vpack.c.bf16 %v3827, %v3826
      %v3855 = vpack.c.bf16 %v3829, %v3828
      %v3856 = vpack.c.bf16 %v3831, %v3830
      %v3857 = vpack.c.bf16 %v3833, %v3832
      %v3858 = vpack.c.bf16 %v3835, %v3834
      %v3859 = vpack.c.bf16 %v3837, %v3836
      %v3860 = vpack.c.bf16 %v3839, %v3838
      %v3861 = vpack.c.bf16 %v3841, %v3840
      %v3862 = vpack.c.bf16 %v3843, %v3842
      %v3863 = vpack.c.bf16 %v3845, %v3844
      %v3864 = vpack.c.bf16 %v3847, %v3846
      %v3865 = vpack.c.bf16 %v3849, %v3848
      %s3866 = scalar_lea.vmem %s3, 160
      %v3867 = vld [vmem:[%s3866] sm:$0xf]
      %v3868 = vld [vmem:[%s3866 + $0x4] sm:$0xf]
      %v3869 = vld [vmem:[%s3866 + $0x8] sm:$0xf]
      %v3870 = vld [vmem:[%s3866 + $0xc] sm:$0xf]
      %v3871 = vld [vmem:[%s3866 + $0x10] sm:$0xf]
      %v3872 = vld [vmem:[%s3866 + $0x14] sm:$0xf]
      %v3873 = vld [vmem:[%s3866 + $0x18] sm:$0xf]
      %v3874 = vld [vmem:[%s3866 + $0x1c] sm:$0xf]
      %v3875 = vld [vmem:[%s3866 + $0x20] sm:$0xf]
      %v3876 = vld [vmem:[%s3866 + $0x24] sm:$0xf]
      %v3887 = vunpack.c.l.b16 %v3867
      %v3888 = vunpack.c.l.b16 %v3868
      %v3889 = vunpack.c.l.b16 %v3869
      %v3890 = vunpack.c.l.b16 %v3870
      %v3891 = vunpack.c.l.b16 %v3871
      %v3892 = vunpack.c.l.b16 %v3872
      %v3893 = vunpack.c.l.b16 %v3873
      %v3894 = vunpack.c.l.b16 %v3874
      %v3895 = vunpack.c.l.b16 %v3875
      %v3896 = vunpack.c.l.b16 %v3876
      %v3897 = vpack.c.b16 %v3888, %v3887
      %v3898 = vpack.c.b16 %v3890, %v3889
      %v3899 = vpack.c.b16 %v3892, %v3891
      %v3900 = vpack.c.b16 %v3894, %v3893
      %v3901 = vpack.c.b16 %v3896, %v3895
      %v3908 = vsel %vm280, %v3850, 0
      %v3911 = vsel %vm280, %v3851, 0
      %v3914 = vsel %vm280, %v3852, 0
      %v3917 = vsel %vm280, %v3853, 0
      %v3920 = vsel %vm280, %v3854, 0
      %v3923 = vsel %vm280, %v3855, 0
      %v3926 = vsel %vm280, %v3856, 0
      %v3929 = vsel %vm280, %v3857, 0
      %v3932 = vsel %vm280, %v3858, 0
      %v3935 = vsel %vm280, %v3859, 0
      %v3938 = vsel %vm280, %v3860, 0
      %v3941 = vsel %vm280, %v3861, 0
      %v3944 = vsel %vm280, %v3862, 0
      %v3947 = vsel %vm280, %v3863, 0
      %v3950 = vsel %vm280, %v3864, 0
      %v3953 = vsel %vm280, %v3865, 0
      %3955 = vmatprep.subr.bf16.mxu0 0
      %3956 = vmatpush1.bf16.msra.mxu0 %v3897
      %3957 = vmatprep.subr.bf16.mxu0 0
      %3958 = vmatpush1.bf16.msra.mxu0 %v3898
      %3959 = vmatprep.subr.bf16.mxu0 0
      %3960 = vmatpush1.bf16.msra.mxu0 %v3899
      %3961 = vmatprep.subr.bf16.mxu0 0
      %3962 = vmatpush1.bf16.msra.mxu0 %v3900
      %3963 = vmatprep.subr.bf16.mxu0 0
      %3964 = vmatpush1.bf16.msra.mxu0 %v3901
      %3965 = vmatprep.subr.bf16.mxu0 0
      %3966 = vmatpush1.bf16.msra.mxu0 0
      %3967 = vmatprep.subr.bf16.mxu0 0
      %3968 = vmatpush1.bf16.msra.mxu0 0
      %3969 = vmatprep.subr.bf16.mxu0 0
      %3970 = vmatpush1.bf16.msra.mxu0 0
      %3971 = vmatprep.subr.bf16.mxu0 0
      %3972 = vmatpush1.bf16.msra.mxu0 0
      %3973 = vmatprep.subr.bf16.mxu0 0
      %3974 = vmatpush1.bf16.msra.mxu0 0
      %3975 = vmatprep.subr.bf16.mxu0 0
      %3976 = vmatpush1.bf16.msra.mxu0 0
      %3977 = vmatprep.subr.bf16.mxu0 0
      %3978 = vmatpush1.bf16.msra.mxu0 0
      %3979 = vmatprep.subr.bf16.mxu0 0
      %3980 = vmatpush1.bf16.msra.mxu0 0
      %3981 = vmatprep.subr.bf16.mxu0 0
      %3982 = vmatpush1.bf16.msra.mxu0 0
      %3983 = vmatprep.subr.bf16.mxu0 0
      %3984 = vmatpush1.bf16.msra.mxu0 0
      %3985 = vmatprep.subr.bf16.mxu0 0
      %3986 = vmatpush1.bf16.msra.mxu0 0
      %3987 = vmatprep.mubr.bf16.mxu0 0
      %3988 = vmatmul.mubr.bf16.gmra.mrb[0].mxu0 %v3908
      %v3989 = vpop.f32.mrb[0].mxu0
      %v3990 = vadd.f32 0.0, %v3989
      %v3991 = vpop.f32.mrb[0].mxu0
      %v3992 = vpop.f32.mrb[0].mxu0
      %v3993 = vadd.f32 0.0, %v3992
      %v3994 = vpop.f32.mrb[0].mxu0
      %3995 = vmatprep.mubr.bf16.mxu0 0
      %3996 = vmatmul.mubr.bf16.gmra.mrb[0].mxu0 %v3911
      %v3997 = vpop.f32.mrb[0].mxu0
      %v3998 = vadd.f32 0.0, %v3997
      %v3999 = vpop.f32.mrb[0].mxu0
      %v4000 = vpop.f32.mrb[0].mxu0
      %v4001 = vadd.f32 0.0, %v4000
      %v4002 = vpop.f32.mrb[0].mxu0
      %4003 = vmatprep.mubr.bf16.mxu0 0
      %4004 = vmatmul.mubr.bf16.gmra.mrb[0].mxu0 %v3914
      %v4005 = vpop.f32.mrb[0].mxu0
      %v4006 = vadd.f32 0.0, %v4005
      %v4007 = vpop.f32.mrb[0].mxu0
      %v4008 = vpop.f32.mrb[0].mxu0
      %v4009 = vadd.f32 0.0, %v4008
      %v4010 = vpop.f32.mrb[0].mxu0
      %4011 = vmatprep.mubr.bf16.mxu0 0
      %4012 = vmatmul.mubr.bf16.gmra.mrb[0].mxu0 %v3917
      %v4013 = vpop.f32.mrb[0].mxu0
      %v4014 = vadd.f32 0.0, %v4013
      %v4015 = vpop.f32.mrb[0].mxu0
      %v4016 = vpop.f32.mrb[0].mxu0
      %v4017 = vadd.f32 0.0, %v4016
      %v4018 = vpop.f32.mrb[0].mxu0
      %4019 = vmatprep.mubr.bf16.mxu0 0
      %4020 = vmatmul.mubr.bf16.gmra.mrb[0].mxu0 %v3920
      %v4021 = vpop.f32.mrb[0].mxu0
      %v4022 = vadd.f32 0.0, %v4021
      %v4023 = vpop.f32.mrb[0].mxu0
      %v4024 = vpop.f32.mrb[0].mxu0
      %v4025 = vadd.f32 0.0, %v4024
      %v4026 = vpop.f32.mrb[0].mxu0
      %4027 = vmatprep.mubr.bf16.mxu0 0
      %4028 = vmatmul.mubr.bf16.gmra.mrb[0].mxu0 %v3923
      %v4029 = vpop.f32.mrb[0].mxu0
      %v4030 = vadd.f32 0.0, %v4029
      %v4031 = vpop.f32.mrb[0].mxu0
      %v4032 = vpop.f32.mrb[0].mxu0
      %v4033 = vadd.f32 0.0, %v4032
      %v4034 = vpop.f32.mrb[0].mxu0
      %4035 = vmatprep.mubr.bf16.mxu0 0
      %4036 = vmatmul.mubr.bf16.gmra.mrb[0].mxu0 %v3926
      %v4037 = vpop.f32.mrb[0].mxu0
      %v4038 = vadd.f32 0.0, %v4037
      %v4039 = vpop.f32.mrb[0].mxu0
      %v4040 = vpop.f32.mrb[0].mxu0
      %v4041 = vadd.f32 0.0, %v4040
      %v4042 = vpop.f32.mrb[0].mxu0
      %4043 = vmatprep.mubr.bf16.mxu0 0
      %4044 = vmatmul.mubr.bf16.gmra.mrb[0].mxu0 %v3929
      %v4045 = vpop.f32.mrb[0].mxu0
      %v4046 = vadd.f32 0.0, %v4045
      %v4047 = vpop.f32.mrb[0].mxu0
      %v4048 = vpop.f32.mrb[0].mxu0
      %v4049 = vadd.f32 0.0, %v4048
      %v4050 = vpop.f32.mrb[0].mxu0
      %4051 = vmatprep.mubr.bf16.mxu0 0
      %4052 = vmatmul.mubr.bf16.gmra.mrb[0].mxu0 %v3932
      %v4053 = vpop.f32.mrb[0].mxu0
      %v4054 = vadd.f32 0.0, %v4053
      %v4055 = vpop.f32.mrb[0].mxu0
      %v4056 = vpop.f32.mrb[0].mxu0
      %v4057 = vadd.f32 0.0, %v4056
      %v4058 = vpop.f32.mrb[0].mxu0
      %4059 = vmatprep.mubr.bf16.mxu0 0
      %4060 = vmatmul.mubr.bf16.gmra.mrb[0].mxu0 %v3935
      %v4061 = vpop.f32.mrb[0].mxu0
      %v4062 = vadd.f32 0.0, %v4061
      %v4063 = vpop.f32.mrb[0].mxu0
      %v4064 = vpop.f32.mrb[0].mxu0
      %v4065 = vadd.f32 0.0, %v4064
      %v4066 = vpop.f32.mrb[0].mxu0
      %4067 = vmatprep.mubr.bf16.mxu0 0
      %4068 = vmatmul.mubr.bf16.gmra.mrb[0].mxu0 %v3938
      %v4069 = vpop.f32.mrb[0].mxu0
      %v4070 = vadd.f32 0.0, %v4069
      %v4071 = vpop.f32.mrb[0].mxu0
      %v4072 = vpop.f32.mrb[0].mxu0
      %v4073 = vadd.f32 0.0, %v4072
      %v4074 = vpop.f32.mrb[0].mxu0
      %4075 = vmatprep.mubr.bf16.mxu0 0
      %4076 = vmatmul.mubr.bf16.gmra.mrb[0].mxu0 %v3941
      %v4077 = vpop.f32.mrb[0].mxu0
      %v4078 = vadd.f32 0.0, %v4077
      %v4079 = vpop.f32.mrb[0].mxu0
      %v4080 = vpop.f32.mrb[0].mxu0
      %v4081 = vadd.f32 0.0, %v4080
      %v4082 = vpop.f32.mrb[0].mxu0
      %4083 = vmatprep.mubr.bf16.mxu0 0
      %4084 = vmatmul.mubr.bf16.gmra.mrb[0].mxu0 %v3944
      %v4085 = vpop.f32.mrb[0].mxu0
      %v4086 = vadd.f32 0.0, %v4085
      %v4087 = vpop.f32.mrb[0].mxu0
      %v4088 = vpop.f32.mrb[0].mxu0
      %v4089 = vadd.f32 0.0, %v4088
      %v4090 = vpop.f32.mrb[0].mxu0
      %4091 = vmatprep.mubr.bf16.mxu0 0
      %4092 = vmatmul.mubr.bf16.gmra.mrb[0].mxu0 %v3947
      %v4093 = vpop.f32.mrb[0].mxu0
      %v4094 = vadd.f32 0.0, %v4093
      %v4095 = vpop.f32.mrb[0].mxu0
      %v4096 = vpop.f32.mrb[0].mxu0
      %v4097 = vadd.f32 0.0, %v4096
      %v4098 = vpop.f32.mrb[0].mxu0
      %4099 = vmatprep.mubr.bf16.mxu0 0
      %4100 = vmatmul.mubr.bf16.gmra.mrb[0].mxu0 %v3950
      %v4101 = vpop.f32.mrb[0].mxu0
      %v4102 = vadd.f32 0.0, %v4101
      %v4103 = vpop.f32.mrb[0].mxu0
      %v4104 = vpop.f32.mrb[0].mxu0
      %v4105 = vadd.f32 0.0, %v4104
      %v4106 = vpop.f32.mrb[0].mxu0
      %4107 = vmatprep.mubr.bf16.mxu0 0
      %4108 = vmatmul.mubr.bf16.gmra.mrb[0].mxu0 %v3953
      %v4109 = vpop.f32.mrb[0].mxu0
      %v4110 = vadd.f32 0.0, %v4109
      %v4111 = vpop.f32.mrb[0].mxu0
      %v4112 = vpop.f32.mrb[0].mxu0
      %v4113 = vadd.f32 0.0, %v4112
      %v4114 = vpop.f32.mrb[0].mxu0
      %4115 = vdwg.mxu0
      %v4116 = vld [vmem:[#allocation5] sm:$0xff]
      %v4117 = vld [vmem:[#allocation5 + $0x8] sm:$0xff]
      %v4118 = vld [vmem:[#allocation5 + $0x10] sm:$0xff]
      %v4119 = vld [vmem:[#allocation5 + $0x18] sm:$0xff]
      %v4120 = vld [vmem:[#allocation5 + $0x20] sm:$0xff]
      %v4121 = vld [vmem:[#allocation5 + $0x28] sm:$0xff]
      %v4122 = vld [vmem:[#allocation5 + $0x30] sm:$0xff]
      %v4123 = vld [vmem:[#allocation5 + $0x38] sm:$0xff]
      %v4124 = vld [vmem:[#allocation5 + $0x40] sm:$0xff]
      %v4125 = vld [vmem:[#allocation5 + $0x48] sm:$0xff]
      %v4126 = vld [vmem:[#allocation5 + $0x50] sm:$0xff]
      %v4127 = vld [vmem:[#allocation5 + $0x58] sm:$0xff]
      %v4128 = vld [vmem:[#allocation5 + $0x60] sm:$0xff]
      %v4129 = vld [vmem:[#allocation5 + $0x68] sm:$0xff]
      %v4130 = vld [vmem:[#allocation5 + $0x70] sm:$0xff]
      %v4131 = vld [vmem:[#allocation5 + $0x78] sm:$0xff]
      %v4132 = vld [vmem:[#allocation5 + $0x80] sm:$0xff]
      %v4133 = vld [vmem:[#allocation5 + $0x88] sm:$0xff]
      %v4134 = vld [vmem:[#allocation5 + $0x90] sm:$0xff]
      %v4135 = vld [vmem:[#allocation5 + $0x98] sm:$0xff]
      %v4136 = vld [vmem:[#allocation5 + $0xa0] sm:$0xff]
      %v4137 = vld [vmem:[#allocation5 + $0xa8] sm:$0xff]
      %v4138 = vld [vmem:[#allocation5 + $0xb0] sm:$0xff]
      %v4139 = vld [vmem:[#allocation5 + $0xb8] sm:$0xff]
      %v4140 = vld [vmem:[#allocation5 + $0xc0] sm:$0xff]
      %v4141 = vld [vmem:[#allocation5 + $0xc8] sm:$0xff]
      %v4142 = vld [vmem:[#allocation5 + $0xd0] sm:$0xff]
      %v4143 = vld [vmem:[#allocation5 + $0xd8] sm:$0xff]
      %v4144 = vld [vmem:[#allocation5 + $0xe0] sm:$0xff]
      %v4145 = vld [vmem:[#allocation5 + $0xe8] sm:$0xff]
      %v4146 = vld [vmem:[#allocation5 + $0xf0] sm:$0xff]
      %v4147 = vld [vmem:[#allocation5 + $0xf8] sm:$0xf]
      %v4148 = vadd.f32 %v4116, %v3990
      %v4149 = vadd.f32 %v4117, %v3993
      %v4150 = vadd.f32 %v4118, %v3998
      %v4151 = vadd.f32 %v4119, %v4001
      %v4152 = vadd.f32 %v4120, %v4006
      %v4153 = vadd.f32 %v4121, %v4009
      %v4154 = vadd.f32 %v4122, %v4014
      %v4155 = vadd.f32 %v4123, %v4017
      %v4156 = vadd.f32 %v4124, %v4022
      %v4157 = vadd.f32 %v4125, %v4025
      %v4158 = vadd.f32 %v4126, %v4030
      %v4159 = vadd.f32 %v4127, %v4033
      %v4160 = vadd.f32 %v4128, %v4038
      %v4161 = vadd.f32 %v4129, %v4041
      %v4162 = vadd.f32 %v4130, %v4046
      %v4163 = vadd.f32 %v4131, %v4049
      %v4164 = vadd.f32 %v4132, %v4054
      %v4165 = vadd.f32 %v4133, %v4057
      %v4166 = vadd.f32 %v4134, %v4062
      %v4167 = vadd.f32 %v4135, %v4065
      %v4168 = vadd.f32 %v4136, %v4070
      %v4169 = vadd.f32 %v4137, %v4073
      %v4170 = vadd.f32 %v4138, %v4078
      %v4171 = vadd.f32 %v4139, %v4081
      %v4172 = vadd.f32 %v4140, %v4086
      %v4173 = vadd.f32 %v4141, %v4089
      %v4174 = vadd.f32 %v4142, %v4094
      %v4175 = vadd.f32 %v4143, %v4097
      %v4176 = vadd.f32 %v4144, %v4102
      %v4177 = vadd.f32 %v4145, %v4105
      %v4178 = vadd.f32 %v4146, %v4110
      %v4179 = vadd.f32 %v4147, %v4113
      %4180 = vst.msk [vmem:[#allocation5] sm:$0xff] %vm681, %v4148
      %4181 = vst.msk [vmem:[#allocation5 + $0x8] sm:$0xff] %vm681, %v4149
      %4182 = vst.msk [vmem:[#allocation5 + $0x10] sm:$0xff] %vm681, %v4150
      %4183 = vst.msk [vmem:[#allocation5 + $0x18] sm:$0xff] %vm681, %v4151
      %4184 = vst.msk [vmem:[#allocation5 + $0x20] sm:$0xff] %vm681, %v4152
      %4185 = vst.msk [vmem:[#allocation5 + $0x28] sm:$0xff] %vm681, %v4153
      %4186 = vst.msk [vmem:[#allocation5 + $0x30] sm:$0xff] %vm681, %v4154
      %4187 = vst.msk [vmem:[#allocation5 + $0x38] sm:$0xff] %vm681, %v4155
      %4188 = vst.msk [vmem:[#allocation5 + $0x40] sm:$0xff] %vm681, %v4156
      %4189 = vst.msk [vmem:[#allocation5 + $0x48] sm:$0xff] %vm681, %v4157
      %4190 = vst.msk [vmem:[#allocation5 + $0x50] sm:$0xff] %vm681, %v4158
      %4191 = vst.msk [vmem:[#allocation5 + $0x58] sm:$0xff] %vm681, %v4159
      %4192 = vst.msk [vmem:[#allocation5 + $0x60] sm:$0xff] %vm681, %v4160
      %4193 = vst.msk [vmem:[#allocation5 + $0x68] sm:$0xff] %vm681, %v4161
      %4194 = vst.msk [vmem:[#allocation5 + $0x70] sm:$0xff] %vm681, %v4162
      %4195 = vst.msk [vmem:[#allocation5 + $0x78] sm:$0xff] %vm681, %v4163
      %4196 = vst.msk [vmem:[#allocation5 + $0x80] sm:$0xff] %vm681, %v4164
      %4197 = vst.msk [vmem:[#allocation5 + $0x88] sm:$0xff] %vm681, %v4165
      %4198 = vst.msk [vmem:[#allocation5 + $0x90] sm:$0xff] %vm681, %v4166
      %4199 = vst.msk [vmem:[#allocation5 + $0x98] sm:$0xff] %vm681, %v4167
      %4200 = vst.msk [vmem:[#allocation5 + $0xa0] sm:$0xff] %vm681, %v4168
      %4201 = vst.msk [vmem:[#allocation5 + $0xa8] sm:$0xff] %vm681, %v4169
      %4202 = vst.msk [vmem:[#allocation5 + $0xb0] sm:$0xff] %vm681, %v4170
      %4203 = vst.msk [vmem:[#allocation5 + $0xb8] sm:$0xff] %vm681, %v4171
      %4204 = vst.msk [vmem:[#allocation5 + $0xc0] sm:$0xff] %vm681, %v4172
      %4205 = vst.msk [vmem:[#allocation5 + $0xc8] sm:$0xff] %vm681, %v4173
      %4206 = vst.msk [vmem:[#allocation5 + $0xd0] sm:$0xff] %vm681, %v4174
      %4207 = vst.msk [vmem:[#allocation5 + $0xd8] sm:$0xff] %vm681, %v4175
      %4208 = vst.msk [vmem:[#allocation5 + $0xe0] sm:$0xff] %vm681, %v4176
      %4209 = vst.msk [vmem:[#allocation5 + $0xe8] sm:$0xff] %vm681, %v4177
      %4210 = vst.msk [vmem:[#allocation5 + $0xf0] sm:$0xff] %vm681, %v4178
      %4211 = vst.msk [vmem:[#allocation5 + $0xf8] sm:$0xf] %vm2634, %v4179
      %v4212 = vld [vmem:[#allocation5] ss:$2 sm:$0xff]
      %s4213 = scalar_lea.vmem [#allocation5], 16
      %v4214 = vld [vmem:[%s4213] ss:$2 sm:$0xff]
      %s4215 = scalar_lea.vmem [#allocation5], 32
      %v4216 = vld [vmem:[%s4215] ss:$2 sm:$0xff]
      %s4217 = scalar_lea.vmem [#allocation5], 48
      %v4218 = vld [vmem:[%s4217] ss:$2 sm:$0xff]
      %s4219 = scalar_lea.vmem [#allocation5], 64
      %v4220 = vld [vmem:[%s4219] ss:$2 sm:$0xff]
      %s4221 = scalar_lea.vmem [#allocation5], 80
      %v4222 = vld [vmem:[%s4221] ss:$2 sm:$0xff]
      %s4223 = scalar_lea.vmem [#allocation5], 96
      %v4224 = vld [vmem:[%s4223] ss:$2 sm:$0xff]
      %s4225 = scalar_lea.vmem [#allocation5], 112
      %v4226 = vld [vmem:[%s4225] ss:$2 sm:$0xff]
      %s4227 = scalar_lea.vmem [#allocation5], 128
      %v4228 = vld [vmem:[%s4227] ss:$2 sm:$0xff]
      %s4229 = scalar_lea.vmem [#allocation5], 144
      %v4230 = vld [vmem:[%s4229] ss:$2 sm:$0xff]
      %s4231 = scalar_lea.vmem [#allocation5], 160
      %v4232 = vld [vmem:[%s4231] ss:$2 sm:$0xff]
      %s4233 = scalar_lea.vmem [#allocation5], 176
      %v4234 = vld [vmem:[%s4233] ss:$2 sm:$0xff]
      %s4235 = scalar_lea.vmem [#allocation5], 192
      %v4236 = vld [vmem:[%s4235] ss:$2 sm:$0xff]
      %s4237 = scalar_lea.vmem [#allocation5], 208
      %v4238 = vld [vmem:[%s4237] ss:$2 sm:$0xff]
      %s4239 = scalar_lea.vmem [#allocation5], 224
      %v4240 = vld [vmem:[%s4239] ss:$2 sm:$0xff]
      %s4241 = scalar_lea.vmem [#allocation5], 240
      %v4242 = vld [vmem:[%s4241] ss:$2 sm:$0x3f]
      %s4243 = scalar_lea.vmem [#allocation5], 1
      %v4244 = vld [vmem:[%s4243] ss:$2 sm:$0xff]
      %s4245 = scalar_lea.vmem [#allocation5], 17
      %v4246 = vld [vmem:[%s4245] ss:$2 sm:$0xff]
      %s4247 = scalar_lea.vmem [#allocation5], 33
      %v4248 = vld [vmem:[%s4247] ss:$2 sm:$0xff]
      %s4249 = scalar_lea.vmem [#allocation5], 49
      %v4250 = vld [vmem:[%s4249] ss:$2 sm:$0xff]
      %s4251 = scalar_lea.vmem [#allocation5], 65
      %v4252 = vld [vmem:[%s4251] ss:$2 sm:$0xff]
      %s4253 = scalar_lea.vmem [#allocation5], 81
      %v4254 = vld [vmem:[%s4253] ss:$2 sm:$0xff]
      %s4255 = scalar_lea.vmem [#allocation5], 97
      %v4256 = vld [vmem:[%s4255] ss:$2 sm:$0xff]
      %s4257 = scalar_lea.vmem [#allocation5], 113
      %v4258 = vld [vmem:[%s4257] ss:$2 sm:$0xff]
      %s4259 = scalar_lea.vmem [#allocation5], 129
      %v4260 = vld [vmem:[%s4259] ss:$2 sm:$0xff]
      %s4261 = scalar_lea.vmem [#allocation5], 145
      %v4262 = vld [vmem:[%s4261] ss:$2 sm:$0xff]
      %s4263 = scalar_lea.vmem [#allocation5], 161
      %v4264 = vld [vmem:[%s4263] ss:$2 sm:$0xff]
      %s4265 = scalar_lea.vmem [#allocation5], 177
      %v4266 = vld [vmem:[%s4265] ss:$2 sm:$0xff]
      %s4267 = scalar_lea.vmem [#allocation5], 193
      %v4268 = vld [vmem:[%s4267] ss:$2 sm:$0xff]
      %s4269 = scalar_lea.vmem [#allocation5], 209
      %v4270 = vld [vmem:[%s4269] ss:$2 sm:$0xff]
      %s4271 = scalar_lea.vmem [#allocation5], 225
      %v4272 = vld [vmem:[%s4271] ss:$2 sm:$0xff]
      %s4273 = scalar_lea.vmem [#allocation5], 241
      %v4274 = vld [vmem:[%s4273] ss:$2 sm:$0x3f]
      %v4275 = vmax.f32 %v4212, %v4244
      %v4276 = vmax.f32 %v4214, %v4246
      %v4277 = vmax.f32 %v4216, %v4248
      %v4278 = vmax.f32 %v4218, %v4250
      %v4279 = vmax.f32 %v4220, %v4252
      %v4280 = vmax.f32 %v4222, %v4254
      %v4281 = vmax.f32 %v4224, %v4256
      %v4282 = vmax.f32 %v4226, %v4258
      %v4283 = vmax.f32 %v4228, %v4260
      %v4284 = vmax.f32 %v4230, %v4262
      %v4285 = vmax.f32 %v4232, %v4264
      %v4286 = vmax.f32 %v4234, %v4266
      %v4287 = vmax.f32 %v4236, %v4268
      %v4288 = vmax.f32 %v4238, %v4270
      %v4289 = vmax.f32 %v4240, %v4272
      %v4290 = vmax.f32 %v4242, %v4274
      %4291 = vst.msk [vmem:[#allocation6] sm:$0xff] %vm681, %v4275
      %4292 = vst.msk [vmem:[#allocation6 + $0x8] sm:$0xff] %vm681, %v4276
      %4293 = vst.msk [vmem:[#allocation6 + $0x10] sm:$0xff] %vm681, %v4277
      %4294 = vst.msk [vmem:[#allocation6 + $0x18] sm:$0xff] %vm681, %v4278
      %4295 = vst.msk [vmem:[#allocation6 + $0x20] sm:$0xff] %vm681, %v4279
      %4296 = vst.msk [vmem:[#allocation6 + $0x28] sm:$0xff] %vm681, %v4280
      %4297 = vst.msk [vmem:[#allocation6 + $0x30] sm:$0xff] %vm681, %v4281
      %4298 = vst.msk [vmem:[#allocation6 + $0x38] sm:$0xff] %vm681, %v4282
      %4299 = vst.msk [vmem:[#allocation6 + $0x40] sm:$0xff] %vm681, %v4283
      %4300 = vst.msk [vmem:[#allocation6 + $0x48] sm:$0xff] %vm681, %v4284
      %4301 = vst.msk [vmem:[#allocation6 + $0x50] sm:$0xff] %vm681, %v4285
      %4302 = vst.msk [vmem:[#allocation6 + $0x58] sm:$0xff] %vm681, %v4286
      %4303 = vst.msk [vmem:[#allocation6 + $0x60] sm:$0xff] %vm681, %v4287
      %4304 = vst.msk [vmem:[#allocation6 + $0x68] sm:$0xff] %vm681, %v4288
      %4305 = vst.msk [vmem:[#allocation6 + $0x70] sm:$0xff] %vm681, %v4289
      %vm4306 = vcmask 259072
      %4307 = vst.msk [vmem:[#allocation6 + $0x78] sm:$0x3f] %vm4306, %v4290
      %v4308 = vld [vmem:[%s4] sm:$0x1]
      %v4309 = vld [vmem:[#allocation6] sm:$0x7f]
      %v4310 = vld [vmem:[#allocation6 + $0x9] sm:$0x7f]
      %v4311 = vmax.f32 %v4309, %v4310
      %v4313 = vlaneseq
      %v4314 = vshrl.u32 %v4313, 7
      %v4315 = vsub.s32 0, %v4314
      %v4316 = vrot.slane %v4308, %v4315
      %v4318 = vadd.f32 %v4311, %v4316
      %v4319 = vmax.f32 %v4318, 0.0
      %vm4320 = vcmask 260096
      %4321 = vst.msk [vmem:[#allocation7] sm:$0x7f] %vm4320, %v4319
      %v4322 = vld [vmem:[#allocation6 + $0x12] sm:$0x7f]
      %v4323 = vld [vmem:[#allocation6 + $0x1b] sm:$0x7f]
      %v4324 = vmax.f32 %v4322, %v4323
      %v4325 = vadd.f32 %v4324, %v4316
      %v4326 = vmax.f32 %v4325, 0.0
      %4327 = vst.msk [vmem:[#allocation7 + $0x7] sm:$0x7f] %vm4320, %v4326
      %v4328 = vld [vmem:[#allocation6 + $0x24] sm:$0x7f]
      %v4329 = vld [vmem:[#allocation6 + $0x2d] sm:$0x7f]
      %v4330 = vmax.f32 %v4328, %v4329
      %v4331 = vadd.f32 %v4330, %v4316
      %v4332 = vmax.f32 %v4331, 0.0
      %4333 = vst.msk [vmem:[#allocation7 + $0xe] sm:$0x7f] %vm4320, %v4332
      %v4334 = vld [vmem:[#allocation6 + $0x36] sm:$0x7f]
      %v4335 = vld [vmem:[#allocation6 + $0x3f] sm:$0x7f]
      %v4336 = vmax.f32 %v4334, %v4335
      %v4337 = vadd.f32 %v4336, %v4316
      %v4338 = vmax.f32 %v4337, 0.0
      %4339 = vst.msk [vmem:[#allocation7 + $0x15] sm:$0x7f] %vm4320, %v4338
      %v4340 = vld [vmem:[#allocation6 + $0x48] sm:$0x7f]
      %v4341 = vld [vmem:[#allocation6 + $0x51] sm:$0x7f]
      %v4342 = vmax.f32 %v4340, %v4341
      %v4343 = vadd.f32 %v4342, %v4316
      %v4344 = vmax.f32 %v4343, 0.0
      %4345 = vst.msk [vmem:[#allocation7 + $0x1c] sm:$0x7f] %vm4320, %v4344
      %v4346 = vld [vmem:[#allocation6 + $0x5a] sm:$0x7f]
      %v4347 = vld [vmem:[#allocation6 + $0x63] sm:$0x7f]
      %v4348 = vmax.f32 %v4346, %v4347
      %v4349 = vadd.f32 %v4348, %v4316
      %v4350 = vmax.f32 %v4349, 0.0
      %4351 = vst.msk [vmem:[#allocation7 + $0x23] sm:$0x7f] %vm4320, %v4350
      %v4352 = vld [vmem:[#allocation6 + $0x6c] sm:$0x7f]
      %v4353 = vld [vmem:[#allocation6 + $0x75] sm:$0x7f]
      %v4354 = vmax.f32 %v4352, %v4353
      %v4355 = vadd.f32 %v4354, %v4316
      %v4356 = vmax.f32 %v4355, 0.0
      %4357 = vst.msk [vmem:[#allocation7 + $0x2a] sm:$0x7f] %vm4320, %v4356
      %v4358 = vld [vmem:[#allocation7] sm:$0xff]
      %v4359 = vld [vmem:[#allocation7 + $0x8] sm:$0xff]
      %v4360 = vld [vmem:[#allocation7 + $0x10] sm:$0xff]
      %v4361 = vld [vmem:[#allocation7 + $0x18] sm:$0xff]
      %v4362 = vld [vmem:[#allocation7 + $0x20] sm:$0xff]
      %v4363 = vld [vmem:[#allocation7 + $0x28] sm:$0xff]
      %v4364 = vld [vmem:[#allocation7 + $0x30] sm:$0x1]
      %v4365 = vld [vmem:[%s5] sm:$0xff]
      %v4366 = vld [vmem:[%s5 + $0x8] sm:$0xff]
      %v4367 = vld [vmem:[%s5 + $0x10] sm:$0xff]
      %v4368 = vld [vmem:[%s5 + $0x18] sm:$0xff]
      %v4369 = vld [vmem:[%s5 + $0x20] sm:$0xff]
      %v4370 = vld [vmem:[%s5 + $0x28] sm:$0xff]
      %v4371 = vld [vmem:[%s5 + $0x30] sm:$0x1]
      %v4372 = vld [vmem:[%s5 + $0x38] sm:$0xff]
      %v4373 = vld [vmem:[%s5 + $0x40] sm:$0xff]
      %v4374 = vld [vmem:[%s5 + $0x48] sm:$0xff]
      %v4375 = vld [vmem:[%s5 + $0x50] sm:$0xff]
      %v4376 = vld [vmem:[%s5 + $0x58] sm:$0xff]
      %v4377 = vld [vmem:[%s5 + $0x60] sm:$0xff]
      %v4378 = vld [vmem:[%s5 + $0x68] sm:$0x1]
      %v4379 = vld [vmem:[%s5 + $0x70] sm:$0xff]
      %v4380 = vld [vmem:[%s5 + $0x78] sm:$0xff]
      %v4381 = vld [vmem:[%s5 + $0x80] sm:$0xff]
      %v4382 = vld [vmem:[%s5 + $0x88] sm:$0xff]
      %v4383 = vld [vmem:[%s5 + $0x90] sm:$0xff]
      %v4384 = vld [vmem:[%s5 + $0x98] sm:$0xff]
      %v4385 = vld [vmem:[%s5 + $0xa0] sm:$0x1]
      %v4386 = vld [vmem:[%s5 + $0xa8] sm:$0xff]
      %v4387 = vld [vmem:[%s5 + $0xb0] sm:$0xff]
      %v4388 = vld [vmem:[%s5 + $0xb8] sm:$0xff]
      %v4389 = vld [vmem:[%s5 + $0xc0] sm:$0xff]
      %v4390 = vld [vmem:[%s5 + $0xc8] sm:$0xff]
      %v4391 = vld [vmem:[%s5 + $0xd0] sm:$0xff]
      %v4392 = vld [vmem:[%s5 + $0xd8] sm:$0x1]
      %v4393 = vld [vmem:[%s5 + $0xe0] sm:$0xff]
      %v4394 = vld [vmem:[%s5 + $0xe8] sm:$0xff]
      %v4395 = vld [vmem:[%s5 + $0xf0] sm:$0xff]
      %v4396 = vld [vmem:[%s5 + $0xf8] sm:$0xff]
      %v4397 = vld [vmem:[%s5 + $0x100] sm:$0xff]
      %v4398 = vld [vmem:[%s5 + $0x108] sm:$0xff]
      %v4399 = vld [vmem:[%s5 + $0x110] sm:$0x1]
      %v4400 = vld [vmem:[%s5 + $0x118] sm:$0xff]
      %v4401 = vld [vmem:[%s5 + $0x120] sm:$0xff]
      %v4402 = vld [vmem:[%s5 + $0x128] sm:$0xff]
      %v4403 = vld [vmem:[%s5 + $0x130] sm:$0xff]
      %v4404 = vld [vmem:[%s5 + $0x138] sm:$0xff]
      %v4405 = vld [vmem:[%s5 + $0x140] sm:$0xff]
      %v4406 = vld [vmem:[%s5 + $0x148] sm:$0x1]
      %v4407 = vld [vmem:[%s5 + $0x150] sm:$0xff]
      %v4408 = vld [vmem:[%s5 + $0x158] sm:$0xff]
      %v4409 = vld [vmem:[%s5 + $0x160] sm:$0xff]
      %v4410 = vld [vmem:[%s5 + $0x168] sm:$0xff]
      %v4411 = vld [vmem:[%s5 + $0x170] sm:$0xff]
      %v4412 = vld [vmem:[%s5 + $0x178] sm:$0xff]
      %v4413 = vld [vmem:[%s5 + $0x180] sm:$0x1]
      %v4414 = vld [vmem:[%s5 + $0x188] sm:$0xff]
      %v4415 = vld [vmem:[%s5 + $0x190] sm:$0xff]
      %v4416 = vld [vmem:[%s5 + $0x198] sm:$0xff]
      %v4417 = vld [vmem:[%s5 + $0x1a0] sm:$0xff]
      %v4418 = vld [vmem:[%s5 + $0x1a8] sm:$0xff]
      %v4419 = vld [vmem:[%s5 + $0x1b0] sm:$0xff]
      %v4420 = vld [vmem:[%s5 + $0x1b8] sm:$0x1]
      %v4421 = vld [vmem:[%s5 + $0x1c0] sm:$0xff]
      %v4422 = vld [vmem:[%s5 + $0x1c8] sm:$0xff]
      %v4423 = vld [vmem:[%s5 + $0x1d0] sm:$0xff]
      %v4424 = vld [vmem:[%s5 + $0x1d8] sm:$0xff]
      %v4425 = vld [vmem:[%s5 + $0x1e0] sm:$0xff]
      %v4426 = vld [vmem:[%s5 + $0x1e8] sm:$0xff]
      %v4427 = vld [vmem:[%s5 + $0x1f0] sm:$0x1]
      %v4428 = vld [vmem:[%s5 + $0x1f8] sm:$0xff]
      %v4429 = vld [vmem:[%s5 + $0x200] sm:$0xff]
      %v4430 = vld [vmem:[%s5 + $0x208] sm:$0xff]
      %v4431 = vld [vmem:[%s5 + $0x210] sm:$0xff]
      %v4432 = vld [vmem:[%s5 + $0x218] sm:$0xff]
      %v4433 = vld [vmem:[%s5 + $0x220] sm:$0xff]
      %v4434 = vld [vmem:[%s5 + $0x228] sm:$0x1]
      %v4435 = vmul.f32 %v4365, %v4358
      %v4436 = vmul.f32 %v4366, %v4359
      %v4437 = vmul.f32 %v4367, %v4360
      %v4438 = vmul.f32 %v4368, %v4361
      %v4439 = vmul.f32 %v4369, %v4362
      %v4440 = vmul.f32 %v4370, %v4363
      %v4441 = vmul.f32 %v4371, %v4364
      %v4442 = vmul.f32 %v4372, %v4358
      %v4443 = vmul.f32 %v4373, %v4359
      %v4444 = vmul.f32 %v4374, %v4360
      %v4445 = vmul.f32 %v4375, %v4361
      %v4446 = vmul.f32 %v4376, %v4362
      %v4447 = vmul.f32 %v4377, %v4363
      %v4448 = vmul.f32 %v4378, %v4364
      %v4449 = vmul.f32 %v4379, %v4358
      %v4450 = vmul.f32 %v4380, %v4359
      %v4451 = vmul.f32 %v4381, %v4360
      %v4452 = vmul.f32 %v4382, %v4361
      %v4453 = vmul.f32 %v4383, %v4362
      %v4454 = vmul.f32 %v4384, %v4363
      %v4455 = vmul.f32 %v4385, %v4364
      %v4456 = vmul.f32 %v4386, %v4358
      %v4457 = vmul.f32 %v4387, %v4359
      %v4458 = vmul.f32 %v4388, %v4360
      %v4459 = vmul.f32 %v4389, %v4361
      %v4460 = vmul.f32 %v4390, %v4362
      %v4461 = vmul.f32 %v4391, %v4363
      %v4462 = vmul.f32 %v4392, %v4364
      %v4463 = vmul.f32 %v4393, %v4358
      %v4464 = vmul.f32 %v4394, %v4359
      %v4465 = vmul.f32 %v4395, %v4360
      %v4466 = vmul.f32 %v4396, %v4361
      %v4467 = vmul.f32 %v4397, %v4362
      %v4468 = vmul.f32 %v4398, %v4363
      %v4469 = vmul.f32 %v4399, %v4364
      %v4470 = vmul.f32 %v4400, %v4358
      %v4471 = vmul.f32 %v4401, %v4359
      %v4472 = vmul.f32 %v4402, %v4360
      %v4473 = vmul.f32 %v4403, %v4361
      %v4474 = vmul.f32 %v4404, %v4362
      %v4475 = vmul.f32 %v4405, %v4363
      %v4476 = vmul.f32 %v4406, %v4364
      %v4477 = vmul.f32 %v4407, %v4358
      %v4478 = vmul.f32 %v4408, %v4359
      %v4479 = vmul.f32 %v4409, %v4360
      %v4480 = vmul.f32 %v4410, %v4361
      %v4481 = vmul.f32 %v4411, %v4362
      %v4482 = vmul.f32 %v4412, %v4363
      %v4483 = vmul.f32 %v4413, %v4364
      %v4484 = vmul.f32 %v4414, %v4358
      %v4485 = vmul.f32 %v4415, %v4359
      %v4486 = vmul.f32 %v4416, %v4360
      %v4487 = vmul.f32 %v4417, %v4361
      %v4488 = vmul.f32 %v4418, %v4362
      %v4489 = vmul.f32 %v4419, %v4363
      %v4490 = vmul.f32 %v4420, %v4364
      %v4491 = vmul.f32 %v4421, %v4358
      %v4492 = vmul.f32 %v4422, %v4359
      %v4493 = vmul.f32 %v4423, %v4360
      %v4494 = vmul.f32 %v4424, %v4361
      %v4495 = vmul.f32 %v4425, %v4362
      %v4496 = vmul.f32 %v4426, %v4363
      %v4497 = vmul.f32 %v4427, %v4364
      %v4498 = vmul.f32 %v4428, %v4358
      %v4499 = vmul.f32 %v4429, %v4359
      %v4500 = vmul.f32 %v4430, %v4360
      %v4501 = vmul.f32 %v4431, %v4361
      %v4502 = vmul.f32 %v4432, %v4362
      %v4503 = vmul.f32 %v4433, %v4363
      %v4504 = vmul.f32 %v4434, %v4364
      %v4505 = vsel %vm681, %v4435, 0.0
      %v4506 = vsel %vm681, %v4436, 0.0
      %v4507 = vadd.f32 %v4505, %v4506
      %v4508 = vsel %vm681, %v4437, 0.0
      %v4509 = vadd.f32 %v4507, %v4508
      %v4510 = vsel %vm681, %v4438, 0.0
      %v4511 = vadd.f32 %v4509, %v4510
      %v4512 = vsel %vm681, %v4439, 0.0
      %v4513 = vadd.f32 %v4511, %v4512
      %v4514 = vsel %vm681, %v4440, 0.0
      %v4515 = vadd.f32 %v4513, %v4514
      %vm4516 = vcmask 253952
      %v4517 = vsel %vm4516, %v4441, 0.0
      %v4518 = vadd.f32 %v4515, %v4517
      %v4519 = vrot.slane %v4518, 4
      %v4520 = vadd.f32 %v4518, %v4519
      %v4521 = vrot.slane %v4520, 2
      %v4522 = vadd.f32 %v4520, %v4521
      %v4523 = vrot.slane %v4522, 1
      %v4524 = vadd.f32 %v4522, %v4523
      %v4525 = vsel %vm681, %v4442, 0.0
      %v4526 = vsel %vm681, %v4443, 0.0
      %v4527 = vadd.f32 %v4525, %v4526
      %v4528 = vsel %vm681, %v4444, 0.0
      %v4529 = vadd.f32 %v4527, %v4528
      %v4530 = vsel %vm681, %v4445, 0.0
      %v4531 = vadd.f32 %v4529, %v4530
      %v4532 = vsel %vm681, %v4446, 0.0
      %v4533 = vadd.f32 %v4531, %v4532
      %v4534 = vsel %vm681, %v4447, 0.0
      %v4535 = vadd.f32 %v4533, %v4534
      %v4536 = vsel %vm4516, %v4448, 0.0
      %v4537 = vadd.f32 %v4535, %v4536
      %v4538 = vrot.slane %v4537, 4
      %v4539 = vadd.f32 %v4537, %v4538
      %v4540 = vrot.slane %v4539, 2
      %v4541 = vadd.f32 %v4539, %v4540
      %v4542 = vrot.slane %v4541, 1
      %v4543 = vadd.f32 %v4541, %v4542
      %v4544 = vsel %vm681, %v4449, 0.0
      %v4545 = vsel %vm681, %v4450, 0.0
      %v4546 = vadd.f32 %v4544, %v4545
      %v4547 = vsel %vm681, %v4451, 0.0
      %v4548 = vadd.f32 %v4546, %v4547
      %v4549 = vsel %vm681, %v4452, 0.0
      %v4550 = vadd.f32 %v4548, %v4549
      %v4551 = vsel %vm681, %v4453, 0.0
      %v4552 = vadd.f32 %v4550, %v4551
      %v4553 = vsel %vm681, %v4454, 0.0
      %v4554 = vadd.f32 %v4552, %v4553
      %v4555 = vsel %vm4516, %v4455, 0.0
      %v4556 = vadd.f32 %v4554, %v4555
      %v4557 = vrot.slane %v4556, 4
      %v4558 = vadd.f32 %v4556, %v4557
      %v4559 = vrot.slane %v4558, 2
      %v4560 = vadd.f32 %v4558, %v4559
      %v4561 = vrot.slane %v4560, 1
      %v4562 = vadd.f32 %v4560, %v4561
      %v4563 = vsel %vm681, %v4456, 0.0
      %v4564 = vsel %vm681, %v4457, 0.0
      %v4565 = vadd.f32 %v4563, %v4564
      %v4566 = vsel %vm681, %v4458, 0.0
      %v4567 = vadd.f32 %v4565, %v4566
      %v4568 = vsel %vm681, %v4459, 0.0
      %v4569 = vadd.f32 %v4567, %v4568
      %v4570 = vsel %vm681, %v4460, 0.0
      %v4571 = vadd.f32 %v4569, %v4570
      %v4572 = vsel %vm681, %v4461, 0.0
      %v4573 = vadd.f32 %v4571, %v4572
      %v4574 = vsel %vm4516, %v4462, 0.0
      %v4575 = vadd.f32 %v4573, %v4574
      %v4576 = vrot.slane %v4575, 4
      %v4577 = vadd.f32 %v4575, %v4576
      %v4578 = vrot.slane %v4577, 2
      %v4579 = vadd.f32 %v4577, %v4578
      %v4580 = vrot.slane %v4579, 1
      %v4581 = vadd.f32 %v4579, %v4580
      %v4582 = vsel %vm681, %v4463, 0.0
      %v4583 = vsel %vm681, %v4464, 0.0
      %v4584 = vadd.f32 %v4582, %v4583
      %v4585 = vsel %vm681, %v4465, 0.0
      %v4586 = vadd.f32 %v4584, %v4585
      %v4587 = vsel %vm681, %v4466, 0.0
      %v4588 = vadd.f32 %v4586, %v4587
      %v4589 = vsel %vm681, %v4467, 0.0
      %v4590 = vadd.f32 %v4588, %v4589
      %v4591 = vsel %vm681, %v4468, 0.0
      %v4592 = vadd.f32 %v4590, %v4591
      %v4593 = vsel %vm4516, %v4469, 0.0
      %v4594 = vadd.f32 %v4592, %v4593
      %v4595 = vrot.slane %v4594, 4
      %v4596 = vadd.f32 %v4594, %v4595
      %v4597 = vrot.slane %v4596, 2
      %v4598 = vadd.f32 %v4596, %v4597
      %v4599 = vrot.slane %v4598, 1
      %v4600 = vadd.f32 %v4598, %v4599
      %v4601 = vsel %vm681, %v4470, 0.0
      %v4602 = vsel %vm681, %v4471, 0.0
      %v4603 = vadd.f32 %v4601, %v4602
      %v4604 = vsel %vm681, %v4472, 0.0
      %v4605 = vadd.f32 %v4603, %v4604
      %v4606 = vsel %vm681, %v4473, 0.0
      %v4607 = vadd.f32 %v4605, %v4606
      %v4608 = vsel %vm681, %v4474, 0.0
      %v4609 = vadd.f32 %v4607, %v4608
      %v4610 = vsel %vm681, %v4475, 0.0
      %v4611 = vadd.f32 %v4609, %v4610
      %v4612 = vsel %vm4516, %v4476, 0.0
      %v4613 = vadd.f32 %v4611, %v4612
      %v4614 = vrot.slane %v4613, 4
      %v4615 = vadd.f32 %v4613, %v4614
      %v4616 = vrot.slane %v4615, 2
      %v4617 = vadd.f32 %v4615, %v4616
      %v4618 = vrot.slane %v4617, 1
      %v4619 = vadd.f32 %v4617, %v4618
      %v4620 = vsel %vm681, %v4477, 0.0
      %v4621 = vsel %vm681, %v4478, 0.0
      %v4622 = vadd.f32 %v4620, %v4621
      %v4623 = vsel %vm681, %v4479, 0.0
      %v4624 = vadd.f32 %v4622, %v4623
      %v4625 = vsel %vm681, %v4480, 0.0
      %v4626 = vadd.f32 %v4624, %v4625
      %v4627 = vsel %vm681, %v4481, 0.0
      %v4628 = vadd.f32 %v4626, %v4627
      %v4629 = vsel %vm681, %v4482, 0.0
      %v4630 = vadd.f32 %v4628, %v4629
      %v4631 = vsel %vm4516, %v4483, 0.0
      %v4632 = vadd.f32 %v4630, %v4631
      %v4633 = vrot.slane %v4632, 4
      %v4634 = vadd.f32 %v4632, %v4633
      %v4635 = vrot.slane %v4634, 2
      %v4636 = vadd.f32 %v4634, %v4635
      %v4637 = vrot.slane %v4636, 1
      %v4638 = vadd.f32 %v4636, %v4637
      %v4639 = vsel %vm681, %v4484, 0.0
      %v4640 = vsel %vm681, %v4485, 0.0
      %v4641 = vadd.f32 %v4639, %v4640
      %v4642 = vsel %vm681, %v4486, 0.0
      %v4643 = vadd.f32 %v4641, %v4642
      %v4644 = vsel %vm681, %v4487, 0.0
      %v4645 = vadd.f32 %v4643, %v4644
      %v4646 = vsel %vm681, %v4488, 0.0
      %v4647 = vadd.f32 %v4645, %v4646
      %v4648 = vsel %vm681, %v4489, 0.0
      %v4649 = vadd.f32 %v4647, %v4648
      %v4650 = vsel %vm4516, %v4490, 0.0
      %v4651 = vadd.f32 %v4649, %v4650
      %v4652 = vrot.slane %v4651, 4
      %v4653 = vadd.f32 %v4651, %v4652
      %v4654 = vrot.slane %v4653, 2
      %v4655 = vadd.f32 %v4653, %v4654
      %v4656 = vrot.slane %v4655, 1
      %v4657 = vadd.f32 %v4655, %v4656
      %v4658 = vsel %vm681, %v4491, 0.0
      %v4659 = vsel %vm681, %v4492, 0.0
      %v4660 = vadd.f32 %v4658, %v4659
      %v4661 = vsel %vm681, %v4493, 0.0
      %v4662 = vadd.f32 %v4660, %v4661
      %v4663 = vsel %vm681, %v4494, 0.0
      %v4664 = vadd.f32 %v4662, %v4663
      %v4665 = vsel %vm681, %v4495, 0.0
      %v4666 = vadd.f32 %v4664, %v4665
      %v4667 = vsel %vm681, %v4496, 0.0
      %v4668 = vadd.f32 %v4666, %v4667
      %v4669 = vsel %vm4516, %v4497, 0.0
      %v4670 = vadd.f32 %v4668, %v4669
      %v4671 = vrot.slane %v4670, 4
      %v4672 = vadd.f32 %v4670, %v4671
      %v4673 = vrot.slane %v4672, 2
      %v4674 = vadd.f32 %v4672, %v4673
      %v4675 = vrot.slane %v4674, 1
      %v4676 = vadd.f32 %v4674, %v4675
      %v4677 = vsel %vm681, %v4498, 0.0
      %v4678 = vsel %vm681, %v4499, 0.0
      %v4679 = vadd.f32 %v4677, %v4678
      %v4680 = vsel %vm681, %v4500, 0.0
      %v4681 = vadd.f32 %v4679, %v4680
      %v4682 = vsel %vm681, %v4501, 0.0
      %v4683 = vadd.f32 %v4681, %v4682
      %v4684 = vsel %vm681, %v4502, 0.0
      %v4685 = vadd.f32 %v4683, %v4684
      %v4686 = vsel %vm681, %v4503, 0.0
      %v4687 = vadd.f32 %v4685, %v4686
      %v4688 = vsel %vm4516, %v4504, 0.0
      %v4689 = vadd.f32 %v4687, %v4688
      %v4690 = vrot.slane %v4689, 4
      %v4691 = vadd.f32 %v4689, %v4690
      %v4692 = vrot.slane %v4691, 2
      %v4693 = vadd.f32 %v4691, %v4692
      %v4694 = vrot.slane %v4693, 1
      %v4695 = vadd.f32 %v4693, %v4694
      %v4696 = vld [vmem:[%s6] sm:$0xff]
      %v4697 = vld [vmem:[%s6 + $0x8] sm:$0x3]
      %vm4708 = vcmask 1041409
      %v4709 = vsel %vm4708, %v4543, %v4524
      %vm4710 = vcmask 1042434
      %v4711 = vsel %vm4710, %v4562, %v4709
      %vm4712 = vcmask 1043459
      %v4713 = vsel %vm4712, %v4581, %v4711
      %vm4714 = vcmask 1044484
      %v4715 = vsel %vm4714, %v4600, %v4713
      %vm4716 = vcmask 1045509
      %v4717 = vsel %vm4716, %v4619, %v4715
      %vm4718 = vcmask 1046534
      %v4719 = vsel %vm4718, %v4638, %v4717
      %vm4720 = vcmask 1047559
      %v4721 = vsel %vm4720, %v4657, %v4719
      %v4722 = vsel %vm4708, %v4695, %v4676
      %v4725 = vsel %vm681, %v4721, 0.0
      %4726 = vadd.xlane.f32.xlu0 %v4725
      %v4727 = vpop.xlane.xlu0 %4726
      %vm4728 = vcmask 254976
      %v4729 = vsel %vm4728, %v4722, 0.0
      %4730 = vadd.xlane.f32.xlu0 %v4729
      %v4731 = vpop.xlane.xlu0 %4730
      %v4732 = vadd.f32 %v4696, %v4727
      %v4733 = vadd.f32 %v4697, %v4731
      %vm4734 = vcmask 7168
      %4735 = vst.msk [vmem:[%s278] sm:$0xff] %vm4734, %v4732
      %vm4736 = vcmask 1024
      %4737 = vst.msk [vmem:[%s278 + $0x8] sm:$0x3] %vm4736, %v4733
      %p4738 = scmp.lt.s32.totalorder %s18, 1
      %s4739 = scalar_select %p4738, %s18, 1
      %s4740 = smul.addr %s4739, 2
      %s4741 = smul.addr %s4740, 8
      %s4742 = scalar_lea.vmem %s7, %s4741
      // Predicated region
      $region49: #{cnn_forward.1} parent=47 // pred_check
        %p4743 = pneg %p188
      $region50: #{cnn_forward.1} parent=47 // pred_check_branch
        %4745 = sbr.rel (%p4743) target = $region52
      $region51: #{cnn_forward.1} parent=47 // pred_region
        _
      $region52: #{cnn_forward.1} parent=47 // pred_fallthru
        _
    $region48: #{cnn_forward.1} parent=5 // pred_fallthru
      _
    %p4746 = scmp.le.s32.totalorder 2, %s13
    // Predicated region
    $region53: #{cnn_forward.1} parent=5 // pred_check
      %p4747 = pneg %p4746
    $region54: #{cnn_forward.1} parent=5 // pred_check_branch
      %4749 = sbr.rel (%p4747) target = $region56
    $region55: #{cnn_forward.1} parent=5 // pred_region
      %s4750 = ssub.s32 %s13, 2
      // Predicated region
      $region57: #{cnn_forward.1} parent=55 // pred_check
        %p4751 = pneg %p194
      $region58: #{cnn_forward.1} parent=55 // pred_check_branch
        %4753 = sbr.rel (%p4751) target = $region60
      $region59: #{cnn_forward.1} parent=55 // pred_region
        %p4754 = scmp.lt.s32.totalorder %s19, 1
        %s4755 = scalar_select %p4754, %s19, 1
        %s4756 = smul.addr %s4755, 2
        %s4757 = smul.addr %s4756, 8
        %s4758 = scalar_lea.vmem %s7, %s4757
      $region60: #{cnn_forward.1} parent=55 // pred_fallthru
        _
    $region56: #{cnn_forward.1} parent=5 // pred_fallthru
      _
  $region6: #{cnn_forward.1} parent=0 // loop_footer
    %s17 = sadd.s32 1, %s13
  $region7: #{cnn_forward.1} parent=0 // loop_footer_branch
    %12 = sbr.rel target = $region3
  $region8: #{cnn_forward.1} parent=0 // loop_exit
    _

</llo_original>
